<compile_context>
chip_gen: v7x
topology: tpu7x:2x2x1
jax: 0.10.0
libtpu: 0.0.40
codegen_flags: <defaults>
</compile_context>

<pallas_src>
import functools

import jax
import jax.numpy as jnp
from jax.experimental import pallas as pl
from jax.experimental.pallas import tpu as pltpu


# ----------------------------- fused Pallas kernel -----------------------------

def _make_fused_kernel(dims, compute_dtype):
    (b_blk, l1, l2, l3, k2, k3, s2, s3, c1, c2, c3, kcin, n_classes) = dims

    def _im2col(h, rows_in, rows_out, stride, ksize, ch):
        # (B_blk*rows_in, ch) -> (B_blk*rows_out, ksize*ch) using only contiguous
        # slices + reshapes (requires stride >= ksize; asserted in the wrapper).
        h3 = h.reshape(b_blk, rows_in, ch)
        need = rows_out * stride
        if need > rows_in:
            # Padded rows only land in the discarded [ksize:stride) tail positions.
            h3 = jnp.pad(h3, ((0, 0), (0, need - rows_in), (0, 0)))
        else:
            h3 = h3[:, :need, :]
        h3 = h3.reshape(b_blk * rows_out, stride, ch)
        return h3[:, :ksize, :].reshape(b_blk * rows_out, ksize * ch)

    def kernel(x_ref, w1_ref, b1_ref, w2_ref, b2_ref, w3_ref, b3_ref,
               fcw_ref, fcb_ref, out_ref):
        # ---- conv1 + relu: one (B_blk*L1, K1*Cin) @ (K1*Cin, C1) MXU matmul ----
        x2d = x_ref[...].reshape(b_blk * l1, kcin)          # im2col done in wrapper
        h1 = jnp.maximum(
            jnp.dot(x2d, w1_ref[...], preferred_element_type=jnp.float32)
            + b1_ref[...], 0.0)                              # (B_blk*L1, C1) f32

        # ---- conv2 + relu: single im2col matmul, batch folded into M ----
        slab2 = _im2col(h1, l1, l2, s2, k2, c1).astype(compute_dtype)
        h2 = jnp.maximum(
            jnp.dot(slab2, w2_ref[...], preferred_element_type=jnp.float32)
            + b2_ref[...], 0.0)                              # (B_blk*L2, C2) f32

        # ---- conv3 + relu ----
        slab3 = _im2col(h2, l2, l3, s3, k3, c2).astype(compute_dtype)
        h3 = jnp.maximum(
            jnp.dot(slab3, w3_ref[...], preferred_element_type=jnp.float32)
            + b3_ref[...], 0.0)                              # (B_blk*L3, C3) f32

        # ---- adaptive_avg_pool1d(.,1) + fc + softmax (dropout = identity) ----
        pooled = jnp.mean(h3.reshape(b_blk, l3, c3), axis=1)          # (B_blk, C3)
        logits = jnp.dot(pooled.astype(compute_dtype), fcw_ref[...],
                         preferred_element_type=jnp.float32) + fcb_ref[...]
        m = jnp.max(logits, axis=-1, keepdims=True)                   # stable softmax
        e = jnp.exp(logits - m)
        # Exact divide (not pl.reciprocal(approx=True)) keeps the f32 path bit-tight
        # with the reference; the divide is one (B_blk, n_classes) op, negligible.
        out_ref[0] = e / jnp.sum(e, axis=-1, keepdims=True)           # (B_blk, n_cls)

    return kernel


# ------------------------------ wrapper -----------------------------------

def cnn_forward_pallas(x, params, compute_dtype=jnp.float32, batch_blocks=None):
    """x: (B, T, Cin) f32 -> (B, n_classes) f32 softmax probabilities."""
    B, T, Cin = x.shape
    w1, b1 = params["conv1_w"], params["conv1_b"]    # (C1, Cin, K1), (C1,)
    w2, b2 = params["conv2_w"], params["conv2_b"]
    w3, b3 = params["conv3_w"], params["conv3_b"]
    fcw, fcb = params["fc_w"], params["fc_b"]         # (n_classes, C3), (n_classes,)

    C1, _, K1 = w1.shape
    C2, _, K2 = w2.shape
    C3, _, K3 = w3.shape
    S1, S2, S3 = 6, 4, 4                              # strides fixed by the module
    L1 = (T - K1) // S1 + 1
    L2 = (L1 - K2) // S2 + 1
    L3 = (L2 - K3) // S3 + 1
    n_classes = fcw.shape[0]

    # In-kernel im2col for conv2/conv3 uses contiguous slice + reshape, valid only
    # when stride >= kernel_size (true for this module's stride-6/4/4 config).
    assert S2 >= K2 and S3 >= K3, "in-kernel im2col requires stride >= kernel_size"
    # TODO(synk): generalize in-kernel im2col to kernel_size > stride if ever needed.

    if batch_blocks is None:
        # 2 parallel grid steps feed v7x's two TensorCores; the extra step is ~0.35us
        # on v5e/v6e (1 TC), i.e. effectively free.
        batch_blocks = 2 if (B % 2 == 0 and B >= 2) else 1
    assert B % batch_blocks == 0
    B_blk = B // batch_blocks

    # conv1 im2col in the wrapper (XLA gather on HBM): (B, T, Cin) -> (B, L1, K1*Cin).
    idx = (jnp.arange(L1)[:, None] * S1 + jnp.arange(K1)[None, :]).reshape(-1)
    x_pat = jnp.take(x, idx, axis=1).reshape(B, L1, K1 * Cin).astype(compute_dtype)

    # Weight layout for channels-last matmuls:
    # (Cout, Cin, K) -> (K, Cin, Cout) -> (K*Cin, Cout); rows [k*Cin:(k+1)*Cin] = W_k,
    # matching the im2col slab column order k*Cin + cin.
    def flat_w(w):
        co, ci, k = w.shape
        return jnp.transpose(w, (2, 1, 0)).reshape(k * ci, co).astype(compute_dtype)

    w1f, w2f, w3f = flat_w(w1), flat_w(w2), flat_w(w3)
    fcwf = jnp.transpose(fcw, (1, 0)).astype(compute_dtype)           # (C3, n_classes)
    b1f = b1.reshape(1, C1).astype(jnp.float32)
    b2f = b2.reshape(1, C2).astype(jnp.float32)
    b3f = b3.reshape(1, C3).astype(jnp.float32)
    fcbf = fcb.reshape(1, n_classes).astype(jnp.float32)

    dims = (B_blk, L1, L2, L3, K2, K3, S2, S3, C1, C2, C3, K1 * Cin, n_classes)
    kernel = _make_fused_kernel(dims, compute_dtype)

    out = pl.pallas_call(
        kernel,
        out_shape=jax.ShapeDtypeStruct((batch_blocks, B_blk, n_classes), jnp.float32),
        grid=(batch_blocks,),
        in_specs=[
            pl.BlockSpec((B_blk, L1, K1 * Cin), lambda i: (i, 0, 0)),  # batch block
            pl.BlockSpec((K1 * Cin, C1), lambda i: (0, 0)),            # resident weights
            pl.BlockSpec((1, C1), lambda i: (0, 0)),
            pl.BlockSpec((K2 * C1, C2), lambda i: (0, 0)),
            pl.BlockSpec((1, C2), lambda i: (0, 0)),
            pl.BlockSpec((K3 * C2, C3), lambda i: (0, 0)),
            pl.BlockSpec((1, C3), lambda i: (0, 0)),
            pl.BlockSpec((C3, n_classes), lambda i: (0, 0)),
            pl.BlockSpec((1, n_classes), lambda i: (0, 0)),
        ],
        out_specs=pl.BlockSpec((1, B_blk, n_classes), lambda i: (i, 0, 0)),
        compiler_params=pltpu.CompilerParams(
            dimension_semantics=("parallel",)),                        # across TCs (v7x)
    )(x_pat, w1f, b1f, w2f, b2f, w3f, b3f, fcwf, fcbf)

    return out.reshape(B, n_classes)


@functools.partial(jax.jit, static_argnames=("compute_dtype", "batch_blocks"))
def cnn_rnn_classifier_forward(x, params, compute_dtype=jnp.float32, batch_blocks=None):
    return cnn_forward_pallas(x, params, compute_dtype, batch_blocks)


# ----------------------------- params & reference ---------------------------------

def init_params(key, in_channels, cnn_dim1, cnn_dim2, cnn_dim3,
                k1, k2, k3, n_classes):
    """Deterministic PyTorch-style uniform init, U(-1/sqrt(fan_in), 1/sqrt(fan_in))."""
    def uni(k, shape, fan_in):
        bound = 1.0 / jnp.sqrt(jnp.float32(fan_in))
        return jax.random.uniform(k, shape, jnp.float32, -bound, bound)

    ks = jax.random.split(key, 8)
    return {
        "conv1_w": uni(ks[0], (cnn_dim1, in_channels, k1), in_channels * k1),
        "conv1_b": uni(ks[1], (cnn_dim1,), in_channels * k1),
        "conv2_w": uni(ks[2], (cnn_dim2, cnn_dim1, k2), cnn_dim1 * k2),
        "conv2_b": uni(ks[3], (cnn_dim2,), cnn_dim1 * k2),
        "conv3_w": uni(ks[4], (cnn_dim3, cnn_dim2, k3), cnn_dim2 * k3),
        "conv3_b": uni(ks[5], (cnn_dim3,), cnn_dim2 * k3),
        "fc_w": uni(ks[6], (n_classes, cnn_dim3), cnn_dim3),
        "fc_b": uni(ks[7], (n_classes,), cnn_dim3),
    }


def reference_forward(x, params):
    """Pure-JAX reference (matches the PyTorch forward) for correctness checking."""
    h = jnp.transpose(x, (0, 2, 1))
    for wname, bname, s in (("conv1_w", "conv1_b", 6),
                            ("conv2_w", "conv2_b", 4),
                            ("conv3_w", "conv3_b", 4)):
        h = jax.lax.conv_general_dilated(
            h, params[wname], window_strides=(s,), padding="VALID",
            dimension_numbers=("NCH", "OIH", "NCH"))
        h = jax.nn.relu(h + params[bname][None, :, None])
    pooled = jnp.mean(h, axis=-1)
    logits = pooled @ params["fc_w"].T + params["fc_b"]
    return jax.nn.softmax(logits, axis=1)


# ------------------------------ main ----------------------------------------

if __name__ == "__main__":
    # Small, forward-consistent shapes: L1 = 85, L2 = 21, L3 = 5.
    B, T, in_channels = 4, 512, 4
    cnn_dim1, cnn_dim2, cnn_dim3 = 16, 32, 32
    k1 = k2 = k3 = 3
    n_classes = 5

    key = jax.random.PRNGKey(0)
    k_x, k_p = jax.random.split(key)
    x = jax.random.normal(k_x, (B, T, in_channels), dtype=jnp.float32)
    params = init_params(k_p, in_channels, cnn_dim1, cnn_dim2, cnn_dim3,
                         k1, k2, k3, n_classes)

    ref = reference_forward(x, params)

    # f32 path: tight agreement with the reference.
    out = jax.block_until_ready(cnn_rnn_classifier_forward(x, params))
    assert out.shape == (B, n_classes)
    assert jnp.allclose(out, ref, atol=1e-5, rtol=1e-5), "f32 mismatch vs reference"
    assert jnp.allclose(jnp.sum(out, axis=1), 1.0, atol=1e-5)

    # bf16 MXU operands with f32 accumulation (v6e/v7x friendly): relaxed tolerance.
    out_bf16 = jax.block_until_ready(
        cnn_rnn_classifier_forward(x, params, compute_dtype=jnp.bfloat16))
    assert out_bf16.shape == (B, n_classes)
    assert jnp.allclose(out_bf16, ref, atol=5e-2), "bf16 mismatch vs reference"
    assert jnp.allclose(jnp.sum(out_bf16, axis=1), 1.0, atol=2e-3)

    # Single-step variant (optimal on v5e/v6e's single TensorCore).
    out_1blk = jax.block_until_ready(
        cnn_rnn_classifier_forward(x, params, batch_blocks=1))
    assert jnp.allclose(out_1blk, ref, atol=1e-5, rtol=1e-5)

    print("KERNEL_OK")
</pallas_src>

<mosaic_0001>
module attributes {stable_mosaic.version = 11 : i64} {
  func.func @kernel(%arg0: i32, %arg1: memref<2x85x12xf32, #tpu.memory_space<vmem>>, %arg2: memref<12x16xf32, #tpu.memory_space<vmem>>, %arg3: memref<1x16xf32, #tpu.memory_space<vmem>>, %arg4: memref<48x32xf32, #tpu.memory_space<vmem>>, %arg5: memref<1x32xf32, #tpu.memory_space<vmem>>, %arg6: memref<96x32xf32, #tpu.memory_space<vmem>>, %arg7: memref<1x32xf32, #tpu.memory_space<vmem>>, %arg8: memref<32x5xf32, #tpu.memory_space<vmem>>, %arg9: memref<1x5xf32, #tpu.memory_space<vmem>>, %arg10: memref<1x2x5xf32, #tpu.memory_space<vmem>>) attributes {dimension_semantics = [#tpu.dimension_semantics<parallel>], iteration_bounds = array<i64: 2>, scalar_prefetch = 0 : i64, scratch_operands = 0 : i64, tpu.core_type = #tpu.core_type<tc>, window_params = [{transform_indices = @transform_0, window_bounds = array<i64: 2, 85, 12>}, {pipeline_mode = #tpu.pipeline_mode<synchronous>, transform_indices = @transform_1, window_bounds = array<i64: 12, 16>}, {pipeline_mode = #tpu.pipeline_mode<synchronous>, transform_indices = @transform_2, window_bounds = array<i64: 1, 16>}, {pipeline_mode = #tpu.pipeline_mode<synchronous>, transform_indices = @transform_3, window_bounds = array<i64: 48, 32>}, {pipeline_mode = #tpu.pipeline_mode<synchronous>, transform_indices = @transform_4, window_bounds = array<i64: 1, 32>}, {pipeline_mode = #tpu.pipeline_mode<synchronous>, transform_indices = @transform_5, window_bounds = array<i64: 96, 32>}, {pipeline_mode = #tpu.pipeline_mode<synchronous>, transform_indices = @transform_6, window_bounds = array<i64: 1, 32>}, {pipeline_mode = #tpu.pipeline_mode<synchronous>, transform_indices = @transform_7, window_bounds = array<i64: 32, 5>}, {pipeline_mode = #tpu.pipeline_mode<synchronous>, transform_indices = @transform_8, window_bounds = array<i64: 1, 5>}, {transform_indices = @transform_9, window_bounds = array<i64: 1, 2, 5>}]} {
    %c0 = arith.constant 0 : index
    %c0_0 = arith.constant 0 : index
    %c0_1 = arith.constant 0 : index
    %0 = vector.load %arg1[%c0, %c0_0, %c0_1] : memref<2x85x12xf32, #tpu.memory_space<vmem>>, vector<2x85x12xf32>
    %1 = vector.shape_cast %0 : vector<2x85x12xf32> to vector<170x12xf32>
    %c0_2 = arith.constant 0 : index
    %c0_3 = arith.constant 0 : index
    %2 = vector.load %arg2[%c0_2, %c0_3] : memref<12x16xf32, #tpu.memory_space<vmem>>, vector<12x16xf32>
    %cst = arith.constant dense<0.000000e+00> : vector<170x16xf32>
    %3 = tpu.matmul %1, %2, %cst {dimension_numbers = #tpu.dot_dimension_numbers<[1], [0], [0], [1], [0, 0, 1, 1], [], []>} : vector<170x12xf32>, vector<12x16xf32>, vector<170x16xf32> -> vector<170x16xf32>
    %c0_4 = arith.constant 0 : index
    %c0_5 = arith.constant 0 : index
    %4 = vector.load %arg3[%c0_4, %c0_5] : memref<1x16xf32, #tpu.memory_space<vmem>>, vector<1x16xf32>
    %5 = vector.broadcast %4 : vector<1x16xf32> to vector<170x16xf32>
    %6 = arith.addf %3, %5 : vector<170x16xf32>
    %cst_6 = arith.constant 0.000000e+00 : f32
    %7 = vector.broadcast %cst_6 : f32 to vector<170x16xf32>
    %8 = arith.maximumf %6, %7 : vector<170x16xf32>
    %9 = vector.shape_cast %8 : vector<170x16xf32> to vector<2x85x16xf32>
    %10 = vector.extract_strided_slice %9 {offsets = [0, 0, 0], sizes = [2, 84, 16], strides = [1, 1, 1]} : vector<2x85x16xf32> to vector<2x84x16xf32>
    %11 = vector.shape_cast %10 : vector<2x84x16xf32> to vector<42x4x16xf32>
    %12 = vector.extract_strided_slice %11 {offsets = [0, 0, 0], sizes = [42, 3, 16], strides = [1, 1, 1]} : vector<42x4x16xf32> to vector<42x3x16xf32>
    %13 = vector.shape_cast %12 : vector<42x3x16xf32> to vector<42x48xf32>
    %c0_7 = arith.constant 0 : index
    %c0_8 = arith.constant 0 : index
    %14 = vector.load %arg4[%c0_7, %c0_8] : memref<48x32xf32, #tpu.memory_space<vmem>>, vector<48x32xf32>
    %cst_9 = arith.constant dense<0.000000e+00> : vector<42x32xf32>
    %15 = tpu.matmul %13, %14, %cst_9 {dimension_numbers = #tpu.dot_dimension_numbers<[1], [0], [0], [1], [0, 0, 1, 1], [], []>} : vector<42x48xf32>, vector<48x32xf32>, vector<42x32xf32> -> vector<42x32xf32>
    %c0_10 = arith.constant 0 : index
    %c0_11 = arith.constant 0 : index
    %16 = vector.load %arg5[%c0_10, %c0_11] : memref<1x32xf32, #tpu.memory_space<vmem>>, vector<1x32xf32>
    %17 = vector.broadcast %16 : vector<1x32xf32> to vector<42x32xf32>
    %18 = arith.addf %15, %17 : vector<42x32xf32>
    %cst_12 = arith.constant 0.000000e+00 : f32
    %19 = vector.broadcast %cst_12 : f32 to vector<42x32xf32>
    %20 = arith.maximumf %18, %19 : vector<42x32xf32>
    %21 = vector.shape_cast %20 : vector<42x32xf32> to vector<2x21x32xf32>
    %22 = vector.extract_strided_slice %21 {offsets = [0, 0, 0], sizes = [2, 20, 32], strides = [1, 1, 1]} : vector<2x21x32xf32> to vector<2x20x32xf32>
    %23 = vector.shape_cast %22 : vector<2x20x32xf32> to vector<10x4x32xf32>
    %24 = vector.extract_strided_slice %23 {offsets = [0, 0, 0], sizes = [10, 3, 32], strides = [1, 1, 1]} : vector<10x4x32xf32> to vector<10x3x32xf32>
    %25 = vector.shape_cast %24 : vector<10x3x32xf32> to vector<10x96xf32>
    %c0_13 = arith.constant 0 : index
    %c0_14 = arith.constant 0 : index
    %26 = vector.load %arg6[%c0_13, %c0_14] : memref<96x32xf32, #tpu.memory_space<vmem>>, vector<96x32xf32>
    %cst_15 = arith.constant dense<0.000000e+00> : vector<10x32xf32>
    %27 = tpu.matmul %25, %26, %cst_15 {dimension_numbers = #tpu.dot_dimension_numbers<[1], [0], [0], [1], [0, 0, 1, 1], [], []>} : vector<10x96xf32>, vector<96x32xf32>, vector<10x32xf32> -> vector<10x32xf32>
    %c0_16 = arith.constant 0 : index
    %c0_17 = arith.constant 0 : index
    %28 = vector.load %arg7[%c0_16, %c0_17] : memref<1x32xf32, #tpu.memory_space<vmem>>, vector<1x32xf32>
    %29 = vector.broadcast %28 : vector<1x32xf32> to vector<10x32xf32>
    %30 = arith.addf %27, %29 : vector<10x32xf32>
    %cst_18 = arith.constant 0.000000e+00 : f32
    %31 = vector.broadcast %cst_18 : f32 to vector<10x32xf32>
    %32 = arith.maximumf %30, %31 : vector<10x32xf32>
    %33 = vector.shape_cast %32 : vector<10x32xf32> to vector<2x5x32xf32>
    %cst_19 = arith.constant dense<0.000000e+00> : vector<2x32xf32>
    %34 = vector.multi_reduction <add>, %33, %cst_19 [1] : vector<2x5x32xf32> to vector<2x32xf32>
    %cst_20 = arith.constant 5.000000e+00 : f32
    %35 = vector.broadcast %cst_20 : f32 to vector<2x32xf32>
    %36 = arith.divf %34, %35 : vector<2x32xf32>
    %c0_21 = arith.constant 0 : index
    %c0_22 = arith.constant 0 : index
    %37 = vector.load %arg8[%c0_21, %c0_22] : memref<32x5xf32, #tpu.memory_space<vmem>>, vector<32x5xf32>
    %cst_23 = arith.constant dense<0.000000e+00> : vector<2x5xf32>
    %38 = tpu.matmul %36, %37, %cst_23 {dimension_numbers = #tpu.dot_dimension_numbers<[1], [0], [0], [1], [0, 0, 1, 1], [], []>} : vector<2x32xf32>, vector<32x5xf32>, vector<2x5xf32> -> vector<2x5xf32>
    %c0_24 = arith.constant 0 : index
    %c0_25 = arith.constant 0 : index
    %39 = vector.load %arg9[%c0_24, %c0_25] : memref<1x5xf32, #tpu.memory_space<vmem>>, vector<1x5xf32>
    %40 = vector.broadcast %39 : vector<1x5xf32> to vector<2x5xf32>
    %41 = arith.addf %38, %40 : vector<2x5xf32>
    %cst_26 = arith.constant dense<0xFF800000> : vector<2xf32>
    %42 = vector.multi_reduction <maximumf>, %41, %cst_26 [1] : vector<2x5xf32> to vector<2xf32>
    %43 = vector.shape_cast %42 : vector<2xf32> to vector<2x1xf32>
    %44 = vector.broadcast %43 : vector<2x1xf32> to vector<2x5xf32>
    %45 = arith.subf %41, %44 : vector<2x5xf32>
    %46 = math.exp %45 : vector<2x5xf32>
    %cst_27 = arith.constant dense<0.000000e+00> : vector<2xf32>
    %47 = vector.multi_reduction <add>, %46, %cst_27 [1] : vector<2x5xf32> to vector<2xf32>
    %48 = vector.shape_cast %47 : vector<2xf32> to vector<2x1xf32>
    %49 = vector.broadcast %48 : vector<2x1xf32> to vector<2x5xf32>
    %50 = arith.divf %46, %49 : vector<2x5xf32>
    %c0_28 = arith.constant 0 : index
    %c0_29 = arith.constant 0 : index
    %c0_30 = arith.constant 0 : index
    %51 = vector.load %arg10[%c0_28, %c0_29, %c0_30] : memref<1x2x5xf32, #tpu.memory_space<vmem>>, vector<1x2x5xf32>
    %52 = vector.shape_cast %51 : vector<1x2x5xf32> to vector<2x5xf32>
    %53 = vector.shape_cast %50 : vector<2x5xf32> to vector<1x2x5xf32>
    tpu.vector_store %arg10[%c0_28, %c0_29, %c0_30], %53 {strides = array<i32>} : memref<1x2x5xf32, #tpu.memory_space<vmem>>, vector<1x2x5xf32>,
    return
  }
  func.func @transform_0(%arg0: i32) -> (i32, i32, i32) {
    %c0_i32 = arith.constant 0 : i32
    %c0_i32_0 = arith.constant 0 : i32
    %c0_i32_1 = arith.constant 0 : i32
    return %arg0, %c0_i32, %c0_i32_0 : i32, i32, i32
  }
  func.func @transform_1(%arg0: i32) -> (i32, i32) {
    %c0_i32 = arith.constant 0 : i32
    %c0_i32_0 = arith.constant 0 : i32
    %c0_i32_1 = arith.constant 0 : i32
    return %c0_i32, %c0_i32_0 : i32, i32
  }
  func.func @transform_2(%arg0: i32) -> (i32, i32) {
    %c0_i32 = arith.constant 0 : i32
    %c0_i32_0 = arith.constant 0 : i32
    %c0_i32_1 = arith.constant 0 : i32
    return %c0_i32, %c0_i32_0 : i32, i32
  }
  func.func @transform_3(%arg0: i32) -> (i32, i32) {
    %c0_i32 = arith.constant 0 : i32
    %c0_i32_0 = arith.constant 0 : i32
    %c0_i32_1 = arith.constant 0 : i32
    return %c0_i32, %c0_i32_0 : i32, i32
  }
  func.func @transform_4(%arg0: i32) -> (i32, i32) {
    %c0_i32 = arith.constant 0 : i32
    %c0_i32_0 = arith.constant 0 : i32
    %c0_i32_1 = arith.constant 0 : i32
    return %c0_i32, %c0_i32_0 : i32, i32
  }
  func.func @transform_5(%arg0: i32) -> (i32, i32) {
    %c0_i32 = arith.constant 0 : i32
    %c0_i32_0 = arith.constant 0 : i32
    %c0_i32_1 = arith.constant 0 : i32
    return %c0_i32, %c0_i32_0 : i32, i32
  }
  func.func @transform_6(%arg0: i32) -> (i32, i32) {
    %c0_i32 = arith.constant 0 : i32
    %c0_i32_0 = arith.constant 0 : i32
    %c0_i32_1 = arith.constant 0 : i32
    return %c0_i32, %c0_i32_0 : i32, i32
  }
  func.func @transform_7(%arg0: i32) -> (i32, i32) {
    %c0_i32 = arith.constant 0 : i32
    %c0_i32_0 = arith.constant 0 : i32
    %c0_i32_1 = arith.constant 0 : i32
    return %c0_i32, %c0_i32_0 : i32, i32
  }
  func.func @transform_8(%arg0: i32) -> (i32, i32) {
    %c0_i32 = arith.constant 0 : i32
    %c0_i32_0 = arith.constant 0 : i32
    %c0_i32_1 = arith.constant 0 : i32
    return %c0_i32, %c0_i32_0 : i32, i32
  }
  func.func @transform_9(%arg0: i32) -> (i32, i32, i32) {
    %c0_i32 = arith.constant 0 : i32
    %c0_i32_0 = arith.constant 0 : i32
    %c0_i32_1 = arith.constant 0 : i32
    return %arg0, %c0_i32, %c0_i32_0 : i32, i32, i32
  }
}

</mosaic_0001>

<llo_original>
// kernel: cnn_rnn_classifier_forward.1
$region0: #{cnn_rnn_classifier_forward.1}
  #allocation0 [shape = 'u32[]', space=smem, size = 0x4, offset = 0x4, fixed_abs, tag = 'smem constant byte address 0x4 - core index']
  #allocation1 [shape = 'u32[144,128]{1,0:T(1,128)}', space=vmem, size = 0x12000, scoped, tag = 'internal scratch']
  %s0 = inlined_call_operand.vmem [shape: f32[4,85,12], index: 0, kind: input, shape index: {}]
  %s1 = inlined_call_operand.vmem [shape: f32[12,16], index: 1, kind: input, shape index: {}]
  %s2 = inlined_call_operand.vmem [shape: f32[1,16], index: 2, kind: input, shape index: {}]
  %s3 = inlined_call_operand.vmem [shape: f32[48,32], index: 3, kind: input, shape index: {}]
  %s4 = inlined_call_operand.vmem [shape: f32[1,32], index: 4, kind: input, shape index: {}]
  %s5 = inlined_call_operand.vmem [shape: f32[96,32], index: 5, kind: input, shape index: {}]
  %s6 = inlined_call_operand.vmem [shape: f32[1,32], index: 6, kind: input, shape index: {}]
  %s7 = inlined_call_operand.vmem [shape: f32[32,5], index: 7, kind: input, shape index: {}]
  %s8 = inlined_call_operand.vmem [shape: f32[1,5], index: 8, kind: input, shape index: {}]
  %s9 = inlined_call_operand.hbm [shape: f32[2,2,5], index: 9, kind: output, shape index: {}]
  %s10 = sld [smem:[#allocation0]]
  $region69: #{cnn_rnn_classifier_forward.1} parent=0
    _
  %s12 = ssub.s32 1, %s10
  %s13 = scalar_select 0, %s12, %s10
  $region1: #{cnn_rnn_classifier_forward.1} parent=0
    #allocation2 [shape = 'u8[2048]{0}', space=vmem, size = 0x800, scoped, tag = 'output window, operand 0']
    #allocation3 [shape = 's32[2]{0}', space=sflag, size = 0x8, scoped, tag = 'scoped memory for cnn_rnn_classifier_forward.1']
    %14 = vsyncpa [#allocation3], 0
    %s15 = scalar_lea.sflag [#allocation3], 1
    %16 = vsyncpa %s15, 0
    loop: start=0, step=1, limit=4
    $region2: #{cnn_rnn_classifier_forward.1} parent=1 // loop_pre_header
      _
    $region3: #{cnn_rnn_classifier_forward.1} parent=1 // loop_header
      %s18 = sphi 0, %s22
      %p19 = scmp.ge.s32.totalorder %s18, 4
      %s28 = sphi 0, %s30
      %s31 = sphi 0, %s28
      %s32 = sphi 0, %s31
      %s48 = sphi 0, %s32
      %s52 = sphi 0, %s52
      %s54 = sphi 0, %s52
      %s55 = sphi 0, %s54
      %s69 = sphi 0, %s55
      %s73 = sphi 0, %s73
      %s75 = sphi 0, %s73
      %s76 = sphi 0, %s75
      %s90 = sphi 0, %s76
      %s94 = sphi 0, %s94
      %s96 = sphi 0, %s94
      %s97 = sphi 0, %s96
      %s111 = sphi 0, %s97
      %s115 = sphi 0, %s115
      %s117 = sphi 0, %s115
      %s118 = sphi 0, %s117
      %s132 = sphi 0, %s118
      %s136 = sphi 0, %s136
      %s138 = sphi 0, %s136
      %s139 = sphi 0, %s138
      %s153 = sphi 0, %s139
      %s157 = sphi 0, %s157
      %s159 = sphi 0, %s157
      %s160 = sphi 0, %s159
      %s174 = sphi 0, %s160
      %s178 = sphi 0, %s178
      %s180 = sphi 0, %s178
      %s181 = sphi 0, %s180
      %s195 = sphi 0, %s181
      %s199 = sphi 0, %s199
      %s201 = sphi 0, %s199
      %s202 = sphi 0, %s201
      %s216 = sphi 0, %s202
      %s222 = sphi 0, %s224
      %s225 = sphi 0, %s222
      %s226 = sphi 0, %s225
      %s242 = sphi 0, %s226
    $region4: #{cnn_rnn_classifier_forward.1} parent=1 // loop_header_branch
      %21 = sbr.rel (%p19) target = $region8
    $region5: #{cnn_rnn_classifier_forward.1} parent=1 // loop_body
      %s23 = ssub.s32 %s18, 1
      %s24 = ssub.s32 %s18, 2
      %s25 = sadd.s32 %s18, 1
      %s26 = ssub.s32 %s18, %s25
      %p27 = scmp.eq.s32.totalorder %s26, 0
      %s29 = sadd.s32 %s28, 1
      %s30 = scalar_select %p27, %s28, %s29
      %p33 = pneg %p27
      %p34 = scmp.eq.s32.totalorder %s18, 1
      %p35 = por %p33, %p34
      %p36 = scmp.ne.s32.totalorder %s28, %s31
      %p37 = scmp.eq.s32.totalorder %s18, 0
      %p38 = por %p36, %p37
      %p39 = scmp.ne.s32.totalorder %s28, %s31
      %p40 = scmp.eq.s32.totalorder %s23, 1
      %p41 = por %p39, %p40
      %p42 = scmp.ne.s32.totalorder %s31, %s32
      %p43 = scmp.eq.s32.totalorder %s23, 0
      %p44 = por %p42, %p43
      %p45 = scmp.ne.s32.totalorder %s31, %s32
      %p46 = scmp.eq.s32.totalorder %s24, 1
      %p47 = por %p45, %p46
      %p49 = scmp.ne.s32.totalorder %s32, %s48
      %p50 = scmp.eq.s32.totalorder %s24, 0
      %p51 = por %p49, %p50
      %s53 = sadd.s32 %s52, 1
      %p56 = scmp.eq.s32.totalorder %s18, 1
      %p57 = scmp.ne.s32.totalorder %s52, %s54
      %p58 = scmp.eq.s32.totalorder %s18, 0
      %p59 = por %p57, %p58
      %p60 = scmp.ne.s32.totalorder %s52, %s54
      %p61 = scmp.eq.s32.totalorder %s23, 1
      %p62 = por %p60, %p61
      %p63 = scmp.ne.s32.totalorder %s54, %s55
      %p64 = scmp.eq.s32.totalorder %s23, 0
      %p65 = por %p63, %p64
      %p66 = scmp.ne.s32.totalorder %s54, %s55
      %p67 = scmp.eq.s32.totalorder %s24, 1
      %p68 = por %p66, %p67
      %p70 = scmp.ne.s32.totalorder %s55, %s69
      %p71 = scmp.eq.s32.totalorder %s24, 0
      %p72 = por %p70, %p71
      %s74 = sadd.s32 %s73, 1
      %p77 = scmp.eq.s32.totalorder %s18, 1
      %p78 = scmp.ne.s32.totalorder %s73, %s75
      %p79 = scmp.eq.s32.totalorder %s18, 0
      %p80 = por %p78, %p79
      %p81 = scmp.ne.s32.totalorder %s73, %s75
      %p82 = scmp.eq.s32.totalorder %s23, 1
      %p83 = por %p81, %p82
      %p84 = scmp.ne.s32.totalorder %s75, %s76
      %p85 = scmp.eq.s32.totalorder %s23, 0
      %p86 = por %p84, %p85
      %p87 = scmp.ne.s32.totalorder %s75, %s76
      %p88 = scmp.eq.s32.totalorder %s24, 1
      %p89 = por %p87, %p88
      %p91 = scmp.ne.s32.totalorder %s76, %s90
      %p92 = scmp.eq.s32.totalorder %s24, 0
      %p93 = por %p91, %p92
      %s95 = sadd.s32 %s94, 1
      %p98 = scmp.eq.s32.totalorder %s18, 1
      %p99 = scmp.ne.s32.totalorder %s94, %s96
      %p100 = scmp.eq.s32.totalorder %s18, 0
      %p101 = por %p99, %p100
      %p102 = scmp.ne.s32.totalorder %s94, %s96
      %p103 = scmp.eq.s32.totalorder %s23, 1
      %p104 = por %p102, %p103
      %p105 = scmp.ne.s32.totalorder %s96, %s97
      %p106 = scmp.eq.s32.totalorder %s23, 0
      %p107 = por %p105, %p106
      %p108 = scmp.ne.s32.totalorder %s96, %s97
      %p109 = scmp.eq.s32.totalorder %s24, 1
      %p110 = por %p108, %p109
      %p112 = scmp.ne.s32.totalorder %s97, %s111
      %p113 = scmp.eq.s32.totalorder %s24, 0
      %p114 = por %p112, %p113
      %s116 = sadd.s32 %s115, 1
      %p119 = scmp.eq.s32.totalorder %s18, 1
      %p120 = scmp.ne.s32.totalorder %s115, %s117
      %p121 = scmp.eq.s32.totalorder %s18, 0
      %p122 = por %p120, %p121
      %p123 = scmp.ne.s32.totalorder %s115, %s117
      %p124 = scmp.eq.s32.totalorder %s23, 1
      %p125 = por %p123, %p124
      %p126 = scmp.ne.s32.totalorder %s117, %s118
      %p127 = scmp.eq.s32.totalorder %s23, 0
      %p128 = por %p126, %p127
      %p129 = scmp.ne.s32.totalorder %s117, %s118
      %p130 = scmp.eq.s32.totalorder %s24, 1
      %p131 = por %p129, %p130
      %p133 = scmp.ne.s32.totalorder %s118, %s132
      %p134 = scmp.eq.s32.totalorder %s24, 0
      %p135 = por %p133, %p134
      %s137 = sadd.s32 %s136, 1
      %p140 = scmp.eq.s32.totalorder %s18, 1
      %p141 = scmp.ne.s32.totalorder %s136, %s138
      %p142 = scmp.eq.s32.totalorder %s18, 0
      %p143 = por %p141, %p142
      %p144 = scmp.ne.s32.totalorder %s136, %s138
      %p145 = scmp.eq.s32.totalorder %s23, 1
      %p146 = por %p144, %p145
      %p147 = scmp.ne.s32.totalorder %s138, %s139
      %p148 = scmp.eq.s32.totalorder %s23, 0
      %p149 = por %p147, %p148
      %p150 = scmp.ne.s32.totalorder %s138, %s139
      %p151 = scmp.eq.s32.totalorder %s24, 1
      %p152 = por %p150, %p151
      %p154 = scmp.ne.s32.totalorder %s139, %s153
      %p155 = scmp.eq.s32.totalorder %s24, 0
      %p156 = por %p154, %p155
      %s158 = sadd.s32 %s157, 1
      %p161 = scmp.eq.s32.totalorder %s18, 1
      %p162 = scmp.ne.s32.totalorder %s157, %s159
      %p163 = scmp.eq.s32.totalorder %s18, 0
      %p164 = por %p162, %p163
      %p165 = scmp.ne.s32.totalorder %s157, %s159
      %p166 = scmp.eq.s32.totalorder %s23, 1
      %p167 = por %p165, %p166
      %p168 = scmp.ne.s32.totalorder %s159, %s160
      %p169 = scmp.eq.s32.totalorder %s23, 0
      %p170 = por %p168, %p169
      %p171 = scmp.ne.s32.totalorder %s159, %s160
      %p172 = scmp.eq.s32.totalorder %s24, 1
      %p173 = por %p171, %p172
      %p175 = scmp.ne.s32.totalorder %s160, %s174
      %p176 = scmp.eq.s32.totalorder %s24, 0
      %p177 = por %p175, %p176
      %s179 = sadd.s32 %s178, 1
      %p182 = scmp.eq.s32.totalorder %s18, 1
      %p183 = scmp.ne.s32.totalorder %s178, %s180
      %p184 = scmp.eq.s32.totalorder %s18, 0
      %p185 = por %p183, %p184
      %p186 = scmp.ne.s32.totalorder %s178, %s180
      %p187 = scmp.eq.s32.totalorder %s23, 1
      %p188 = por %p186, %p187
      %p189 = scmp.ne.s32.totalorder %s180, %s181
      %p190 = scmp.eq.s32.totalorder %s23, 0
      %p191 = por %p189, %p190
      %p192 = scmp.ne.s32.totalorder %s180, %s181
      %p193 = scmp.eq.s32.totalorder %s24, 1
      %p194 = por %p192, %p193
      %p196 = scmp.ne.s32.totalorder %s181, %s195
      %p197 = scmp.eq.s32.totalorder %s24, 0
      %p198 = por %p196, %p197
      %s200 = sadd.s32 %s199, 1
      %p203 = scmp.eq.s32.totalorder %s18, 1
      %p204 = scmp.ne.s32.totalorder %s199, %s201
      %p205 = scmp.eq.s32.totalorder %s18, 0
      %p206 = por %p204, %p205
      %p207 = scmp.ne.s32.totalorder %s199, %s201
      %p208 = scmp.eq.s32.totalorder %s23, 1
      %p209 = por %p207, %p208
      %p210 = scmp.ne.s32.totalorder %s201, %s202
      %p211 = scmp.eq.s32.totalorder %s23, 0
      %p212 = por %p210, %p211
      %p213 = scmp.ne.s32.totalorder %s201, %s202
      %p214 = scmp.eq.s32.totalorder %s24, 1
      %p215 = por %p213, %p214
      %p217 = scmp.ne.s32.totalorder %s202, %s216
      %p218 = scmp.eq.s32.totalorder %s24, 0
      %p219 = por %p217, %p218
      %s220 = ssub.s32 %s18, %s25
      %p221 = scmp.eq.s32.totalorder %s220, 0
      %s223 = sadd.s32 %s222, 1
      %s224 = scalar_select %p221, %s222, %s223
      %p227 = pneg %p221
      %p228 = scmp.eq.s32.totalorder %s18, 1
      %p229 = por %p227, %p228
      %p230 = scmp.ne.s32.totalorder %s222, %s225
      %p231 = scmp.eq.s32.totalorder %s18, 0
      %p232 = por %p230, %p231
      %p233 = scmp.ne.s32.totalorder %s222, %s225
      %p234 = scmp.eq.s32.totalorder %s23, 1
      %p235 = por %p233, %p234
      %p236 = scmp.ne.s32.totalorder %s225, %s226
      %p237 = scmp.eq.s32.totalorder %s23, 0
      %p238 = por %p236, %p237
      %p239 = scmp.ne.s32.totalorder %s225, %s226
      %p240 = scmp.eq.s32.totalorder %s24, 1
      %p241 = por %p239, %p240
      %p243 = scmp.ne.s32.totalorder %s226, %s242
      %p244 = scmp.eq.s32.totalorder %s24, 0
      %p245 = por %p243, %p244
      %p246 = scmp.le.s32.totalorder 1, %s18
      %p247 = scmp.lt.s32.totalorder %s18, 3
      %p248 = pnand %p246, %p247
      %p249 = pneg %p248
      // Predicated region
      $region9: #{cnn_rnn_classifier_forward.1} parent=5 // pred_check
        _
      $region10: #{cnn_rnn_classifier_forward.1} parent=5 // pred_check_branch
        %251 = sbr.rel (%p248) target = $region12
      $region11: #{cnn_rnn_classifier_forward.1} parent=5 // pred_region
        %s252 = ssub.s32 %s18, 1
        // Predicated region
        $region13: #{cnn_rnn_classifier_forward.1} parent=11 // pred_check
          %p253 = pneg %p65
        $region14: #{cnn_rnn_classifier_forward.1} parent=11 // pred_check_branch
          %255 = sbr.rel (%p253) target = $region16
        $region15: #{cnn_rnn_classifier_forward.1} parent=11 // pred_region
          _
        $region16: #{cnn_rnn_classifier_forward.1} parent=11 // pred_fallthru
          _
        // Predicated region
        $region17: #{cnn_rnn_classifier_forward.1} parent=11 // pred_check
          %p256 = pneg %p86
        $region18: #{cnn_rnn_classifier_forward.1} parent=11 // pred_check_branch
          %258 = sbr.rel (%p256) target = $region20
        $region19: #{cnn_rnn_classifier_forward.1} parent=11 // pred_region
          _
        $region20: #{cnn_rnn_classifier_forward.1} parent=11 // pred_fallthru
          _
        // Predicated region
        $region21: #{cnn_rnn_classifier_forward.1} parent=11 // pred_check
          %p259 = pneg %p107
        $region22: #{cnn_rnn_classifier_forward.1} parent=11 // pred_check_branch
          %261 = sbr.rel (%p259) target = $region24
        $region23: #{cnn_rnn_classifier_forward.1} parent=11 // pred_region
          _
        $region24: #{cnn_rnn_classifier_forward.1} parent=11 // pred_fallthru
          _
        // Predicated region
        $region25: #{cnn_rnn_classifier_forward.1} parent=11 // pred_check
          %p262 = pneg %p128
        $region26: #{cnn_rnn_classifier_forward.1} parent=11 // pred_check_branch
          %264 = sbr.rel (%p262) target = $region28
        $region27: #{cnn_rnn_classifier_forward.1} parent=11 // pred_region
          _
        $region28: #{cnn_rnn_classifier_forward.1} parent=11 // pred_fallthru
          _
        // Predicated region
        $region29: #{cnn_rnn_classifier_forward.1} parent=11 // pred_check
          %p265 = pneg %p149
        $region30: #{cnn_rnn_classifier_forward.1} parent=11 // pred_check_branch
          %267 = sbr.rel (%p265) target = $region32
        $region31: #{cnn_rnn_classifier_forward.1} parent=11 // pred_region
          _
        $region32: #{cnn_rnn_classifier_forward.1} parent=11 // pred_fallthru
          _
        // Predicated region
        $region33: #{cnn_rnn_classifier_forward.1} parent=11 // pred_check
          %p268 = pneg %p170
        $region34: #{cnn_rnn_classifier_forward.1} parent=11 // pred_check_branch
          %270 = sbr.rel (%p268) target = $region36
        $region35: #{cnn_rnn_classifier_forward.1} parent=11 // pred_region
          _
        $region36: #{cnn_rnn_classifier_forward.1} parent=11 // pred_fallthru
          _
        // Predicated region
        $region37: #{cnn_rnn_classifier_forward.1} parent=11 // pred_check
          %p271 = pneg %p191
        $region38: #{cnn_rnn_classifier_forward.1} parent=11 // pred_check_branch
          %273 = sbr.rel (%p271) target = $region40
        $region39: #{cnn_rnn_classifier_forward.1} parent=11 // pred_region
          _
        $region40: #{cnn_rnn_classifier_forward.1} parent=11 // pred_fallthru
          _
        // Predicated region
        $region41: #{cnn_rnn_classifier_forward.1} parent=11 // pred_check
          %p274 = pneg %p212
        $region42: #{cnn_rnn_classifier_forward.1} parent=11 // pred_check_branch
          %276 = sbr.rel (%p274) target = $region44
        $region43: #{cnn_rnn_classifier_forward.1} parent=11 // pred_region
          _
        $region44: #{cnn_rnn_classifier_forward.1} parent=11 // pred_fallthru
          _
      $region12: #{cnn_rnn_classifier_forward.1} parent=5 // pred_fallthru
        _
      %p277 = scmp.lt.s32.totalorder %s18, 2
      // Predicated region
      $region45: #{cnn_rnn_classifier_forward.1} parent=5 // pred_check
        %p278 = pneg %p277
      $region46: #{cnn_rnn_classifier_forward.1} parent=5 // pred_check_branch
        %280 = sbr.rel (%p278) target = $region48
      $region47: #{cnn_rnn_classifier_forward.1} parent=5 // pred_region
        // Predicated region
        $region49: #{cnn_rnn_classifier_forward.1} parent=47 // pred_check
          %p281 = pneg %p38
        $region50: #{cnn_rnn_classifier_forward.1} parent=47 // pred_check_branch
          %283 = sbr.rel (%p281) target = $region52
        $region51: #{cnn_rnn_classifier_forward.1} parent=47 // pred_region
          %s284 = smul.u32 2, %s18
          %p285 = scmp.lt.s32.totalorder %s284, 3
          %s286 = scalar_select %p285, %s284, 3
          %s287 = smul.addr %s286, 11
          %s288 = smul.addr %s287, 8
          %s289 = scalar_lea.vmem %s0, %s288
          %s290 = smul.u32 2, %s18
        $region52: #{cnn_rnn_classifier_forward.1} parent=47 // pred_fallthru
          _
      $region48: #{cnn_rnn_classifier_forward.1} parent=5 // pred_fallthru
        _
      %p291 = scmp.le.s32.totalorder 1, %s18
      %p292 = scmp.lt.s32.totalorder %s18, 3
      %p293 = pnand %p291, %p292
      %p294 = pneg %p293
      // Predicated region
      $region53: #{cnn_rnn_classifier_forward.1} parent=5 // pred_check
        _
      $region54: #{cnn_rnn_classifier_forward.1} parent=5 // pred_check_branch
        %296 = sbr.rel (%p293) target = $region56
      $region55: #{cnn_rnn_classifier_forward.1} parent=5 // pred_region
        %s297 = ssub.s32 %s18, 1
        %s298 = smul.u32 2, %s23
        %p299 = scmp.lt.s32.totalorder %s298, 3
        %s300 = scalar_select %p299, %s298, 3
        %s301 = smul.addr %s300, 11
        %s302 = smul.addr %s301, 8
        %s303 = scalar_lea.vmem %s0, %s302
        %p304 = pneg %p44
        %p305 = pneg %p41
        %p306 = pneg %p65
        %p307 = pneg %p62
        %p308 = pneg %p86
        %p309 = pneg %p83
        %p310 = pneg %p107
        %p311 = pneg %p104
        %p312 = pneg %p128
        %p313 = pneg %p125
        %p314 = pneg %p149
        %p315 = pneg %p146
        %p316 = pneg %p170
        %p317 = pneg %p167
        %p318 = pneg %p191
        %p319 = pneg %p188
        %p320 = pneg %p212
        %p321 = pneg %p209
        %p322 = pneg %p238
        %p323 = pneg %p235
        %s324 = sand.u32 %s225, 1
        %s325 = scalar_lea.sflag [#allocation3], %s324
        %s326 = sand.u32 %s225, 1
        %s327 = smul.addr %s326, 2
        %s328 = scalar_lea.vmem [#allocation2], %s327
        %s329 = smul.u32 2, %s23
        %p330 = scmp.lt.s32.totalorder %s329, 3
        %s331 = scalar_select %p330, %s329, 3
        %s332 = smul.addr %s331, 11
        %s333 = smul.addr %s332, 8
        %s334 = scalar_lea.vmem %s0, %s333
        %s335 = smul.u32 2, %s23
        %v336 = vld [vmem:[%s334] sm:$0xff]
        %v337 = vld [vmem:[%s334 + $0x8] sm:$0xff]
        %v338 = vld [vmem:[%s334 + $0x10] sm:$0xff]
        %v339 = vld [vmem:[%s334 + $0x18] sm:$0xff]
        %v340 = vld [vmem:[%s334 + $0x20] sm:$0xff]
        %v341 = vld [vmem:[%s334 + $0x28] sm:$0xff]
        %v342 = vld [vmem:[%s334 + $0x30] sm:$0xff]
        %v343 = vld [vmem:[%s334 + $0x38] sm:$0xff]
        %v344 = vld [vmem:[%s334 + $0x40] sm:$0xff]
        %v345 = vld [vmem:[%s334 + $0x48] sm:$0xff]
        %v346 = vld [vmem:[%s334 + $0x50] sm:$0x1f]
        %v347 = vld [vmem:[%s334 + $0x58] sm:$0xff]
        %v348 = vld [vmem:[%s334 + $0x60] sm:$0xff]
        %v349 = vld [vmem:[%s334 + $0x68] sm:$0xff]
        %v350 = vld [vmem:[%s334 + $0x70] sm:$0xff]
        %v351 = vld [vmem:[%s334 + $0x78] sm:$0xff]
        %v352 = vld [vmem:[%s334 + $0x80] sm:$0xff]
        %v353 = vld [vmem:[%s334 + $0x88] sm:$0xff]
        %v354 = vld [vmem:[%s334 + $0x90] sm:$0xff]
        %v355 = vld [vmem:[%s334 + $0x98] sm:$0xff]
        %v356 = vld [vmem:[%s334 + $0xa0] sm:$0xff]
        %v357 = vld [vmem:[%s334 + $0xa8] sm:$0x1f]
        %v380 = vcombine.high %v336, %v336
        %v382 = vunpack.c.l.s4 1966171168
        %v383 = vunpack.c.0.s8 %v382
        %v384 = vlaneseq
        %v385 = vshrl.u32 %v384, 7
        %v386 = vsub.s32 %v383, %v385
        %v387 = vrot.slane %v336, %v386
        %v389 = vunpack.c.l.s4 1966171168
        %v390 = vunpack.c.0.s8 %v389
        %v391 = vlaneseq
        %v392 = vshrl.u32 %v391, 7
        %v393 = vsub.s32 %v390, %v392
        %v394 = vrot.slane %v380, %v393
        %v395 = vcombine.high %v387, %v387
        %v396 = vcombine.high %v394, %v394
        %v398 = vunpack.c.l.s4 1966171168
        %v399 = vunpack.c.0.s8 %v398
        %v400 = vlaneseq
        %v401 = vshrl.u32 %v400, 7
        %v402 = vsub.s32 %v399, %v401
        %v403 = vrot.slane %v387, %v402
        %v405 = vunpack.c.l.s4 1966171168
        %v406 = vunpack.c.0.s8 %v405
        %v407 = vlaneseq
        %v408 = vshrl.u32 %v407, 7
        %v409 = vsub.s32 %v406, %v408
        %v410 = vrot.slane %v394, %v409
        %v412 = vunpack.c.l.s4 1966171168
        %v413 = vunpack.c.0.s8 %v412
        %v414 = vlaneseq
        %v415 = vshrl.u32 %v414, 7
        %v416 = vsub.s32 %v413, %v415
        %v417 = vrot.slane %v395, %v416
        %v419 = vunpack.c.l.s4 1966171168
        %v420 = vunpack.c.0.s8 %v419
        %v421 = vlaneseq
        %v422 = vshrl.u32 %v421, 7
        %v423 = vsub.s32 %v420, %v422
        %v424 = vrot.slane %v396, %v423
        %v425 = vcombine.high %v403, %v403
        %v426 = vcombine.high %v410, %v410
        %v427 = vcombine.high %v417, %v417
        %v428 = vcombine.high %v424, %v424
        %v429 = vcombine.high %v337, %v337
        %v431 = vunpack.c.l.s4 1966171168
        %v432 = vunpack.c.0.s8 %v431
        %v433 = vlaneseq
        %v434 = vshrl.u32 %v433, 7
        %v435 = vsub.s32 %v432, %v434
        %v436 = vrot.slane %v337, %v435
        %v438 = vunpack.c.l.s4 1966171168
        %v439 = vunpack.c.0.s8 %v438
        %v440 = vlaneseq
        %v441 = vshrl.u32 %v440, 7
        %v442 = vsub.s32 %v439, %v441
        %v443 = vrot.slane %v429, %v442
        %v444 = vcombine.high %v436, %v436
        %v445 = vcombine.high %v443, %v443
        %v447 = vunpack.c.l.s4 1966171168
        %v448 = vunpack.c.0.s8 %v447
        %v449 = vlaneseq
        %v450 = vshrl.u32 %v449, 7
        %v451 = vsub.s32 %v448, %v450
        %v452 = vrot.slane %v436, %v451
        %v454 = vunpack.c.l.s4 1966171168
        %v455 = vunpack.c.0.s8 %v454
        %v456 = vlaneseq
        %v457 = vshrl.u32 %v456, 7
        %v458 = vsub.s32 %v455, %v457
        %v459 = vrot.slane %v443, %v458
        %v461 = vunpack.c.l.s4 1966171168
        %v462 = vunpack.c.0.s8 %v461
        %v463 = vlaneseq
        %v464 = vshrl.u32 %v463, 7
        %v465 = vsub.s32 %v462, %v464
        %v466 = vrot.slane %v444, %v465
        %v468 = vunpack.c.l.s4 1966171168
        %v469 = vunpack.c.0.s8 %v468
        %v470 = vlaneseq
        %v471 = vshrl.u32 %v470, 7
        %v472 = vsub.s32 %v469, %v471
        %v473 = vrot.slane %v445, %v472
        %v474 = vcombine.high %v452, %v452
        %v475 = vcombine.high %v459, %v459
        %v476 = vcombine.high %v466, %v466
        %v477 = vcombine.high %v473, %v473
        %v478 = vcombine.high %v338, %v338
        %v480 = vunpack.c.l.s4 1966171168
        %v481 = vunpack.c.0.s8 %v480
        %v482 = vlaneseq
        %v483 = vshrl.u32 %v482, 7
        %v484 = vsub.s32 %v481, %v483
        %v485 = vrot.slane %v338, %v484
        %v487 = vunpack.c.l.s4 1966171168
        %v488 = vunpack.c.0.s8 %v487
        %v489 = vlaneseq
        %v490 = vshrl.u32 %v489, 7
        %v491 = vsub.s32 %v488, %v490
        %v492 = vrot.slane %v478, %v491
        %v493 = vcombine.high %v485, %v485
        %v494 = vcombine.high %v492, %v492
        %v496 = vunpack.c.l.s4 1966171168
        %v497 = vunpack.c.0.s8 %v496
        %v498 = vlaneseq
        %v499 = vshrl.u32 %v498, 7
        %v500 = vsub.s32 %v497, %v499
        %v501 = vrot.slane %v485, %v500
        %v503 = vunpack.c.l.s4 1966171168
        %v504 = vunpack.c.0.s8 %v503
        %v505 = vlaneseq
        %v506 = vshrl.u32 %v505, 7
        %v507 = vsub.s32 %v504, %v506
        %v508 = vrot.slane %v492, %v507
        %v510 = vunpack.c.l.s4 1966171168
        %v511 = vunpack.c.0.s8 %v510
        %v512 = vlaneseq
        %v513 = vshrl.u32 %v512, 7
        %v514 = vsub.s32 %v511, %v513
        %v515 = vrot.slane %v493, %v514
        %v517 = vunpack.c.l.s4 1966171168
        %v518 = vunpack.c.0.s8 %v517
        %v519 = vlaneseq
        %v520 = vshrl.u32 %v519, 7
        %v521 = vsub.s32 %v518, %v520
        %v522 = vrot.slane %v494, %v521
        %v523 = vcombine.high %v501, %v501
        %v524 = vcombine.high %v508, %v508
        %v525 = vcombine.high %v515, %v515
        %v526 = vcombine.high %v522, %v522
        %v527 = vcombine.high %v339, %v339
        %v529 = vunpack.c.l.s4 1966171168
        %v530 = vunpack.c.0.s8 %v529
        %v531 = vlaneseq
        %v532 = vshrl.u32 %v531, 7
        %v533 = vsub.s32 %v530, %v532
        %v534 = vrot.slane %v339, %v533
        %v536 = vunpack.c.l.s4 1966171168
        %v537 = vunpack.c.0.s8 %v536
        %v538 = vlaneseq
        %v539 = vshrl.u32 %v538, 7
        %v540 = vsub.s32 %v537, %v539
        %v541 = vrot.slane %v527, %v540
        %v542 = vcombine.high %v534, %v534
        %v543 = vcombine.high %v541, %v541
        %v545 = vunpack.c.l.s4 1966171168
        %v546 = vunpack.c.0.s8 %v545
        %v547 = vlaneseq
        %v548 = vshrl.u32 %v547, 7
        %v549 = vsub.s32 %v546, %v548
        %v550 = vrot.slane %v534, %v549
        %v552 = vunpack.c.l.s4 1966171168
        %v553 = vunpack.c.0.s8 %v552
        %v554 = vlaneseq
        %v555 = vshrl.u32 %v554, 7
        %v556 = vsub.s32 %v553, %v555
        %v557 = vrot.slane %v541, %v556
        %v559 = vunpack.c.l.s4 1966171168
        %v560 = vunpack.c.0.s8 %v559
        %v561 = vlaneseq
        %v562 = vshrl.u32 %v561, 7
        %v563 = vsub.s32 %v560, %v562
        %v564 = vrot.slane %v542, %v563
        %v566 = vunpack.c.l.s4 1966171168
        %v567 = vunpack.c.0.s8 %v566
        %v568 = vlaneseq
        %v569 = vshrl.u32 %v568, 7
        %v570 = vsub.s32 %v567, %v569
        %v571 = vrot.slane %v543, %v570
        %v572 = vcombine.high %v550, %v550
        %v573 = vcombine.high %v557, %v557
        %v574 = vcombine.high %v564, %v564
        %v575 = vcombine.high %v571, %v571
        %v576 = vcombine.high %v340, %v340
        %v578 = vunpack.c.l.s4 1966171168
        %v579 = vunpack.c.0.s8 %v578
        %v580 = vlaneseq
        %v581 = vshrl.u32 %v580, 7
        %v582 = vsub.s32 %v579, %v581
        %v583 = vrot.slane %v340, %v582
        %v585 = vunpack.c.l.s4 1966171168
        %v586 = vunpack.c.0.s8 %v585
        %v587 = vlaneseq
        %v588 = vshrl.u32 %v587, 7
        %v589 = vsub.s32 %v586, %v588
        %v590 = vrot.slane %v576, %v589
        %v591 = vcombine.high %v583, %v583
        %v592 = vcombine.high %v590, %v590
        %v594 = vunpack.c.l.s4 1966171168
        %v595 = vunpack.c.0.s8 %v594
        %v596 = vlaneseq
        %v597 = vshrl.u32 %v596, 7
        %v598 = vsub.s32 %v595, %v597
        %v599 = vrot.slane %v583, %v598
        %v601 = vunpack.c.l.s4 1966171168
        %v602 = vunpack.c.0.s8 %v601
        %v603 = vlaneseq
        %v604 = vshrl.u32 %v603, 7
        %v605 = vsub.s32 %v602, %v604
        %v606 = vrot.slane %v590, %v605
        %v608 = vunpack.c.l.s4 1966171168
        %v609 = vunpack.c.0.s8 %v608
        %v610 = vlaneseq
        %v611 = vshrl.u32 %v610, 7
        %v612 = vsub.s32 %v609, %v611
        %v613 = vrot.slane %v591, %v612
        %v615 = vunpack.c.l.s4 1966171168
        %v616 = vunpack.c.0.s8 %v615
        %v617 = vlaneseq
        %v618 = vshrl.u32 %v617, 7
        %v619 = vsub.s32 %v616, %v618
        %v620 = vrot.slane %v592, %v619
        %v621 = vcombine.high %v599, %v599
        %v622 = vcombine.high %v606, %v606
        %v623 = vcombine.high %v613, %v613
        %v624 = vcombine.high %v620, %v620
        %v625 = vcombine.high %v341, %v341
        %v627 = vunpack.c.l.s4 1966171168
        %v628 = vunpack.c.0.s8 %v627
        %v629 = vlaneseq
        %v630 = vshrl.u32 %v629, 7
        %v631 = vsub.s32 %v628, %v630
        %v632 = vrot.slane %v341, %v631
        %v634 = vunpack.c.l.s4 1966171168
        %v635 = vunpack.c.0.s8 %v634
        %v636 = vlaneseq
        %v637 = vshrl.u32 %v636, 7
        %v638 = vsub.s32 %v635, %v637
        %v639 = vrot.slane %v625, %v638
        %v640 = vcombine.high %v632, %v632
        %v641 = vcombine.high %v639, %v639
        %v643 = vunpack.c.l.s4 1966171168
        %v644 = vunpack.c.0.s8 %v643
        %v645 = vlaneseq
        %v646 = vshrl.u32 %v645, 7
        %v647 = vsub.s32 %v644, %v646
        %v648 = vrot.slane %v632, %v647
        %v650 = vunpack.c.l.s4 1966171168
        %v651 = vunpack.c.0.s8 %v650
        %v652 = vlaneseq
        %v653 = vshrl.u32 %v652, 7
        %v654 = vsub.s32 %v651, %v653
        %v655 = vrot.slane %v639, %v654
        %v657 = vunpack.c.l.s4 1966171168
        %v658 = vunpack.c.0.s8 %v657
        %v659 = vlaneseq
        %v660 = vshrl.u32 %v659, 7
        %v661 = vsub.s32 %v658, %v660
        %v662 = vrot.slane %v640, %v661
        %v664 = vunpack.c.l.s4 1966171168
        %v665 = vunpack.c.0.s8 %v664
        %v666 = vlaneseq
        %v667 = vshrl.u32 %v666, 7
        %v668 = vsub.s32 %v665, %v667
        %v669 = vrot.slane %v641, %v668
        %v670 = vcombine.high %v648, %v648
        %v671 = vcombine.high %v655, %v655
        %v672 = vcombine.high %v662, %v662
        %v673 = vcombine.high %v669, %v669
        %v674 = vcombine.high %v342, %v342
        %v676 = vunpack.c.l.s4 1966171168
        %v677 = vunpack.c.0.s8 %v676
        %v678 = vlaneseq
        %v679 = vshrl.u32 %v678, 7
        %v680 = vsub.s32 %v677, %v679
        %v681 = vrot.slane %v342, %v680
        %v683 = vunpack.c.l.s4 1966171168
        %v684 = vunpack.c.0.s8 %v683
        %v685 = vlaneseq
        %v686 = vshrl.u32 %v685, 7
        %v687 = vsub.s32 %v684, %v686
        %v688 = vrot.slane %v674, %v687
        %v689 = vcombine.high %v681, %v681
        %v690 = vcombine.high %v688, %v688
        %v692 = vunpack.c.l.s4 1966171168
        %v693 = vunpack.c.0.s8 %v692
        %v694 = vlaneseq
        %v695 = vshrl.u32 %v694, 7
        %v696 = vsub.s32 %v693, %v695
        %v697 = vrot.slane %v681, %v696
        %v699 = vunpack.c.l.s4 1966171168
        %v700 = vunpack.c.0.s8 %v699
        %v701 = vlaneseq
        %v702 = vshrl.u32 %v701, 7
        %v703 = vsub.s32 %v700, %v702
        %v704 = vrot.slane %v688, %v703
        %v706 = vunpack.c.l.s4 1966171168
        %v707 = vunpack.c.0.s8 %v706
        %v708 = vlaneseq
        %v709 = vshrl.u32 %v708, 7
        %v710 = vsub.s32 %v707, %v709
        %v711 = vrot.slane %v689, %v710
        %v713 = vunpack.c.l.s4 1966171168
        %v714 = vunpack.c.0.s8 %v713
        %v715 = vlaneseq
        %v716 = vshrl.u32 %v715, 7
        %v717 = vsub.s32 %v714, %v716
        %v718 = vrot.slane %v690, %v717
        %v719 = vcombine.high %v697, %v697
        %v720 = vcombine.high %v704, %v704
        %v721 = vcombine.high %v711, %v711
        %v722 = vcombine.high %v718, %v718
        %v723 = vcombine.high %v343, %v343
        %v725 = vunpack.c.l.s4 1966171168
        %v726 = vunpack.c.0.s8 %v725
        %v727 = vlaneseq
        %v728 = vshrl.u32 %v727, 7
        %v729 = vsub.s32 %v726, %v728
        %v730 = vrot.slane %v343, %v729
        %v732 = vunpack.c.l.s4 1966171168
        %v733 = vunpack.c.0.s8 %v732
        %v734 = vlaneseq
        %v735 = vshrl.u32 %v734, 7
        %v736 = vsub.s32 %v733, %v735
        %v737 = vrot.slane %v723, %v736
        %v738 = vcombine.high %v730, %v730
        %v739 = vcombine.high %v737, %v737
        %v741 = vunpack.c.l.s4 1966171168
        %v742 = vunpack.c.0.s8 %v741
        %v743 = vlaneseq
        %v744 = vshrl.u32 %v743, 7
        %v745 = vsub.s32 %v742, %v744
        %v746 = vrot.slane %v730, %v745
        %v748 = vunpack.c.l.s4 1966171168
        %v749 = vunpack.c.0.s8 %v748
        %v750 = vlaneseq
        %v751 = vshrl.u32 %v750, 7
        %v752 = vsub.s32 %v749, %v751
        %v753 = vrot.slane %v737, %v752
        %v755 = vunpack.c.l.s4 1966171168
        %v756 = vunpack.c.0.s8 %v755
        %v757 = vlaneseq
        %v758 = vshrl.u32 %v757, 7
        %v759 = vsub.s32 %v756, %v758
        %v760 = vrot.slane %v738, %v759
        %v762 = vunpack.c.l.s4 1966171168
        %v763 = vunpack.c.0.s8 %v762
        %v764 = vlaneseq
        %v765 = vshrl.u32 %v764, 7
        %v766 = vsub.s32 %v763, %v765
        %v767 = vrot.slane %v739, %v766
        %v768 = vcombine.high %v746, %v746
        %v769 = vcombine.high %v753, %v753
        %v770 = vcombine.high %v760, %v760
        %v771 = vcombine.high %v767, %v767
        %v772 = vcombine.high %v344, %v344
        %v774 = vunpack.c.l.s4 1966171168
        %v775 = vunpack.c.0.s8 %v774
        %v776 = vlaneseq
        %v777 = vshrl.u32 %v776, 7
        %v778 = vsub.s32 %v775, %v777
        %v779 = vrot.slane %v344, %v778
        %v781 = vunpack.c.l.s4 1966171168
        %v782 = vunpack.c.0.s8 %v781
        %v783 = vlaneseq
        %v784 = vshrl.u32 %v783, 7
        %v785 = vsub.s32 %v782, %v784
        %v786 = vrot.slane %v772, %v785
        %v787 = vcombine.high %v779, %v779
        %v788 = vcombine.high %v786, %v786
        %v790 = vunpack.c.l.s4 1966171168
        %v791 = vunpack.c.0.s8 %v790
        %v792 = vlaneseq
        %v793 = vshrl.u32 %v792, 7
        %v794 = vsub.s32 %v791, %v793
        %v795 = vrot.slane %v779, %v794
        %v797 = vunpack.c.l.s4 1966171168
        %v798 = vunpack.c.0.s8 %v797
        %v799 = vlaneseq
        %v800 = vshrl.u32 %v799, 7
        %v801 = vsub.s32 %v798, %v800
        %v802 = vrot.slane %v786, %v801
        %v804 = vunpack.c.l.s4 1966171168
        %v805 = vunpack.c.0.s8 %v804
        %v806 = vlaneseq
        %v807 = vshrl.u32 %v806, 7
        %v808 = vsub.s32 %v805, %v807
        %v809 = vrot.slane %v787, %v808
        %v811 = vunpack.c.l.s4 1966171168
        %v812 = vunpack.c.0.s8 %v811
        %v813 = vlaneseq
        %v814 = vshrl.u32 %v813, 7
        %v815 = vsub.s32 %v812, %v814
        %v816 = vrot.slane %v788, %v815
        %v817 = vcombine.high %v795, %v795
        %v818 = vcombine.high %v802, %v802
        %v819 = vcombine.high %v809, %v809
        %v820 = vcombine.high %v816, %v816
        %v821 = vcombine.high %v345, %v345
        %v823 = vunpack.c.l.s4 1966171168
        %v824 = vunpack.c.0.s8 %v823
        %v825 = vlaneseq
        %v826 = vshrl.u32 %v825, 7
        %v827 = vsub.s32 %v824, %v826
        %v828 = vrot.slane %v345, %v827
        %v830 = vunpack.c.l.s4 1966171168
        %v831 = vunpack.c.0.s8 %v830
        %v832 = vlaneseq
        %v833 = vshrl.u32 %v832, 7
        %v834 = vsub.s32 %v831, %v833
        %v835 = vrot.slane %v821, %v834
        %v836 = vcombine.high %v828, %v828
        %v837 = vcombine.high %v835, %v835
        %v839 = vunpack.c.l.s4 1966171168
        %v840 = vunpack.c.0.s8 %v839
        %v841 = vlaneseq
        %v842 = vshrl.u32 %v841, 7
        %v843 = vsub.s32 %v840, %v842
        %v844 = vrot.slane %v828, %v843
        %v846 = vunpack.c.l.s4 1966171168
        %v847 = vunpack.c.0.s8 %v846
        %v848 = vlaneseq
        %v849 = vshrl.u32 %v848, 7
        %v850 = vsub.s32 %v847, %v849
        %v851 = vrot.slane %v835, %v850
        %v853 = vunpack.c.l.s4 1966171168
        %v854 = vunpack.c.0.s8 %v853
        %v855 = vlaneseq
        %v856 = vshrl.u32 %v855, 7
        %v857 = vsub.s32 %v854, %v856
        %v858 = vrot.slane %v836, %v857
        %v860 = vunpack.c.l.s4 1966171168
        %v861 = vunpack.c.0.s8 %v860
        %v862 = vlaneseq
        %v863 = vshrl.u32 %v862, 7
        %v864 = vsub.s32 %v861, %v863
        %v865 = vrot.slane %v837, %v864
        %v866 = vcombine.high %v844, %v844
        %v867 = vcombine.high %v851, %v851
        %v868 = vcombine.high %v858, %v858
        %v869 = vcombine.high %v865, %v865
        %v870 = vcombine.high %v346, %v346
        %v872 = vunpack.c.l.s4 1966171168
        %v873 = vunpack.c.0.s8 %v872
        %v874 = vlaneseq
        %v875 = vshrl.u32 %v874, 7
        %v876 = vsub.s32 %v873, %v875
        %v877 = vrot.slane %v346, %v876
        %v879 = vunpack.c.l.s4 1966171168
        %v880 = vunpack.c.0.s8 %v879
        %v881 = vlaneseq
        %v882 = vshrl.u32 %v881, 7
        %v883 = vsub.s32 %v880, %v882
        %v884 = vrot.slane %v870, %v883
        %v885 = vcombine.high %v877, %v877
        %v887 = vunpack.c.l.s4 1966171168
        %v888 = vunpack.c.0.s8 %v887
        %v889 = vlaneseq
        %v890 = vshrl.u32 %v889, 7
        %v891 = vsub.s32 %v888, %v890
        %v892 = vrot.slane %v877, %v891
        %v894 = vunpack.c.l.s4 1966171168
        %v895 = vunpack.c.0.s8 %v894
        %v896 = vlaneseq
        %v897 = vshrl.u32 %v896, 7
        %v898 = vsub.s32 %v895, %v897
        %v899 = vrot.slane %v884, %v898
        %v901 = vunpack.c.l.s4 1966171168
        %v902 = vunpack.c.0.s8 %v901
        %v903 = vlaneseq
        %v904 = vshrl.u32 %v903, 7
        %v905 = vsub.s32 %v902, %v904
        %v906 = vrot.slane %v885, %v905
        %v907 = vcombine.high %v892, %v892
        %v908 = vcombine.high %v906, %v906
        %v909 = vcombine.high %v347, %v347
        %v911 = vunpack.c.l.s4 1966171168
        %v912 = vunpack.c.0.s8 %v911
        %v913 = vlaneseq
        %v914 = vshrl.u32 %v913, 7
        %v915 = vsub.s32 %v912, %v914
        %v916 = vrot.slane %v347, %v915
        %v918 = vunpack.c.l.s4 1966171168
        %v919 = vunpack.c.0.s8 %v918
        %v920 = vlaneseq
        %v921 = vshrl.u32 %v920, 7
        %v922 = vsub.s32 %v919, %v921
        %v923 = vrot.slane %v909, %v922
        %v924 = vcombine.high %v916, %v916
        %v925 = vcombine.high %v923, %v923
        %v927 = vunpack.c.l.s4 1966171168
        %v928 = vunpack.c.0.s8 %v927
        %v929 = vlaneseq
        %v930 = vshrl.u32 %v929, 7
        %v931 = vsub.s32 %v928, %v930
        %v932 = vrot.slane %v916, %v931
        %v934 = vunpack.c.l.s4 1966171168
        %v935 = vunpack.c.0.s8 %v934
        %v936 = vlaneseq
        %v937 = vshrl.u32 %v936, 7
        %v938 = vsub.s32 %v935, %v937
        %v939 = vrot.slane %v923, %v938
        %v941 = vunpack.c.l.s4 1966171168
        %v942 = vunpack.c.0.s8 %v941
        %v943 = vlaneseq
        %v944 = vshrl.u32 %v943, 7
        %v945 = vsub.s32 %v942, %v944
        %v946 = vrot.slane %v924, %v945
        %v948 = vunpack.c.l.s4 1966171168
        %v949 = vunpack.c.0.s8 %v948
        %v950 = vlaneseq
        %v951 = vshrl.u32 %v950, 7
        %v952 = vsub.s32 %v949, %v951
        %v953 = vrot.slane %v925, %v952
        %v954 = vcombine.high %v932, %v932
        %v955 = vcombine.high %v939, %v939
        %v956 = vcombine.high %v946, %v946
        %v957 = vcombine.high %v953, %v953
        %v958 = vcombine.high %v348, %v348
        %v960 = vunpack.c.l.s4 1966171168
        %v961 = vunpack.c.0.s8 %v960
        %v962 = vlaneseq
        %v963 = vshrl.u32 %v962, 7
        %v964 = vsub.s32 %v961, %v963
        %v965 = vrot.slane %v348, %v964
        %v967 = vunpack.c.l.s4 1966171168
        %v968 = vunpack.c.0.s8 %v967
        %v969 = vlaneseq
        %v970 = vshrl.u32 %v969, 7
        %v971 = vsub.s32 %v968, %v970
        %v972 = vrot.slane %v958, %v971
        %v973 = vcombine.high %v965, %v965
        %v974 = vcombine.high %v972, %v972
        %v976 = vunpack.c.l.s4 1966171168
        %v977 = vunpack.c.0.s8 %v976
        %v978 = vlaneseq
        %v979 = vshrl.u32 %v978, 7
        %v980 = vsub.s32 %v977, %v979
        %v981 = vrot.slane %v965, %v980
        %v983 = vunpack.c.l.s4 1966171168
        %v984 = vunpack.c.0.s8 %v983
        %v985 = vlaneseq
        %v986 = vshrl.u32 %v985, 7
        %v987 = vsub.s32 %v984, %v986
        %v988 = vrot.slane %v972, %v987
        %v990 = vunpack.c.l.s4 1966171168
        %v991 = vunpack.c.0.s8 %v990
        %v992 = vlaneseq
        %v993 = vshrl.u32 %v992, 7
        %v994 = vsub.s32 %v991, %v993
        %v995 = vrot.slane %v973, %v994
        %v997 = vunpack.c.l.s4 1966171168
        %v998 = vunpack.c.0.s8 %v997
        %v999 = vlaneseq
        %v1000 = vshrl.u32 %v999, 7
        %v1001 = vsub.s32 %v998, %v1000
        %v1002 = vrot.slane %v974, %v1001
        %v1003 = vcombine.high %v981, %v981
        %v1004 = vcombine.high %v988, %v988
        %v1005 = vcombine.high %v995, %v995
        %v1006 = vcombine.high %v1002, %v1002
        %v1007 = vcombine.high %v349, %v349
        %v1009 = vunpack.c.l.s4 1966171168
        %v1010 = vunpack.c.0.s8 %v1009
        %v1011 = vlaneseq
        %v1012 = vshrl.u32 %v1011, 7
        %v1013 = vsub.s32 %v1010, %v1012
        %v1014 = vrot.slane %v349, %v1013
        %v1016 = vunpack.c.l.s4 1966171168
        %v1017 = vunpack.c.0.s8 %v1016
        %v1018 = vlaneseq
        %v1019 = vshrl.u32 %v1018, 7
        %v1020 = vsub.s32 %v1017, %v1019
        %v1021 = vrot.slane %v1007, %v1020
        %v1022 = vcombine.high %v1014, %v1014
        %v1023 = vcombine.high %v1021, %v1021
        %v1025 = vunpack.c.l.s4 1966171168
        %v1026 = vunpack.c.0.s8 %v1025
        %v1027 = vlaneseq
        %v1028 = vshrl.u32 %v1027, 7
        %v1029 = vsub.s32 %v1026, %v1028
        %v1030 = vrot.slane %v1014, %v1029
        %v1032 = vunpack.c.l.s4 1966171168
        %v1033 = vunpack.c.0.s8 %v1032
        %v1034 = vlaneseq
        %v1035 = vshrl.u32 %v1034, 7
        %v1036 = vsub.s32 %v1033, %v1035
        %v1037 = vrot.slane %v1021, %v1036
        %v1039 = vunpack.c.l.s4 1966171168
        %v1040 = vunpack.c.0.s8 %v1039
        %v1041 = vlaneseq
        %v1042 = vshrl.u32 %v1041, 7
        %v1043 = vsub.s32 %v1040, %v1042
        %v1044 = vrot.slane %v1022, %v1043
        %v1046 = vunpack.c.l.s4 1966171168
        %v1047 = vunpack.c.0.s8 %v1046
        %v1048 = vlaneseq
        %v1049 = vshrl.u32 %v1048, 7
        %v1050 = vsub.s32 %v1047, %v1049
        %v1051 = vrot.slane %v1023, %v1050
        %v1052 = vcombine.high %v1030, %v1030
        %v1053 = vcombine.high %v1037, %v1037
        %v1054 = vcombine.high %v1044, %v1044
        %v1055 = vcombine.high %v1051, %v1051
        %v1056 = vcombine.high %v350, %v350
        %v1058 = vunpack.c.l.s4 1966171168
        %v1059 = vunpack.c.0.s8 %v1058
        %v1060 = vlaneseq
        %v1061 = vshrl.u32 %v1060, 7
        %v1062 = vsub.s32 %v1059, %v1061
        %v1063 = vrot.slane %v350, %v1062
        %v1065 = vunpack.c.l.s4 1966171168
        %v1066 = vunpack.c.0.s8 %v1065
        %v1067 = vlaneseq
        %v1068 = vshrl.u32 %v1067, 7
        %v1069 = vsub.s32 %v1066, %v1068
        %v1070 = vrot.slane %v1056, %v1069
        %v1071 = vcombine.high %v1063, %v1063
        %v1072 = vcombine.high %v1070, %v1070
        %v1074 = vunpack.c.l.s4 1966171168
        %v1075 = vunpack.c.0.s8 %v1074
        %v1076 = vlaneseq
        %v1077 = vshrl.u32 %v1076, 7
        %v1078 = vsub.s32 %v1075, %v1077
        %v1079 = vrot.slane %v1063, %v1078
        %v1081 = vunpack.c.l.s4 1966171168
        %v1082 = vunpack.c.0.s8 %v1081
        %v1083 = vlaneseq
        %v1084 = vshrl.u32 %v1083, 7
        %v1085 = vsub.s32 %v1082, %v1084
        %v1086 = vrot.slane %v1070, %v1085
        %v1088 = vunpack.c.l.s4 1966171168
        %v1089 = vunpack.c.0.s8 %v1088
        %v1090 = vlaneseq
        %v1091 = vshrl.u32 %v1090, 7
        %v1092 = vsub.s32 %v1089, %v1091
        %v1093 = vrot.slane %v1071, %v1092
        %v1095 = vunpack.c.l.s4 1966171168
        %v1096 = vunpack.c.0.s8 %v1095
        %v1097 = vlaneseq
        %v1098 = vshrl.u32 %v1097, 7
        %v1099 = vsub.s32 %v1096, %v1098
        %v1100 = vrot.slane %v1072, %v1099
        %v1101 = vcombine.high %v1079, %v1079
        %v1102 = vcombine.high %v1086, %v1086
        %v1103 = vcombine.high %v1093, %v1093
        %v1104 = vcombine.high %v1100, %v1100
        %v1105 = vcombine.high %v351, %v351
        %v1107 = vunpack.c.l.s4 1966171168
        %v1108 = vunpack.c.0.s8 %v1107
        %v1109 = vlaneseq
        %v1110 = vshrl.u32 %v1109, 7
        %v1111 = vsub.s32 %v1108, %v1110
        %v1112 = vrot.slane %v351, %v1111
        %v1114 = vunpack.c.l.s4 1966171168
        %v1115 = vunpack.c.0.s8 %v1114
        %v1116 = vlaneseq
        %v1117 = vshrl.u32 %v1116, 7
        %v1118 = vsub.s32 %v1115, %v1117
        %v1119 = vrot.slane %v1105, %v1118
        %v1120 = vcombine.high %v1112, %v1112
        %v1121 = vcombine.high %v1119, %v1119
        %v1123 = vunpack.c.l.s4 1966171168
        %v1124 = vunpack.c.0.s8 %v1123
        %v1125 = vlaneseq
        %v1126 = vshrl.u32 %v1125, 7
        %v1127 = vsub.s32 %v1124, %v1126
        %v1128 = vrot.slane %v1112, %v1127
        %v1130 = vunpack.c.l.s4 1966171168
        %v1131 = vunpack.c.0.s8 %v1130
        %v1132 = vlaneseq
        %v1133 = vshrl.u32 %v1132, 7
        %v1134 = vsub.s32 %v1131, %v1133
        %v1135 = vrot.slane %v1119, %v1134
        %v1137 = vunpack.c.l.s4 1966171168
        %v1138 = vunpack.c.0.s8 %v1137
        %v1139 = vlaneseq
        %v1140 = vshrl.u32 %v1139, 7
        %v1141 = vsub.s32 %v1138, %v1140
        %v1142 = vrot.slane %v1120, %v1141
        %v1144 = vunpack.c.l.s4 1966171168
        %v1145 = vunpack.c.0.s8 %v1144
        %v1146 = vlaneseq
        %v1147 = vshrl.u32 %v1146, 7
        %v1148 = vsub.s32 %v1145, %v1147
        %v1149 = vrot.slane %v1121, %v1148
        %v1150 = vcombine.high %v1128, %v1128
        %v1151 = vcombine.high %v1135, %v1135
        %v1152 = vcombine.high %v1142, %v1142
        %v1153 = vcombine.high %v1149, %v1149
        %v1154 = vcombine.high %v352, %v352
        %v1156 = vunpack.c.l.s4 1966171168
        %v1157 = vunpack.c.0.s8 %v1156
        %v1158 = vlaneseq
        %v1159 = vshrl.u32 %v1158, 7
        %v1160 = vsub.s32 %v1157, %v1159
        %v1161 = vrot.slane %v352, %v1160
        %v1163 = vunpack.c.l.s4 1966171168
        %v1164 = vunpack.c.0.s8 %v1163
        %v1165 = vlaneseq
        %v1166 = vshrl.u32 %v1165, 7
        %v1167 = vsub.s32 %v1164, %v1166
        %v1168 = vrot.slane %v1154, %v1167
        %v1169 = vcombine.high %v1161, %v1161
        %v1170 = vcombine.high %v1168, %v1168
        %v1172 = vunpack.c.l.s4 1966171168
        %v1173 = vunpack.c.0.s8 %v1172
        %v1174 = vlaneseq
        %v1175 = vshrl.u32 %v1174, 7
        %v1176 = vsub.s32 %v1173, %v1175
        %v1177 = vrot.slane %v1161, %v1176
        %v1179 = vunpack.c.l.s4 1966171168
        %v1180 = vunpack.c.0.s8 %v1179
        %v1181 = vlaneseq
        %v1182 = vshrl.u32 %v1181, 7
        %v1183 = vsub.s32 %v1180, %v1182
        %v1184 = vrot.slane %v1168, %v1183
        %v1186 = vunpack.c.l.s4 1966171168
        %v1187 = vunpack.c.0.s8 %v1186
        %v1188 = vlaneseq
        %v1189 = vshrl.u32 %v1188, 7
        %v1190 = vsub.s32 %v1187, %v1189
        %v1191 = vrot.slane %v1169, %v1190
        %v1193 = vunpack.c.l.s4 1966171168
        %v1194 = vunpack.c.0.s8 %v1193
        %v1195 = vlaneseq
        %v1196 = vshrl.u32 %v1195, 7
        %v1197 = vsub.s32 %v1194, %v1196
        %v1198 = vrot.slane %v1170, %v1197
        %v1199 = vcombine.high %v1177, %v1177
        %v1200 = vcombine.high %v1184, %v1184
        %v1201 = vcombine.high %v1191, %v1191
        %v1202 = vcombine.high %v1198, %v1198
        %v1203 = vcombine.high %v353, %v353
        %v1205 = vunpack.c.l.s4 1966171168
        %v1206 = vunpack.c.0.s8 %v1205
        %v1207 = vlaneseq
        %v1208 = vshrl.u32 %v1207, 7
        %v1209 = vsub.s32 %v1206, %v1208
        %v1210 = vrot.slane %v353, %v1209
        %v1212 = vunpack.c.l.s4 1966171168
        %v1213 = vunpack.c.0.s8 %v1212
        %v1214 = vlaneseq
        %v1215 = vshrl.u32 %v1214, 7
        %v1216 = vsub.s32 %v1213, %v1215
        %v1217 = vrot.slane %v1203, %v1216
        %v1218 = vcombine.high %v1210, %v1210
        %v1219 = vcombine.high %v1217, %v1217
        %v1221 = vunpack.c.l.s4 1966171168
        %v1222 = vunpack.c.0.s8 %v1221
        %v1223 = vlaneseq
        %v1224 = vshrl.u32 %v1223, 7
        %v1225 = vsub.s32 %v1222, %v1224
        %v1226 = vrot.slane %v1210, %v1225
        %v1228 = vunpack.c.l.s4 1966171168
        %v1229 = vunpack.c.0.s8 %v1228
        %v1230 = vlaneseq
        %v1231 = vshrl.u32 %v1230, 7
        %v1232 = vsub.s32 %v1229, %v1231
        %v1233 = vrot.slane %v1217, %v1232
        %v1235 = vunpack.c.l.s4 1966171168
        %v1236 = vunpack.c.0.s8 %v1235
        %v1237 = vlaneseq
        %v1238 = vshrl.u32 %v1237, 7
        %v1239 = vsub.s32 %v1236, %v1238
        %v1240 = vrot.slane %v1218, %v1239
        %v1242 = vunpack.c.l.s4 1966171168
        %v1243 = vunpack.c.0.s8 %v1242
        %v1244 = vlaneseq
        %v1245 = vshrl.u32 %v1244, 7
        %v1246 = vsub.s32 %v1243, %v1245
        %v1247 = vrot.slane %v1219, %v1246
        %v1248 = vcombine.high %v1226, %v1226
        %v1249 = vcombine.high %v1233, %v1233
        %v1250 = vcombine.high %v1240, %v1240
        %v1251 = vcombine.high %v1247, %v1247
        %v1252 = vcombine.high %v354, %v354
        %v1254 = vunpack.c.l.s4 1966171168
        %v1255 = vunpack.c.0.s8 %v1254
        %v1256 = vlaneseq
        %v1257 = vshrl.u32 %v1256, 7
        %v1258 = vsub.s32 %v1255, %v1257
        %v1259 = vrot.slane %v354, %v1258
        %v1261 = vunpack.c.l.s4 1966171168
        %v1262 = vunpack.c.0.s8 %v1261
        %v1263 = vlaneseq
        %v1264 = vshrl.u32 %v1263, 7
        %v1265 = vsub.s32 %v1262, %v1264
        %v1266 = vrot.slane %v1252, %v1265
        %v1267 = vcombine.high %v1259, %v1259
        %v1268 = vcombine.high %v1266, %v1266
        %v1270 = vunpack.c.l.s4 1966171168
        %v1271 = vunpack.c.0.s8 %v1270
        %v1272 = vlaneseq
        %v1273 = vshrl.u32 %v1272, 7
        %v1274 = vsub.s32 %v1271, %v1273
        %v1275 = vrot.slane %v1259, %v1274
        %v1277 = vunpack.c.l.s4 1966171168
        %v1278 = vunpack.c.0.s8 %v1277
        %v1279 = vlaneseq
        %v1280 = vshrl.u32 %v1279, 7
        %v1281 = vsub.s32 %v1278, %v1280
        %v1282 = vrot.slane %v1266, %v1281
        %v1284 = vunpack.c.l.s4 1966171168
        %v1285 = vunpack.c.0.s8 %v1284
        %v1286 = vlaneseq
        %v1287 = vshrl.u32 %v1286, 7
        %v1288 = vsub.s32 %v1285, %v1287
        %v1289 = vrot.slane %v1267, %v1288
        %v1291 = vunpack.c.l.s4 1966171168
        %v1292 = vunpack.c.0.s8 %v1291
        %v1293 = vlaneseq
        %v1294 = vshrl.u32 %v1293, 7
        %v1295 = vsub.s32 %v1292, %v1294
        %v1296 = vrot.slane %v1268, %v1295
        %v1297 = vcombine.high %v1275, %v1275
        %v1298 = vcombine.high %v1282, %v1282
        %v1299 = vcombine.high %v1289, %v1289
        %v1300 = vcombine.high %v1296, %v1296
        %v1301 = vcombine.high %v355, %v355
        %v1303 = vunpack.c.l.s4 1966171168
        %v1304 = vunpack.c.0.s8 %v1303
        %v1305 = vlaneseq
        %v1306 = vshrl.u32 %v1305, 7
        %v1307 = vsub.s32 %v1304, %v1306
        %v1308 = vrot.slane %v355, %v1307
        %v1310 = vunpack.c.l.s4 1966171168
        %v1311 = vunpack.c.0.s8 %v1310
        %v1312 = vlaneseq
        %v1313 = vshrl.u32 %v1312, 7
        %v1314 = vsub.s32 %v1311, %v1313
        %v1315 = vrot.slane %v1301, %v1314
        %v1316 = vcombine.high %v1308, %v1308
        %v1317 = vcombine.high %v1315, %v1315
        %v1319 = vunpack.c.l.s4 1966171168
        %v1320 = vunpack.c.0.s8 %v1319
        %v1321 = vlaneseq
        %v1322 = vshrl.u32 %v1321, 7
        %v1323 = vsub.s32 %v1320, %v1322
        %v1324 = vrot.slane %v1308, %v1323
        %v1326 = vunpack.c.l.s4 1966171168
        %v1327 = vunpack.c.0.s8 %v1326
        %v1328 = vlaneseq
        %v1329 = vshrl.u32 %v1328, 7
        %v1330 = vsub.s32 %v1327, %v1329
        %v1331 = vrot.slane %v1315, %v1330
        %v1333 = vunpack.c.l.s4 1966171168
        %v1334 = vunpack.c.0.s8 %v1333
        %v1335 = vlaneseq
        %v1336 = vshrl.u32 %v1335, 7
        %v1337 = vsub.s32 %v1334, %v1336
        %v1338 = vrot.slane %v1316, %v1337
        %v1340 = vunpack.c.l.s4 1966171168
        %v1341 = vunpack.c.0.s8 %v1340
        %v1342 = vlaneseq
        %v1343 = vshrl.u32 %v1342, 7
        %v1344 = vsub.s32 %v1341, %v1343
        %v1345 = vrot.slane %v1317, %v1344
        %v1346 = vcombine.high %v1324, %v1324
        %v1347 = vcombine.high %v1331, %v1331
        %v1348 = vcombine.high %v1338, %v1338
        %v1349 = vcombine.high %v1345, %v1345
        %v1350 = vcombine.high %v356, %v356
        %v1352 = vunpack.c.l.s4 1966171168
        %v1353 = vunpack.c.0.s8 %v1352
        %v1354 = vlaneseq
        %v1355 = vshrl.u32 %v1354, 7
        %v1356 = vsub.s32 %v1353, %v1355
        %v1357 = vrot.slane %v356, %v1356
        %v1359 = vunpack.c.l.s4 1966171168
        %v1360 = vunpack.c.0.s8 %v1359
        %v1361 = vlaneseq
        %v1362 = vshrl.u32 %v1361, 7
        %v1363 = vsub.s32 %v1360, %v1362
        %v1364 = vrot.slane %v1350, %v1363
        %v1365 = vcombine.high %v1357, %v1357
        %v1366 = vcombine.high %v1364, %v1364
        %v1368 = vunpack.c.l.s4 1966171168
        %v1369 = vunpack.c.0.s8 %v1368
        %v1370 = vlaneseq
        %v1371 = vshrl.u32 %v1370, 7
        %v1372 = vsub.s32 %v1369, %v1371
        %v1373 = vrot.slane %v1357, %v1372
        %v1375 = vunpack.c.l.s4 1966171168
        %v1376 = vunpack.c.0.s8 %v1375
        %v1377 = vlaneseq
        %v1378 = vshrl.u32 %v1377, 7
        %v1379 = vsub.s32 %v1376, %v1378
        %v1380 = vrot.slane %v1364, %v1379
        %v1382 = vunpack.c.l.s4 1966171168
        %v1383 = vunpack.c.0.s8 %v1382
        %v1384 = vlaneseq
        %v1385 = vshrl.u32 %v1384, 7
        %v1386 = vsub.s32 %v1383, %v1385
        %v1387 = vrot.slane %v1365, %v1386
        %v1389 = vunpack.c.l.s4 1966171168
        %v1390 = vunpack.c.0.s8 %v1389
        %v1391 = vlaneseq
        %v1392 = vshrl.u32 %v1391, 7
        %v1393 = vsub.s32 %v1390, %v1392
        %v1394 = vrot.slane %v1366, %v1393
        %v1395 = vcombine.high %v1373, %v1373
        %v1396 = vcombine.high %v1380, %v1380
        %v1397 = vcombine.high %v1387, %v1387
        %v1398 = vcombine.high %v1394, %v1394
        %v1399 = vcombine.high %v357, %v357
        %v1401 = vunpack.c.l.s4 1966171168
        %v1402 = vunpack.c.0.s8 %v1401
        %v1403 = vlaneseq
        %v1404 = vshrl.u32 %v1403, 7
        %v1405 = vsub.s32 %v1402, %v1404
        %v1406 = vrot.slane %v357, %v1405
        %v1408 = vunpack.c.l.s4 1966171168
        %v1409 = vunpack.c.0.s8 %v1408
        %v1410 = vlaneseq
        %v1411 = vshrl.u32 %v1410, 7
        %v1412 = vsub.s32 %v1409, %v1411
        %v1413 = vrot.slane %v1399, %v1412
        %v1414 = vcombine.high %v1406, %v1406
        %v1416 = vunpack.c.l.s4 1966171168
        %v1417 = vunpack.c.0.s8 %v1416
        %v1418 = vlaneseq
        %v1419 = vshrl.u32 %v1418, 7
        %v1420 = vsub.s32 %v1417, %v1419
        %v1421 = vrot.slane %v1406, %v1420
        %v1423 = vunpack.c.l.s4 1966171168
        %v1424 = vunpack.c.0.s8 %v1423
        %v1425 = vlaneseq
        %v1426 = vshrl.u32 %v1425, 7
        %v1427 = vsub.s32 %v1424, %v1426
        %v1428 = vrot.slane %v1413, %v1427
        %v1430 = vunpack.c.l.s4 1966171168
        %v1431 = vunpack.c.0.s8 %v1430
        %v1432 = vlaneseq
        %v1433 = vshrl.u32 %v1432, 7
        %v1434 = vsub.s32 %v1431, %v1433
        %v1435 = vrot.slane %v1414, %v1434
        %v1436 = vcombine.high %v1421, %v1421
        %v1437 = vcombine.high %v1435, %v1435
        %v1438 = vld [vmem:[%s1] sm:$0xff]
        %v1439 = vld [vmem:[%s1 + $0x8] sm:$0xf]
        %v1440 = vld [vmem:[%s2] sm:$0x1]
        %v1442 = vlaneseq
        %v1443 = vshrl.u32 %v1442, 7
        %v1444 = vsub.s32 0, %v1443
        %v1445 = vrot.slane %v1440, %v1444
        %v1447 = vcombine.low %v403, %v417
        %v1448 = vcombine.low %v425, %v427
        %v1449 = vcombine.low %v410, %v424
        %v1450 = vcombine.low %v426, %v428
        %v1452 = vunpack.c.l.s4 1966171168
        %v1453 = vunpack.c.0.s8 %v1452
        %v1454 = vlaneseq
        %v1455 = vshrl.u32 %v1454, 7
        %v1456 = vsub.s32 %v1453, %v1455
        %v1457 = vrot.slane %v1447, %v1456
        %v1459 = vunpack.c.l.s4 1966171168
        %v1460 = vunpack.c.0.s8 %v1459
        %v1461 = vlaneseq
        %v1462 = vshrl.u32 %v1461, 7
        %v1463 = vsub.s32 %v1460, %v1462
        %v1464 = vrot.slane %v1448, %v1463
        %v1466 = vunpack.c.l.s4 1966171168
        %v1467 = vunpack.c.0.s8 %v1466
        %v1468 = vlaneseq
        %v1469 = vshrl.u32 %v1468, 7
        %v1470 = vsub.s32 %v1467, %v1469
        %v1471 = vrot.slane %v1449, %v1470
        %v1473 = vunpack.c.l.s4 1966171168
        %v1474 = vunpack.c.0.s8 %v1473
        %v1475 = vlaneseq
        %v1476 = vshrl.u32 %v1475, 7
        %v1477 = vsub.s32 %v1474, %v1476
        %v1478 = vrot.slane %v1450, %v1477
        %v1479 = vcombine.low %v1457, %v1464
        %v1480 = vcombine.low %v1471, %v1478
        %v1482 = vunpack.c.l.s4 1966171168
        %v1483 = vunpack.c.0.s8 %v1482
        %v1484 = vlaneseq
        %v1485 = vshrl.u32 %v1484, 7
        %v1486 = vsub.s32 %v1483, %v1485
        %v1487 = vrot.slane %v1479, %v1486
        %v1489 = vunpack.c.l.s4 1966171168
        %v1490 = vunpack.c.0.s8 %v1489
        %v1491 = vlaneseq
        %v1492 = vshrl.u32 %v1491, 7
        %v1493 = vsub.s32 %v1490, %v1492
        %v1494 = vrot.slane %v1480, %v1493
        %v1495 = vcombine.low %v1487, %v1494
        %v1496 = vcombine.low %v452, %v466
        %v1497 = vcombine.low %v474, %v476
        %v1498 = vcombine.low %v459, %v473
        %v1499 = vcombine.low %v475, %v477
        %v1501 = vunpack.c.l.s4 1966171168
        %v1502 = vunpack.c.0.s8 %v1501
        %v1503 = vlaneseq
        %v1504 = vshrl.u32 %v1503, 7
        %v1505 = vsub.s32 %v1502, %v1504
        %v1506 = vrot.slane %v1496, %v1505
        %v1508 = vunpack.c.l.s4 1966171168
        %v1509 = vunpack.c.0.s8 %v1508
        %v1510 = vlaneseq
        %v1511 = vshrl.u32 %v1510, 7
        %v1512 = vsub.s32 %v1509, %v1511
        %v1513 = vrot.slane %v1497, %v1512
        %v1515 = vunpack.c.l.s4 1966171168
        %v1516 = vunpack.c.0.s8 %v1515
        %v1517 = vlaneseq
        %v1518 = vshrl.u32 %v1517, 7
        %v1519 = vsub.s32 %v1516, %v1518
        %v1520 = vrot.slane %v1498, %v1519
        %v1522 = vunpack.c.l.s4 1966171168
        %v1523 = vunpack.c.0.s8 %v1522
        %v1524 = vlaneseq
        %v1525 = vshrl.u32 %v1524, 7
        %v1526 = vsub.s32 %v1523, %v1525
        %v1527 = vrot.slane %v1499, %v1526
        %v1528 = vcombine.low %v1506, %v1513
        %v1529 = vcombine.low %v1520, %v1527
        %v1531 = vunpack.c.l.s4 1966171168
        %v1532 = vunpack.c.0.s8 %v1531
        %v1533 = vlaneseq
        %v1534 = vshrl.u32 %v1533, 7
        %v1535 = vsub.s32 %v1532, %v1534
        %v1536 = vrot.slane %v1528, %v1535
        %v1538 = vunpack.c.l.s4 1966171168
        %v1539 = vunpack.c.0.s8 %v1538
        %v1540 = vlaneseq
        %v1541 = vshrl.u32 %v1540, 7
        %v1542 = vsub.s32 %v1539, %v1541
        %v1543 = vrot.slane %v1529, %v1542
        %v1544 = vcombine.low %v1536, %v1543
        %v1545 = vcombine.low %v501, %v515
        %v1546 = vcombine.low %v523, %v525
        %v1547 = vcombine.low %v508, %v522
        %v1548 = vcombine.low %v524, %v526
        %v1550 = vunpack.c.l.s4 1966171168
        %v1551 = vunpack.c.0.s8 %v1550
        %v1552 = vlaneseq
        %v1553 = vshrl.u32 %v1552, 7
        %v1554 = vsub.s32 %v1551, %v1553
        %v1555 = vrot.slane %v1545, %v1554
        %v1557 = vunpack.c.l.s4 1966171168
        %v1558 = vunpack.c.0.s8 %v1557
        %v1559 = vlaneseq
        %v1560 = vshrl.u32 %v1559, 7
        %v1561 = vsub.s32 %v1558, %v1560
        %v1562 = vrot.slane %v1546, %v1561
        %v1564 = vunpack.c.l.s4 1966171168
        %v1565 = vunpack.c.0.s8 %v1564
        %v1566 = vlaneseq
        %v1567 = vshrl.u32 %v1566, 7
        %v1568 = vsub.s32 %v1565, %v1567
        %v1569 = vrot.slane %v1547, %v1568
        %v1571 = vunpack.c.l.s4 1966171168
        %v1572 = vunpack.c.0.s8 %v1571
        %v1573 = vlaneseq
        %v1574 = vshrl.u32 %v1573, 7
        %v1575 = vsub.s32 %v1572, %v1574
        %v1576 = vrot.slane %v1548, %v1575
        %v1577 = vcombine.low %v1555, %v1562
        %v1578 = vcombine.low %v1569, %v1576
        %v1580 = vunpack.c.l.s4 1966171168
        %v1581 = vunpack.c.0.s8 %v1580
        %v1582 = vlaneseq
        %v1583 = vshrl.u32 %v1582, 7
        %v1584 = vsub.s32 %v1581, %v1583
        %v1585 = vrot.slane %v1577, %v1584
        %v1587 = vunpack.c.l.s4 1966171168
        %v1588 = vunpack.c.0.s8 %v1587
        %v1589 = vlaneseq
        %v1590 = vshrl.u32 %v1589, 7
        %v1591 = vsub.s32 %v1588, %v1590
        %v1592 = vrot.slane %v1578, %v1591
        %v1593 = vcombine.low %v1585, %v1592
        %v1594 = vcombine.low %v550, %v564
        %v1595 = vcombine.low %v572, %v574
        %v1596 = vcombine.low %v557, %v571
        %v1597 = vcombine.low %v573, %v575
        %v1599 = vunpack.c.l.s4 1966171168
        %v1600 = vunpack.c.0.s8 %v1599
        %v1601 = vlaneseq
        %v1602 = vshrl.u32 %v1601, 7
        %v1603 = vsub.s32 %v1600, %v1602
        %v1604 = vrot.slane %v1594, %v1603
        %v1606 = vunpack.c.l.s4 1966171168
        %v1607 = vunpack.c.0.s8 %v1606
        %v1608 = vlaneseq
        %v1609 = vshrl.u32 %v1608, 7
        %v1610 = vsub.s32 %v1607, %v1609
        %v1611 = vrot.slane %v1595, %v1610
        %v1613 = vunpack.c.l.s4 1966171168
        %v1614 = vunpack.c.0.s8 %v1613
        %v1615 = vlaneseq
        %v1616 = vshrl.u32 %v1615, 7
        %v1617 = vsub.s32 %v1614, %v1616
        %v1618 = vrot.slane %v1596, %v1617
        %v1620 = vunpack.c.l.s4 1966171168
        %v1621 = vunpack.c.0.s8 %v1620
        %v1622 = vlaneseq
        %v1623 = vshrl.u32 %v1622, 7
        %v1624 = vsub.s32 %v1621, %v1623
        %v1625 = vrot.slane %v1597, %v1624
        %v1626 = vcombine.low %v1604, %v1611
        %v1627 = vcombine.low %v1618, %v1625
        %v1629 = vunpack.c.l.s4 1966171168
        %v1630 = vunpack.c.0.s8 %v1629
        %v1631 = vlaneseq
        %v1632 = vshrl.u32 %v1631, 7
        %v1633 = vsub.s32 %v1630, %v1632
        %v1634 = vrot.slane %v1626, %v1633
        %v1636 = vunpack.c.l.s4 1966171168
        %v1637 = vunpack.c.0.s8 %v1636
        %v1638 = vlaneseq
        %v1639 = vshrl.u32 %v1638, 7
        %v1640 = vsub.s32 %v1637, %v1639
        %v1641 = vrot.slane %v1627, %v1640
        %v1642 = vcombine.low %v1634, %v1641
        %v1643 = vcombine.low %v599, %v613
        %v1644 = vcombine.low %v621, %v623
        %v1645 = vcombine.low %v606, %v620
        %v1646 = vcombine.low %v622, %v624
        %v1648 = vunpack.c.l.s4 1966171168
        %v1649 = vunpack.c.0.s8 %v1648
        %v1650 = vlaneseq
        %v1651 = vshrl.u32 %v1650, 7
        %v1652 = vsub.s32 %v1649, %v1651
        %v1653 = vrot.slane %v1643, %v1652
        %v1655 = vunpack.c.l.s4 1966171168
        %v1656 = vunpack.c.0.s8 %v1655
        %v1657 = vlaneseq
        %v1658 = vshrl.u32 %v1657, 7
        %v1659 = vsub.s32 %v1656, %v1658
        %v1660 = vrot.slane %v1644, %v1659
        %v1662 = vunpack.c.l.s4 1966171168
        %v1663 = vunpack.c.0.s8 %v1662
        %v1664 = vlaneseq
        %v1665 = vshrl.u32 %v1664, 7
        %v1666 = vsub.s32 %v1663, %v1665
        %v1667 = vrot.slane %v1645, %v1666
        %v1669 = vunpack.c.l.s4 1966171168
        %v1670 = vunpack.c.0.s8 %v1669
        %v1671 = vlaneseq
        %v1672 = vshrl.u32 %v1671, 7
        %v1673 = vsub.s32 %v1670, %v1672
        %v1674 = vrot.slane %v1646, %v1673
        %v1675 = vcombine.low %v1653, %v1660
        %v1676 = vcombine.low %v1667, %v1674
        %v1678 = vunpack.c.l.s4 1966171168
        %v1679 = vunpack.c.0.s8 %v1678
        %v1680 = vlaneseq
        %v1681 = vshrl.u32 %v1680, 7
        %v1682 = vsub.s32 %v1679, %v1681
        %v1683 = vrot.slane %v1675, %v1682
        %v1685 = vunpack.c.l.s4 1966171168
        %v1686 = vunpack.c.0.s8 %v1685
        %v1687 = vlaneseq
        %v1688 = vshrl.u32 %v1687, 7
        %v1689 = vsub.s32 %v1686, %v1688
        %v1690 = vrot.slane %v1676, %v1689
        %v1691 = vcombine.low %v1683, %v1690
        %v1692 = vcombine.low %v648, %v662
        %v1693 = vcombine.low %v670, %v672
        %v1694 = vcombine.low %v655, %v669
        %v1695 = vcombine.low %v671, %v673
        %v1697 = vunpack.c.l.s4 1966171168
        %v1698 = vunpack.c.0.s8 %v1697
        %v1699 = vlaneseq
        %v1700 = vshrl.u32 %v1699, 7
        %v1701 = vsub.s32 %v1698, %v1700
        %v1702 = vrot.slane %v1692, %v1701
        %v1704 = vunpack.c.l.s4 1966171168
        %v1705 = vunpack.c.0.s8 %v1704
        %v1706 = vlaneseq
        %v1707 = vshrl.u32 %v1706, 7
        %v1708 = vsub.s32 %v1705, %v1707
        %v1709 = vrot.slane %v1693, %v1708
        %v1711 = vunpack.c.l.s4 1966171168
        %v1712 = vunpack.c.0.s8 %v1711
        %v1713 = vlaneseq
        %v1714 = vshrl.u32 %v1713, 7
        %v1715 = vsub.s32 %v1712, %v1714
        %v1716 = vrot.slane %v1694, %v1715
        %v1718 = vunpack.c.l.s4 1966171168
        %v1719 = vunpack.c.0.s8 %v1718
        %v1720 = vlaneseq
        %v1721 = vshrl.u32 %v1720, 7
        %v1722 = vsub.s32 %v1719, %v1721
        %v1723 = vrot.slane %v1695, %v1722
        %v1724 = vcombine.low %v1702, %v1709
        %v1725 = vcombine.low %v1716, %v1723
        %v1727 = vunpack.c.l.s4 1966171168
        %v1728 = vunpack.c.0.s8 %v1727
        %v1729 = vlaneseq
        %v1730 = vshrl.u32 %v1729, 7
        %v1731 = vsub.s32 %v1728, %v1730
        %v1732 = vrot.slane %v1724, %v1731
        %v1734 = vunpack.c.l.s4 1966171168
        %v1735 = vunpack.c.0.s8 %v1734
        %v1736 = vlaneseq
        %v1737 = vshrl.u32 %v1736, 7
        %v1738 = vsub.s32 %v1735, %v1737
        %v1739 = vrot.slane %v1725, %v1738
        %v1740 = vcombine.low %v1732, %v1739
        %v1741 = vcombine.low %v697, %v711
        %v1742 = vcombine.low %v719, %v721
        %v1743 = vcombine.low %v704, %v718
        %v1744 = vcombine.low %v720, %v722
        %v1746 = vunpack.c.l.s4 1966171168
        %v1747 = vunpack.c.0.s8 %v1746
        %v1748 = vlaneseq
        %v1749 = vshrl.u32 %v1748, 7
        %v1750 = vsub.s32 %v1747, %v1749
        %v1751 = vrot.slane %v1741, %v1750
        %v1753 = vunpack.c.l.s4 1966171168
        %v1754 = vunpack.c.0.s8 %v1753
        %v1755 = vlaneseq
        %v1756 = vshrl.u32 %v1755, 7
        %v1757 = vsub.s32 %v1754, %v1756
        %v1758 = vrot.slane %v1742, %v1757
        %v1760 = vunpack.c.l.s4 1966171168
        %v1761 = vunpack.c.0.s8 %v1760
        %v1762 = vlaneseq
        %v1763 = vshrl.u32 %v1762, 7
        %v1764 = vsub.s32 %v1761, %v1763
        %v1765 = vrot.slane %v1743, %v1764
        %v1767 = vunpack.c.l.s4 1966171168
        %v1768 = vunpack.c.0.s8 %v1767
        %v1769 = vlaneseq
        %v1770 = vshrl.u32 %v1769, 7
        %v1771 = vsub.s32 %v1768, %v1770
        %v1772 = vrot.slane %v1744, %v1771
        %v1773 = vcombine.low %v1751, %v1758
        %v1774 = vcombine.low %v1765, %v1772
        %v1776 = vunpack.c.l.s4 1966171168
        %v1777 = vunpack.c.0.s8 %v1776
        %v1778 = vlaneseq
        %v1779 = vshrl.u32 %v1778, 7
        %v1780 = vsub.s32 %v1777, %v1779
        %v1781 = vrot.slane %v1773, %v1780
        %v1783 = vunpack.c.l.s4 1966171168
        %v1784 = vunpack.c.0.s8 %v1783
        %v1785 = vlaneseq
        %v1786 = vshrl.u32 %v1785, 7
        %v1787 = vsub.s32 %v1784, %v1786
        %v1788 = vrot.slane %v1774, %v1787
        %v1789 = vcombine.low %v1781, %v1788
        %v1790 = vcombine.low %v746, %v760
        %v1791 = vcombine.low %v768, %v770
        %v1792 = vcombine.low %v753, %v767
        %v1793 = vcombine.low %v769, %v771
        %v1795 = vunpack.c.l.s4 1966171168
        %v1796 = vunpack.c.0.s8 %v1795
        %v1797 = vlaneseq
        %v1798 = vshrl.u32 %v1797, 7
        %v1799 = vsub.s32 %v1796, %v1798
        %v1800 = vrot.slane %v1790, %v1799
        %v1802 = vunpack.c.l.s4 1966171168
        %v1803 = vunpack.c.0.s8 %v1802
        %v1804 = vlaneseq
        %v1805 = vshrl.u32 %v1804, 7
        %v1806 = vsub.s32 %v1803, %v1805
        %v1807 = vrot.slane %v1791, %v1806
        %v1809 = vunpack.c.l.s4 1966171168
        %v1810 = vunpack.c.0.s8 %v1809
        %v1811 = vlaneseq
        %v1812 = vshrl.u32 %v1811, 7
        %v1813 = vsub.s32 %v1810, %v1812
        %v1814 = vrot.slane %v1792, %v1813
        %v1816 = vunpack.c.l.s4 1966171168
        %v1817 = vunpack.c.0.s8 %v1816
        %v1818 = vlaneseq
        %v1819 = vshrl.u32 %v1818, 7
        %v1820 = vsub.s32 %v1817, %v1819
        %v1821 = vrot.slane %v1793, %v1820
        %v1822 = vcombine.low %v1800, %v1807
        %v1823 = vcombine.low %v1814, %v1821
        %v1825 = vunpack.c.l.s4 1966171168
        %v1826 = vunpack.c.0.s8 %v1825
        %v1827 = vlaneseq
        %v1828 = vshrl.u32 %v1827, 7
        %v1829 = vsub.s32 %v1826, %v1828
        %v1830 = vrot.slane %v1822, %v1829
        %v1832 = vunpack.c.l.s4 1966171168
        %v1833 = vunpack.c.0.s8 %v1832
        %v1834 = vlaneseq
        %v1835 = vshrl.u32 %v1834, 7
        %v1836 = vsub.s32 %v1833, %v1835
        %v1837 = vrot.slane %v1823, %v1836
        %v1838 = vcombine.low %v1830, %v1837
        %v1839 = vcombine.low %v795, %v809
        %v1840 = vcombine.low %v817, %v819
        %v1841 = vcombine.low %v802, %v816
        %v1842 = vcombine.low %v818, %v820
        %v1844 = vunpack.c.l.s4 1966171168
        %v1845 = vunpack.c.0.s8 %v1844
        %v1846 = vlaneseq
        %v1847 = vshrl.u32 %v1846, 7
        %v1848 = vsub.s32 %v1845, %v1847
        %v1849 = vrot.slane %v1839, %v1848
        %v1851 = vunpack.c.l.s4 1966171168
        %v1852 = vunpack.c.0.s8 %v1851
        %v1853 = vlaneseq
        %v1854 = vshrl.u32 %v1853, 7
        %v1855 = vsub.s32 %v1852, %v1854
        %v1856 = vrot.slane %v1840, %v1855
        %v1858 = vunpack.c.l.s4 1966171168
        %v1859 = vunpack.c.0.s8 %v1858
        %v1860 = vlaneseq
        %v1861 = vshrl.u32 %v1860, 7
        %v1862 = vsub.s32 %v1859, %v1861
        %v1863 = vrot.slane %v1841, %v1862
        %v1865 = vunpack.c.l.s4 1966171168
        %v1866 = vunpack.c.0.s8 %v1865
        %v1867 = vlaneseq
        %v1868 = vshrl.u32 %v1867, 7
        %v1869 = vsub.s32 %v1866, %v1868
        %v1870 = vrot.slane %v1842, %v1869
        %v1871 = vcombine.low %v1849, %v1856
        %v1872 = vcombine.low %v1863, %v1870
        %v1874 = vunpack.c.l.s4 1966171168
        %v1875 = vunpack.c.0.s8 %v1874
        %v1876 = vlaneseq
        %v1877 = vshrl.u32 %v1876, 7
        %v1878 = vsub.s32 %v1875, %v1877
        %v1879 = vrot.slane %v1871, %v1878
        %v1881 = vunpack.c.l.s4 1966171168
        %v1882 = vunpack.c.0.s8 %v1881
        %v1883 = vlaneseq
        %v1884 = vshrl.u32 %v1883, 7
        %v1885 = vsub.s32 %v1882, %v1884
        %v1886 = vrot.slane %v1872, %v1885
        %v1887 = vcombine.low %v1879, %v1886
        %v1888 = vcombine.low %v844, %v858
        %v1889 = vcombine.low %v866, %v868
        %v1890 = vcombine.low %v851, %v865
        %v1891 = vcombine.low %v867, %v869
        %v1893 = vunpack.c.l.s4 1966171168
        %v1894 = vunpack.c.0.s8 %v1893
        %v1895 = vlaneseq
        %v1896 = vshrl.u32 %v1895, 7
        %v1897 = vsub.s32 %v1894, %v1896
        %v1898 = vrot.slane %v1888, %v1897
        %v1900 = vunpack.c.l.s4 1966171168
        %v1901 = vunpack.c.0.s8 %v1900
        %v1902 = vlaneseq
        %v1903 = vshrl.u32 %v1902, 7
        %v1904 = vsub.s32 %v1901, %v1903
        %v1905 = vrot.slane %v1889, %v1904
        %v1907 = vunpack.c.l.s4 1966171168
        %v1908 = vunpack.c.0.s8 %v1907
        %v1909 = vlaneseq
        %v1910 = vshrl.u32 %v1909, 7
        %v1911 = vsub.s32 %v1908, %v1910
        %v1912 = vrot.slane %v1890, %v1911
        %v1914 = vunpack.c.l.s4 1966171168
        %v1915 = vunpack.c.0.s8 %v1914
        %v1916 = vlaneseq
        %v1917 = vshrl.u32 %v1916, 7
        %v1918 = vsub.s32 %v1915, %v1917
        %v1919 = vrot.slane %v1891, %v1918
        %v1920 = vcombine.low %v1898, %v1905
        %v1921 = vcombine.low %v1912, %v1919
        %v1923 = vunpack.c.l.s4 1966171168
        %v1924 = vunpack.c.0.s8 %v1923
        %v1925 = vlaneseq
        %v1926 = vshrl.u32 %v1925, 7
        %v1927 = vsub.s32 %v1924, %v1926
        %v1928 = vrot.slane %v1920, %v1927
        %v1930 = vunpack.c.l.s4 1966171168
        %v1931 = vunpack.c.0.s8 %v1930
        %v1932 = vlaneseq
        %v1933 = vshrl.u32 %v1932, 7
        %v1934 = vsub.s32 %v1931, %v1933
        %v1935 = vrot.slane %v1921, %v1934
        %v1936 = vcombine.low %v1928, %v1935
        %v1937 = vcombine.low %v892, %v906
        %v1938 = vcombine.low %v907, %v908
        %v1939 = vcombine.low %v899, %v932
        %v1940 = vcombine.low %v946, %v954
        %v1942 = vunpack.c.l.s4 1966171168
        %v1943 = vunpack.c.0.s8 %v1942
        %v1944 = vlaneseq
        %v1945 = vshrl.u32 %v1944, 7
        %v1946 = vsub.s32 %v1943, %v1945
        %v1947 = vrot.slane %v1937, %v1946
        %v1949 = vunpack.c.l.s4 1966171168
        %v1950 = vunpack.c.0.s8 %v1949
        %v1951 = vlaneseq
        %v1952 = vshrl.u32 %v1951, 7
        %v1953 = vsub.s32 %v1950, %v1952
        %v1954 = vrot.slane %v1938, %v1953
        %v1956 = vunpack.c.l.s4 1966171168
        %v1957 = vunpack.c.0.s8 %v1956
        %v1958 = vlaneseq
        %v1959 = vshrl.u32 %v1958, 7
        %v1960 = vsub.s32 %v1957, %v1959
        %v1961 = vrot.slane %v1939, %v1960
        %v1963 = vunpack.c.l.s4 1966171168
        %v1964 = vunpack.c.0.s8 %v1963
        %v1965 = vlaneseq
        %v1966 = vshrl.u32 %v1965, 7
        %v1967 = vsub.s32 %v1964, %v1966
        %v1968 = vrot.slane %v1940, %v1967
        %v1969 = vcombine.low %v1947, %v1954
        %v1970 = vcombine.low %v1961, %v1968
        %v1972 = vunpack.c.l.s4 1966171168
        %v1973 = vunpack.c.0.s8 %v1972
        %v1974 = vlaneseq
        %v1975 = vshrl.u32 %v1974, 7
        %v1976 = vsub.s32 %v1973, %v1975
        %v1977 = vrot.slane %v1969, %v1976
        %v1979 = vunpack.c.l.s4 1966171168
        %v1980 = vunpack.c.0.s8 %v1979
        %v1981 = vlaneseq
        %v1982 = vshrl.u32 %v1981, 7
        %v1983 = vsub.s32 %v1980, %v1982
        %v1984 = vrot.slane %v1970, %v1983
        %v1985 = vcombine.low %v1977, %v1984
        %v1986 = vcombine.low %v956, %v939
        %v1987 = vcombine.low %v953, %v955
        %v1988 = vcombine.low %v957, %v981
        %v1989 = vcombine.low %v995, %v1003
        %v1991 = vunpack.c.l.s4 1966171168
        %v1992 = vunpack.c.0.s8 %v1991
        %v1993 = vlaneseq
        %v1994 = vshrl.u32 %v1993, 7
        %v1995 = vsub.s32 %v1992, %v1994
        %v1996 = vrot.slane %v1986, %v1995
        %v1998 = vunpack.c.l.s4 1966171168
        %v1999 = vunpack.c.0.s8 %v1998
        %v2000 = vlaneseq
        %v2001 = vshrl.u32 %v2000, 7
        %v2002 = vsub.s32 %v1999, %v2001
        %v2003 = vrot.slane %v1987, %v2002
        %v2005 = vunpack.c.l.s4 1966171168
        %v2006 = vunpack.c.0.s8 %v2005
        %v2007 = vlaneseq
        %v2008 = vshrl.u32 %v2007, 7
        %v2009 = vsub.s32 %v2006, %v2008
        %v2010 = vrot.slane %v1988, %v2009
        %v2012 = vunpack.c.l.s4 1966171168
        %v2013 = vunpack.c.0.s8 %v2012
        %v2014 = vlaneseq
        %v2015 = vshrl.u32 %v2014, 7
        %v2016 = vsub.s32 %v2013, %v2015
        %v2017 = vrot.slane %v1989, %v2016
        %v2018 = vcombine.low %v1996, %v2003
        %v2019 = vcombine.low %v2010, %v2017
        %v2021 = vunpack.c.l.s4 1966171168
        %v2022 = vunpack.c.0.s8 %v2021
        %v2023 = vlaneseq
        %v2024 = vshrl.u32 %v2023, 7
        %v2025 = vsub.s32 %v2022, %v2024
        %v2026 = vrot.slane %v2018, %v2025
        %v2028 = vunpack.c.l.s4 1966171168
        %v2029 = vunpack.c.0.s8 %v2028
        %v2030 = vlaneseq
        %v2031 = vshrl.u32 %v2030, 7
        %v2032 = vsub.s32 %v2029, %v2031
        %v2033 = vrot.slane %v2019, %v2032
        %v2034 = vcombine.low %v2026, %v2033
        %v2035 = vcombine.low %v1005, %v988
        %v2036 = vcombine.low %v1002, %v1004
        %v2037 = vcombine.low %v1006, %v1030
        %v2038 = vcombine.low %v1044, %v1052
        %v2040 = vunpack.c.l.s4 1966171168
        %v2041 = vunpack.c.0.s8 %v2040
        %v2042 = vlaneseq
        %v2043 = vshrl.u32 %v2042, 7
        %v2044 = vsub.s32 %v2041, %v2043
        %v2045 = vrot.slane %v2035, %v2044
        %v2047 = vunpack.c.l.s4 1966171168
        %v2048 = vunpack.c.0.s8 %v2047
        %v2049 = vlaneseq
        %v2050 = vshrl.u32 %v2049, 7
        %v2051 = vsub.s32 %v2048, %v2050
        %v2052 = vrot.slane %v2036, %v2051
        %v2054 = vunpack.c.l.s4 1966171168
        %v2055 = vunpack.c.0.s8 %v2054
        %v2056 = vlaneseq
        %v2057 = vshrl.u32 %v2056, 7
        %v2058 = vsub.s32 %v2055, %v2057
        %v2059 = vrot.slane %v2037, %v2058
        %v2061 = vunpack.c.l.s4 1966171168
        %v2062 = vunpack.c.0.s8 %v2061
        %v2063 = vlaneseq
        %v2064 = vshrl.u32 %v2063, 7
        %v2065 = vsub.s32 %v2062, %v2064
        %v2066 = vrot.slane %v2038, %v2065
        %v2067 = vcombine.low %v2045, %v2052
        %v2068 = vcombine.low %v2059, %v2066
        %v2070 = vunpack.c.l.s4 1966171168
        %v2071 = vunpack.c.0.s8 %v2070
        %v2072 = vlaneseq
        %v2073 = vshrl.u32 %v2072, 7
        %v2074 = vsub.s32 %v2071, %v2073
        %v2075 = vrot.slane %v2067, %v2074
        %v2077 = vunpack.c.l.s4 1966171168
        %v2078 = vunpack.c.0.s8 %v2077
        %v2079 = vlaneseq
        %v2080 = vshrl.u32 %v2079, 7
        %v2081 = vsub.s32 %v2078, %v2080
        %v2082 = vrot.slane %v2068, %v2081
        %v2083 = vcombine.low %v2075, %v2082
        %v2084 = vcombine.low %v1054, %v1037
        %v2085 = vcombine.low %v1051, %v1053
        %v2086 = vcombine.low %v1055, %v1079
        %v2087 = vcombine.low %v1093, %v1101
        %v2089 = vunpack.c.l.s4 1966171168
        %v2090 = vunpack.c.0.s8 %v2089
        %v2091 = vlaneseq
        %v2092 = vshrl.u32 %v2091, 7
        %v2093 = vsub.s32 %v2090, %v2092
        %v2094 = vrot.slane %v2084, %v2093
        %v2096 = vunpack.c.l.s4 1966171168
        %v2097 = vunpack.c.0.s8 %v2096
        %v2098 = vlaneseq
        %v2099 = vshrl.u32 %v2098, 7
        %v2100 = vsub.s32 %v2097, %v2099
        %v2101 = vrot.slane %v2085, %v2100
        %v2103 = vunpack.c.l.s4 1966171168
        %v2104 = vunpack.c.0.s8 %v2103
        %v2105 = vlaneseq
        %v2106 = vshrl.u32 %v2105, 7
        %v2107 = vsub.s32 %v2104, %v2106
        %v2108 = vrot.slane %v2086, %v2107
        %v2110 = vunpack.c.l.s4 1966171168
        %v2111 = vunpack.c.0.s8 %v2110
        %v2112 = vlaneseq
        %v2113 = vshrl.u32 %v2112, 7
        %v2114 = vsub.s32 %v2111, %v2113
        %v2115 = vrot.slane %v2087, %v2114
        %v2116 = vcombine.low %v2094, %v2101
        %v2117 = vcombine.low %v2108, %v2115
        %v2119 = vunpack.c.l.s4 1966171168
        %v2120 = vunpack.c.0.s8 %v2119
        %v2121 = vlaneseq
        %v2122 = vshrl.u32 %v2121, 7
        %v2123 = vsub.s32 %v2120, %v2122
        %v2124 = vrot.slane %v2116, %v2123
        %v2126 = vunpack.c.l.s4 1966171168
        %v2127 = vunpack.c.0.s8 %v2126
        %v2128 = vlaneseq
        %v2129 = vshrl.u32 %v2128, 7
        %v2130 = vsub.s32 %v2127, %v2129
        %v2131 = vrot.slane %v2117, %v2130
        %v2132 = vcombine.low %v2124, %v2131
        %v2133 = vcombine.low %v1103, %v1086
        %v2134 = vcombine.low %v1100, %v1102
        %v2135 = vcombine.low %v1104, %v1128
        %v2136 = vcombine.low %v1142, %v1150
        %v2138 = vunpack.c.l.s4 1966171168
        %v2139 = vunpack.c.0.s8 %v2138
        %v2140 = vlaneseq
        %v2141 = vshrl.u32 %v2140, 7
        %v2142 = vsub.s32 %v2139, %v2141
        %v2143 = vrot.slane %v2133, %v2142
        %v2145 = vunpack.c.l.s4 1966171168
        %v2146 = vunpack.c.0.s8 %v2145
        %v2147 = vlaneseq
        %v2148 = vshrl.u32 %v2147, 7
        %v2149 = vsub.s32 %v2146, %v2148
        %v2150 = vrot.slane %v2134, %v2149
        %v2152 = vunpack.c.l.s4 1966171168
        %v2153 = vunpack.c.0.s8 %v2152
        %v2154 = vlaneseq
        %v2155 = vshrl.u32 %v2154, 7
        %v2156 = vsub.s32 %v2153, %v2155
        %v2157 = vrot.slane %v2135, %v2156
        %v2159 = vunpack.c.l.s4 1966171168
        %v2160 = vunpack.c.0.s8 %v2159
        %v2161 = vlaneseq
        %v2162 = vshrl.u32 %v2161, 7
        %v2163 = vsub.s32 %v2160, %v2162
        %v2164 = vrot.slane %v2136, %v2163
        %v2165 = vcombine.low %v2143, %v2150
        %v2166 = vcombine.low %v2157, %v2164
        %v2168 = vunpack.c.l.s4 1966171168
        %v2169 = vunpack.c.0.s8 %v2168
        %v2170 = vlaneseq
        %v2171 = vshrl.u32 %v2170, 7
        %v2172 = vsub.s32 %v2169, %v2171
        %v2173 = vrot.slane %v2165, %v2172
        %v2175 = vunpack.c.l.s4 1966171168
        %v2176 = vunpack.c.0.s8 %v2175
        %v2177 = vlaneseq
        %v2178 = vshrl.u32 %v2177, 7
        %v2179 = vsub.s32 %v2176, %v2178
        %v2180 = vrot.slane %v2166, %v2179
        %v2181 = vcombine.low %v2173, %v2180
        %v2182 = vcombine.low %v1152, %v1135
        %v2183 = vcombine.low %v1149, %v1151
        %v2184 = vcombine.low %v1153, %v1177
        %v2185 = vcombine.low %v1191, %v1199
        %v2187 = vunpack.c.l.s4 1966171168
        %v2188 = vunpack.c.0.s8 %v2187
        %v2189 = vlaneseq
        %v2190 = vshrl.u32 %v2189, 7
        %v2191 = vsub.s32 %v2188, %v2190
        %v2192 = vrot.slane %v2182, %v2191
        %v2194 = vunpack.c.l.s4 1966171168
        %v2195 = vunpack.c.0.s8 %v2194
        %v2196 = vlaneseq
        %v2197 = vshrl.u32 %v2196, 7
        %v2198 = vsub.s32 %v2195, %v2197
        %v2199 = vrot.slane %v2183, %v2198
        %v2201 = vunpack.c.l.s4 1966171168
        %v2202 = vunpack.c.0.s8 %v2201
        %v2203 = vlaneseq
        %v2204 = vshrl.u32 %v2203, 7
        %v2205 = vsub.s32 %v2202, %v2204
        %v2206 = vrot.slane %v2184, %v2205
        %v2208 = vunpack.c.l.s4 1966171168
        %v2209 = vunpack.c.0.s8 %v2208
        %v2210 = vlaneseq
        %v2211 = vshrl.u32 %v2210, 7
        %v2212 = vsub.s32 %v2209, %v2211
        %v2213 = vrot.slane %v2185, %v2212
        %v2214 = vcombine.low %v2192, %v2199
        %v2215 = vcombine.low %v2206, %v2213
        %v2217 = vunpack.c.l.s4 1966171168
        %v2218 = vunpack.c.0.s8 %v2217
        %v2219 = vlaneseq
        %v2220 = vshrl.u32 %v2219, 7
        %v2221 = vsub.s32 %v2218, %v2220
        %v2222 = vrot.slane %v2214, %v2221
        %v2224 = vunpack.c.l.s4 1966171168
        %v2225 = vunpack.c.0.s8 %v2224
        %v2226 = vlaneseq
        %v2227 = vshrl.u32 %v2226, 7
        %v2228 = vsub.s32 %v2225, %v2227
        %v2229 = vrot.slane %v2215, %v2228
        %v2230 = vcombine.low %v2222, %v2229
        %v2231 = vcombine.low %v1201, %v1184
        %v2232 = vcombine.low %v1198, %v1200
        %v2233 = vcombine.low %v1202, %v1226
        %v2234 = vcombine.low %v1240, %v1248
        %v2236 = vunpack.c.l.s4 1966171168
        %v2237 = vunpack.c.0.s8 %v2236
        %v2238 = vlaneseq
        %v2239 = vshrl.u32 %v2238, 7
        %v2240 = vsub.s32 %v2237, %v2239
        %v2241 = vrot.slane %v2231, %v2240
        %v2243 = vunpack.c.l.s4 1966171168
        %v2244 = vunpack.c.0.s8 %v2243
        %v2245 = vlaneseq
        %v2246 = vshrl.u32 %v2245, 7
        %v2247 = vsub.s32 %v2244, %v2246
        %v2248 = vrot.slane %v2232, %v2247
        %v2250 = vunpack.c.l.s4 1966171168
        %v2251 = vunpack.c.0.s8 %v2250
        %v2252 = vlaneseq
        %v2253 = vshrl.u32 %v2252, 7
        %v2254 = vsub.s32 %v2251, %v2253
        %v2255 = vrot.slane %v2233, %v2254
        %v2257 = vunpack.c.l.s4 1966171168
        %v2258 = vunpack.c.0.s8 %v2257
        %v2259 = vlaneseq
        %v2260 = vshrl.u32 %v2259, 7
        %v2261 = vsub.s32 %v2258, %v2260
        %v2262 = vrot.slane %v2234, %v2261
        %v2263 = vcombine.low %v2241, %v2248
        %v2264 = vcombine.low %v2255, %v2262
        %v2266 = vunpack.c.l.s4 1966171168
        %v2267 = vunpack.c.0.s8 %v2266
        %v2268 = vlaneseq
        %v2269 = vshrl.u32 %v2268, 7
        %v2270 = vsub.s32 %v2267, %v2269
        %v2271 = vrot.slane %v2263, %v2270
        %v2273 = vunpack.c.l.s4 1966171168
        %v2274 = vunpack.c.0.s8 %v2273
        %v2275 = vlaneseq
        %v2276 = vshrl.u32 %v2275, 7
        %v2277 = vsub.s32 %v2274, %v2276
        %v2278 = vrot.slane %v2264, %v2277
        %v2279 = vcombine.low %v2271, %v2278
        %v2280 = vcombine.low %v1250, %v1233
        %v2281 = vcombine.low %v1247, %v1249
        %v2282 = vcombine.low %v1251, %v1275
        %v2283 = vcombine.low %v1289, %v1297
        %v2285 = vunpack.c.l.s4 1966171168
        %v2286 = vunpack.c.0.s8 %v2285
        %v2287 = vlaneseq
        %v2288 = vshrl.u32 %v2287, 7
        %v2289 = vsub.s32 %v2286, %v2288
        %v2290 = vrot.slane %v2280, %v2289
        %v2292 = vunpack.c.l.s4 1966171168
        %v2293 = vunpack.c.0.s8 %v2292
        %v2294 = vlaneseq
        %v2295 = vshrl.u32 %v2294, 7
        %v2296 = vsub.s32 %v2293, %v2295
        %v2297 = vrot.slane %v2281, %v2296
        %v2299 = vunpack.c.l.s4 1966171168
        %v2300 = vunpack.c.0.s8 %v2299
        %v2301 = vlaneseq
        %v2302 = vshrl.u32 %v2301, 7
        %v2303 = vsub.s32 %v2300, %v2302
        %v2304 = vrot.slane %v2282, %v2303
        %v2306 = vunpack.c.l.s4 1966171168
        %v2307 = vunpack.c.0.s8 %v2306
        %v2308 = vlaneseq
        %v2309 = vshrl.u32 %v2308, 7
        %v2310 = vsub.s32 %v2307, %v2309
        %v2311 = vrot.slane %v2283, %v2310
        %v2312 = vcombine.low %v2290, %v2297
        %v2313 = vcombine.low %v2304, %v2311
        %v2315 = vunpack.c.l.s4 1966171168
        %v2316 = vunpack.c.0.s8 %v2315
        %v2317 = vlaneseq
        %v2318 = vshrl.u32 %v2317, 7
        %v2319 = vsub.s32 %v2316, %v2318
        %v2320 = vrot.slane %v2312, %v2319
        %v2322 = vunpack.c.l.s4 1966171168
        %v2323 = vunpack.c.0.s8 %v2322
        %v2324 = vlaneseq
        %v2325 = vshrl.u32 %v2324, 7
        %v2326 = vsub.s32 %v2323, %v2325
        %v2327 = vrot.slane %v2313, %v2326
        %v2328 = vcombine.low %v2320, %v2327
        %v2329 = vcombine.low %v1299, %v1282
        %v2330 = vcombine.low %v1296, %v1298
        %v2331 = vcombine.low %v1300, %v1324
        %v2332 = vcombine.low %v1338, %v1346
        %v2334 = vunpack.c.l.s4 1966171168
        %v2335 = vunpack.c.0.s8 %v2334
        %v2336 = vlaneseq
        %v2337 = vshrl.u32 %v2336, 7
        %v2338 = vsub.s32 %v2335, %v2337
        %v2339 = vrot.slane %v2329, %v2338
        %v2341 = vunpack.c.l.s4 1966171168
        %v2342 = vunpack.c.0.s8 %v2341
        %v2343 = vlaneseq
        %v2344 = vshrl.u32 %v2343, 7
        %v2345 = vsub.s32 %v2342, %v2344
        %v2346 = vrot.slane %v2330, %v2345
        %v2348 = vunpack.c.l.s4 1966171168
        %v2349 = vunpack.c.0.s8 %v2348
        %v2350 = vlaneseq
        %v2351 = vshrl.u32 %v2350, 7
        %v2352 = vsub.s32 %v2349, %v2351
        %v2353 = vrot.slane %v2331, %v2352
        %v2355 = vunpack.c.l.s4 1966171168
        %v2356 = vunpack.c.0.s8 %v2355
        %v2357 = vlaneseq
        %v2358 = vshrl.u32 %v2357, 7
        %v2359 = vsub.s32 %v2356, %v2358
        %v2360 = vrot.slane %v2332, %v2359
        %v2361 = vcombine.low %v2339, %v2346
        %v2362 = vcombine.low %v2353, %v2360
        %v2364 = vunpack.c.l.s4 1966171168
        %v2365 = vunpack.c.0.s8 %v2364
        %v2366 = vlaneseq
        %v2367 = vshrl.u32 %v2366, 7
        %v2368 = vsub.s32 %v2365, %v2367
        %v2369 = vrot.slane %v2361, %v2368
        %v2371 = vunpack.c.l.s4 1966171168
        %v2372 = vunpack.c.0.s8 %v2371
        %v2373 = vlaneseq
        %v2374 = vshrl.u32 %v2373, 7
        %v2375 = vsub.s32 %v2372, %v2374
        %v2376 = vrot.slane %v2362, %v2375
        %v2377 = vcombine.low %v2369, %v2376
        %v2378 = vcombine.low %v1348, %v1331
        %v2379 = vcombine.low %v1345, %v1347
        %v2380 = vcombine.low %v1349, %v1373
        %v2381 = vcombine.low %v1387, %v1395
        %v2383 = vunpack.c.l.s4 1966171168
        %v2384 = vunpack.c.0.s8 %v2383
        %v2385 = vlaneseq
        %v2386 = vshrl.u32 %v2385, 7
        %v2387 = vsub.s32 %v2384, %v2386
        %v2388 = vrot.slane %v2378, %v2387
        %v2390 = vunpack.c.l.s4 1966171168
        %v2391 = vunpack.c.0.s8 %v2390
        %v2392 = vlaneseq
        %v2393 = vshrl.u32 %v2392, 7
        %v2394 = vsub.s32 %v2391, %v2393
        %v2395 = vrot.slane %v2379, %v2394
        %v2397 = vunpack.c.l.s4 1966171168
        %v2398 = vunpack.c.0.s8 %v2397
        %v2399 = vlaneseq
        %v2400 = vshrl.u32 %v2399, 7
        %v2401 = vsub.s32 %v2398, %v2400
        %v2402 = vrot.slane %v2380, %v2401
        %v2404 = vunpack.c.l.s4 1966171168
        %v2405 = vunpack.c.0.s8 %v2404
        %v2406 = vlaneseq
        %v2407 = vshrl.u32 %v2406, 7
        %v2408 = vsub.s32 %v2405, %v2407
        %v2409 = vrot.slane %v2381, %v2408
        %v2410 = vcombine.low %v2388, %v2395
        %v2411 = vcombine.low %v2402, %v2409
        %v2413 = vunpack.c.l.s4 1966171168
        %v2414 = vunpack.c.0.s8 %v2413
        %v2415 = vlaneseq
        %v2416 = vshrl.u32 %v2415, 7
        %v2417 = vsub.s32 %v2414, %v2416
        %v2418 = vrot.slane %v2410, %v2417
        %v2420 = vunpack.c.l.s4 1966171168
        %v2421 = vunpack.c.0.s8 %v2420
        %v2422 = vlaneseq
        %v2423 = vshrl.u32 %v2422, 7
        %v2424 = vsub.s32 %v2421, %v2423
        %v2425 = vrot.slane %v2411, %v2424
        %v2426 = vcombine.low %v2418, %v2425
        %v2427 = vcombine.low %v1397, %v1380
        %v2428 = vcombine.low %v1394, %v1396
        %v2429 = vcombine.low %v1398, %v1421
        %v2430 = vcombine.low %v1435, %v1436
        %v2432 = vunpack.c.l.s4 1966171168
        %v2433 = vunpack.c.0.s8 %v2432
        %v2434 = vlaneseq
        %v2435 = vshrl.u32 %v2434, 7
        %v2436 = vsub.s32 %v2433, %v2435
        %v2437 = vrot.slane %v2427, %v2436
        %v2439 = vunpack.c.l.s4 1966171168
        %v2440 = vunpack.c.0.s8 %v2439
        %v2441 = vlaneseq
        %v2442 = vshrl.u32 %v2441, 7
        %v2443 = vsub.s32 %v2440, %v2442
        %v2444 = vrot.slane %v2428, %v2443
        %v2446 = vunpack.c.l.s4 1966171168
        %v2447 = vunpack.c.0.s8 %v2446
        %v2448 = vlaneseq
        %v2449 = vshrl.u32 %v2448, 7
        %v2450 = vsub.s32 %v2447, %v2449
        %v2451 = vrot.slane %v2429, %v2450
        %v2453 = vunpack.c.l.s4 1966171168
        %v2454 = vunpack.c.0.s8 %v2453
        %v2455 = vlaneseq
        %v2456 = vshrl.u32 %v2455, 7
        %v2457 = vsub.s32 %v2454, %v2456
        %v2458 = vrot.slane %v2430, %v2457
        %v2459 = vcombine.low %v2437, %v2444
        %v2460 = vcombine.low %v2451, %v2458
        %v2462 = vunpack.c.l.s4 1966171168
        %v2463 = vunpack.c.0.s8 %v2462
        %v2464 = vlaneseq
        %v2465 = vshrl.u32 %v2464, 7
        %v2466 = vsub.s32 %v2463, %v2465
        %v2467 = vrot.slane %v2459, %v2466
        %v2469 = vunpack.c.l.s4 1966171168
        %v2470 = vunpack.c.0.s8 %v2469
        %v2471 = vlaneseq
        %v2472 = vshrl.u32 %v2471, 7
        %v2473 = vsub.s32 %v2470, %v2472
        %v2474 = vrot.slane %v2460, %v2473
        %v2475 = vcombine.low %v2467, %v2474
        %v2476 = vcombine.low %v1437, %v1428
        %v2478 = vunpack.c.l.s4 1966171168
        %v2479 = vunpack.c.0.s8 %v2478
        %v2480 = vlaneseq
        %v2481 = vshrl.u32 %v2480, 7
        %v2482 = vsub.s32 %v2479, %v2481
        %v2483 = vrot.slane %v2476, %v2482
        %v2485 = vunpack.c.l.s4 1966171168
        %v2486 = vunpack.c.0.s8 %v2485
        %v2487 = vlaneseq
        %v2488 = vshrl.u32 %v2487, 7
        %v2489 = vsub.s32 %v2486, %v2488
        %v2490 = vrot.slane %v2483, %v2489
        %vm2491 = vcmask 97280
        %v2492 = vsel %vm2491, %v1495, 0
        %v2494 = vsel %vm2491, %v1544, 0
        %v2496 = vsel %vm2491, %v1593, 0
        %v2498 = vsel %vm2491, %v1642, 0
        %v2500 = vsel %vm2491, %v1691, 0
        %v2502 = vsel %vm2491, %v1740, 0
        %v2504 = vsel %vm2491, %v1789, 0
        %v2506 = vsel %vm2491, %v1838, 0
        %v2508 = vsel %vm2491, %v1887, 0
        %v2510 = vsel %vm2491, %v1936, 0
        %v2512 = vsel %vm2491, %v1985, 0
        %v2514 = vsel %vm2491, %v2034, 0
        %v2516 = vsel %vm2491, %v2083, 0
        %v2518 = vsel %vm2491, %v2132, 0
        %v2520 = vsel %vm2491, %v2181, 0
        %v2522 = vsel %vm2491, %v2230, 0
        %v2524 = vsel %vm2491, %v2279, 0
        %v2526 = vsel %vm2491, %v2328, 0
        %v2528 = vsel %vm2491, %v2377, 0
        %v2530 = vsel %vm2491, %v2426, 0
        %v2532 = vsel %vm2491, %v2475, 0
        %v2534 = vsel %vm2491, %v2490, 0
        %vm2536 = vcmask 1043456
        %v2538 = vsel %vm2536, %v1439, 0
        %2540 = vmatprep.subr.mxu0 0.0
        %2541 = vmatpush1.msra.mxu0 %v1438
        %2542 = vmatprep.subr.mxu0 0.0
        %2543 = vmatpush1.msra.mxu0 %v2538
        %2544 = vmatprep.subr.mxu0 0.0
        %2545 = vmatpush1.msra.mxu0 0.0
        %2546 = vmatprep.subr.mxu0 0.0
        %2547 = vmatpush1.msra.mxu0 0.0
        %2548 = vmatprep.subr.mxu0 0.0
        %2549 = vmatpush1.msra.mxu0 0.0
        %2550 = vmatprep.subr.mxu0 0.0
        %2551 = vmatpush1.msra.mxu0 0.0
        %2552 = vmatprep.subr.mxu0 0.0
        %2553 = vmatpush1.msra.mxu0 0.0
        %2554 = vmatprep.subr.mxu0 0.0
        %2555 = vmatpush1.msra.mxu0 0.0
        %2556 = vmatprep.subr.mxu0 0.0
        %2557 = vmatpush1.msra.mxu0 0.0
        %2558 = vmatprep.subr.mxu0 0.0
        %2559 = vmatpush1.msra.mxu0 0.0
        %2560 = vmatprep.subr.mxu0 0.0
        %2561 = vmatpush1.msra.mxu0 0.0
        %2562 = vmatprep.subr.mxu0 0.0
        %2563 = vmatpush1.msra.mxu0 0.0
        %2564 = vmatprep.subr.mxu0 0.0
        %2565 = vmatpush1.msra.mxu0 0.0
        %2566 = vmatprep.subr.mxu0 0.0
        %2567 = vmatpush1.msra.mxu0 0.0
        %2568 = vmatprep.subr.mxu0 0.0
        %2569 = vmatpush1.msra.mxu0 0.0
        %2570 = vmatprep.subr.mxu0 0.0
        %2571 = vmatpush1.msra.mxu0 0.0
        %2572 = vmatprep.subr.mxu0 0.0
        %2573 = vmatpush1.msra.mxu0 0.0
        %2574 = vmatprep.subr.mxu0 0.0
        %2575 = vmatpush1.msra.mxu0 0.0
        %2576 = vmatprep.subr.mxu0 0.0
        %2577 = vmatpush1.msra.mxu0 0.0
        %2578 = vmatprep.subr.mxu0 0.0
        %2579 = vmatpush1.msra.mxu0 0.0
        %2580 = vmatprep.subr.mxu0 0.0
        %2581 = vmatpush1.msra.mxu0 0.0
        %2582 = vmatprep.subr.mxu0 0.0
        %2583 = vmatpush1.msra.mxu0 0.0
        %2584 = vmatprep.subr.mxu0 0.0
        %2585 = vmatpush1.msra.mxu0 0.0
        %2586 = vmatprep.subr.mxu0 0.0
        %2587 = vmatpush1.msra.mxu0 0.0
        %2588 = vmatprep.subr.mxu0 0.0
        %2589 = vmatpush1.msra.mxu0 0.0
        %2590 = vmatprep.subr.mxu0 0.0
        %2591 = vmatpush1.msra.mxu0 0.0
        %2592 = vmatprep.subr.mxu0 0.0
        %2593 = vmatpush1.msra.mxu0 0.0
        %2594 = vmatprep.subr.mxu0 0.0
        %2595 = vmatpush1.msra.mxu0 0.0
        %2596 = vmatprep.subr.mxu0 0.0
        %2597 = vmatpush1.msra.mxu0 0.0
        %2598 = vmatprep.subr.mxu0 0.0
        %2599 = vmatpush1.msra.mxu0 0.0
        %2600 = vmatprep.subr.mxu0 0.0
        %2601 = vmatpush1.msra.mxu0 0.0
        %2602 = vmatprep.subr.mxu0 0.0
        %2603 = vmatpush1.msra.mxu0 0.0
        %2604 = vmatprep.mubr.f32.mxu0 0.0
        %2605 = vmatmul.mubr.f32.gmra.mrb[0].mxu0 %v2492
        %v2606 = vpop.f32.mrb[0].mxu0
        %v2607 = vadd.f32 %v1445, %v2606
        %v2608 = vpop.f32.mrb[0].mxu0
        %2609 = vmatprep.mubr.f32.mxu0 0.0
        %2610 = vmatmul.mubr.f32.gmra.mrb[0].mxu0 %v2494
        %v2611 = vpop.f32.mrb[0].mxu0
        %v2612 = vadd.f32 %v1445, %v2611
        %v2613 = vpop.f32.mrb[0].mxu0
        %2614 = vmatprep.mubr.f32.mxu0 0.0
        %2615 = vmatmul.mubr.f32.gmra.mrb[0].mxu0 %v2496
        %v2616 = vpop.f32.mrb[0].mxu0
        %v2617 = vadd.f32 %v1445, %v2616
        %v2618 = vpop.f32.mrb[0].mxu0
        %2619 = vmatprep.mubr.f32.mxu0 0.0
        %2620 = vmatmul.mubr.f32.gmra.mrb[0].mxu0 %v2498
        %v2621 = vpop.f32.mrb[0].mxu0
        %v2622 = vadd.f32 %v1445, %v2621
        %v2623 = vpop.f32.mrb[0].mxu0
        %2624 = vmatprep.mubr.f32.mxu0 0.0
        %2625 = vmatmul.mubr.f32.gmra.mrb[0].mxu0 %v2500
        %v2626 = vpop.f32.mrb[0].mxu0
        %v2627 = vadd.f32 %v1445, %v2626
        %v2628 = vpop.f32.mrb[0].mxu0
        %2629 = vmatprep.mubr.f32.mxu0 0.0
        %2630 = vmatmul.mubr.f32.gmra.mrb[0].mxu0 %v2502
        %v2631 = vpop.f32.mrb[0].mxu0
        %v2632 = vadd.f32 %v1445, %v2631
        %v2633 = vpop.f32.mrb[0].mxu0
        %2634 = vmatprep.mubr.f32.mxu0 0.0
        %2635 = vmatmul.mubr.f32.gmra.mrb[0].mxu0 %v2504
        %v2636 = vpop.f32.mrb[0].mxu0
        %v2637 = vadd.f32 %v1445, %v2636
        %v2638 = vpop.f32.mrb[0].mxu0
        %2639 = vmatprep.mubr.f32.mxu0 0.0
        %2640 = vmatmul.mubr.f32.gmra.mrb[0].mxu0 %v2506
        %v2641 = vpop.f32.mrb[0].mxu0
        %v2642 = vadd.f32 %v1445, %v2641
        %v2643 = vpop.f32.mrb[0].mxu0
        %2644 = vmatprep.mubr.f32.mxu0 0.0
        %2645 = vmatmul.mubr.f32.gmra.mrb[0].mxu0 %v2508
        %v2646 = vpop.f32.mrb[0].mxu0
        %v2647 = vadd.f32 %v1445, %v2646
        %v2648 = vpop.f32.mrb[0].mxu0
        %2649 = vmatprep.mubr.f32.mxu0 0.0
        %2650 = vmatmul.mubr.f32.gmra.mrb[0].mxu0 %v2510
        %v2651 = vpop.f32.mrb[0].mxu0
        %v2652 = vadd.f32 %v1445, %v2651
        %v2653 = vpop.f32.mrb[0].mxu0
        %2654 = vmatprep.mubr.f32.mxu0 0.0
        %2655 = vmatmul.mubr.f32.gmra.mrb[0].mxu0 %v2512
        %v2656 = vpop.f32.mrb[0].mxu0
        %v2657 = vadd.f32 %v1445, %v2656
        %v2658 = vpop.f32.mrb[0].mxu0
        %2659 = vmatprep.mubr.f32.mxu0 0.0
        %2660 = vmatmul.mubr.f32.gmra.mrb[0].mxu0 %v2514
        %v2661 = vpop.f32.mrb[0].mxu0
        %v2662 = vadd.f32 %v1445, %v2661
        %v2663 = vpop.f32.mrb[0].mxu0
        %2664 = vmatprep.mubr.f32.mxu0 0.0
        %2665 = vmatmul.mubr.f32.gmra.mrb[0].mxu0 %v2516
        %v2666 = vpop.f32.mrb[0].mxu0
        %v2667 = vadd.f32 %v1445, %v2666
        %v2668 = vpop.f32.mrb[0].mxu0
        %2669 = vmatprep.mubr.f32.mxu0 0.0
        %2670 = vmatmul.mubr.f32.gmra.mrb[0].mxu0 %v2518
        %v2671 = vpop.f32.mrb[0].mxu0
        %v2672 = vadd.f32 %v1445, %v2671
        %v2673 = vpop.f32.mrb[0].mxu0
        %2674 = vmatprep.mubr.f32.mxu0 0.0
        %2675 = vmatmul.mubr.f32.gmra.mrb[0].mxu0 %v2520
        %v2676 = vpop.f32.mrb[0].mxu0
        %v2677 = vadd.f32 %v1445, %v2676
        %v2678 = vpop.f32.mrb[0].mxu0
        %2679 = vmatprep.mubr.f32.mxu0 0.0
        %2680 = vmatmul.mubr.f32.gmra.mrb[0].mxu0 %v2522
        %v2681 = vpop.f32.mrb[0].mxu0
        %v2682 = vadd.f32 %v1445, %v2681
        %v2683 = vpop.f32.mrb[0].mxu0
        %2684 = vmatprep.mubr.f32.mxu0 0.0
        %2685 = vmatmul.mubr.f32.gmra.mrb[0].mxu0 %v2524
        %v2686 = vpop.f32.mrb[0].mxu0
        %v2687 = vadd.f32 %v1445, %v2686
        %v2688 = vpop.f32.mrb[0].mxu0
        %2689 = vmatprep.mubr.f32.mxu0 0.0
        %2690 = vmatmul.mubr.f32.gmra.mrb[0].mxu0 %v2526
        %v2691 = vpop.f32.mrb[0].mxu0
        %v2692 = vadd.f32 %v1445, %v2691
        %v2693 = vpop.f32.mrb[0].mxu0
        %2694 = vmatprep.mubr.f32.mxu0 0.0
        %2695 = vmatmul.mubr.f32.gmra.mrb[0].mxu0 %v2528
        %v2696 = vpop.f32.mrb[0].mxu0
        %v2697 = vadd.f32 %v1445, %v2696
        %v2698 = vpop.f32.mrb[0].mxu0
        %2699 = vmatprep.mubr.f32.mxu0 0.0
        %2700 = vmatmul.mubr.f32.gmra.mrb[0].mxu0 %v2530
        %v2701 = vpop.f32.mrb[0].mxu0
        %v2702 = vadd.f32 %v1445, %v2701
        %v2703 = vpop.f32.mrb[0].mxu0
        %2704 = vmatprep.mubr.f32.mxu0 0.0
        %2705 = vmatmul.mubr.f32.gmra.mrb[0].mxu0 %v2532
        %v2706 = vpop.f32.mrb[0].mxu0
        %v2707 = vadd.f32 %v1445, %v2706
        %v2708 = vpop.f32.mrb[0].mxu0
        %2709 = vmatprep.mubr.f32.mxu0 0.0
        %2710 = vmatmul.mubr.f32.gmra.mrb[0].mxu0 %v2534
        %v2711 = vpop.f32.mrb[0].mxu0
        %v2712 = vpop.f32.mrb[0].mxu0
        %2713 = vdwg.mxu0
        %v2714 = vmax.f32 %v2607, 0.0
        %v2715 = vmax.f32 %v2612, 0.0
        %v2716 = vmax.f32 %v2617, 0.0
        %v2717 = vmax.f32 %v2622, 0.0
        %v2718 = vmax.f32 %v2627, 0.0
        %v2719 = vmax.f32 %v2632, 0.0
        %v2720 = vmax.f32 %v2637, 0.0
        %v2721 = vmax.f32 %v2642, 0.0
        %v2722 = vmax.f32 %v2647, 0.0
        %v2723 = vmax.f32 %v2652, 0.0
        %v2724 = vmax.f32 %v2657, 0.0
        %v2725 = vmax.f32 %v2662, 0.0
        %v2726 = vmax.f32 %v2667, 0.0
        %v2727 = vmax.f32 %v2672, 0.0
        %v2728 = vmax.f32 %v2677, 0.0
        %v2729 = vmax.f32 %v2682, 0.0
        %v2730 = vmax.f32 %v2687, 0.0
        %v2731 = vmax.f32 %v2692, 0.0
        %v2732 = vmax.f32 %v2697, 0.0
        %v2733 = vmax.f32 %v2702, 0.0
        %v2734 = vmax.f32 %v2707, 0.0
        %v2756 = vcombine.high %v2714, %v2714
        %v2758 = vunpack.c.l.s4 1966171168
        %v2759 = vunpack.c.0.s8 %v2758
        %v2760 = vlaneseq
        %v2761 = vshrl.u32 %v2760, 7
        %v2762 = vsub.s32 %v2759, %v2761
        %v2763 = vrot.slane %v2714, %v2762
        %v2765 = vunpack.c.l.s4 1966171168
        %v2766 = vunpack.c.0.s8 %v2765
        %v2767 = vlaneseq
        %v2768 = vshrl.u32 %v2767, 7
        %v2769 = vsub.s32 %v2766, %v2768
        %v2770 = vrot.slane %v2756, %v2769
        %v2771 = vcombine.high %v2763, %v2763
        %v2772 = vcombine.high %v2770, %v2770
        %v2774 = vunpack.c.l.s4 1966171168
        %v2775 = vunpack.c.0.s8 %v2774
        %v2776 = vlaneseq
        %v2777 = vshrl.u32 %v2776, 7
        %v2778 = vsub.s32 %v2775, %v2777
        %v2779 = vrot.slane %v2763, %v2778
        %v2781 = vunpack.c.l.s4 1966171168
        %v2782 = vunpack.c.0.s8 %v2781
        %v2783 = vlaneseq
        %v2784 = vshrl.u32 %v2783, 7
        %v2785 = vsub.s32 %v2782, %v2784
        %v2786 = vrot.slane %v2770, %v2785
        %v2788 = vunpack.c.l.s4 1966171168
        %v2789 = vunpack.c.0.s8 %v2788
        %v2790 = vlaneseq
        %v2791 = vshrl.u32 %v2790, 7
        %v2792 = vsub.s32 %v2789, %v2791
        %v2793 = vrot.slane %v2771, %v2792
        %v2795 = vunpack.c.l.s4 1966171168
        %v2796 = vunpack.c.0.s8 %v2795
        %v2797 = vlaneseq
        %v2798 = vshrl.u32 %v2797, 7
        %v2799 = vsub.s32 %v2796, %v2798
        %v2800 = vrot.slane %v2772, %v2799
        %v2801 = vcombine.high %v2779, %v2779
        %v2802 = vcombine.high %v2786, %v2786
        %v2803 = vcombine.high %v2715, %v2715
        %v2805 = vunpack.c.l.s4 1966171168
        %v2806 = vunpack.c.0.s8 %v2805
        %v2807 = vlaneseq
        %v2808 = vshrl.u32 %v2807, 7
        %v2809 = vsub.s32 %v2806, %v2808
        %v2810 = vrot.slane %v2715, %v2809
        %v2812 = vunpack.c.l.s4 1966171168
        %v2813 = vunpack.c.0.s8 %v2812
        %v2814 = vlaneseq
        %v2815 = vshrl.u32 %v2814, 7
        %v2816 = vsub.s32 %v2813, %v2815
        %v2817 = vrot.slane %v2803, %v2816
        %v2818 = vcombine.high %v2810, %v2810
        %v2819 = vcombine.high %v2817, %v2817
        %v2821 = vunpack.c.l.s4 1966171168
        %v2822 = vunpack.c.0.s8 %v2821
        %v2823 = vlaneseq
        %v2824 = vshrl.u32 %v2823, 7
        %v2825 = vsub.s32 %v2822, %v2824
        %v2826 = vrot.slane %v2810, %v2825
        %v2828 = vunpack.c.l.s4 1966171168
        %v2829 = vunpack.c.0.s8 %v2828
        %v2830 = vlaneseq
        %v2831 = vshrl.u32 %v2830, 7
        %v2832 = vsub.s32 %v2829, %v2831
        %v2833 = vrot.slane %v2817, %v2832
        %v2835 = vunpack.c.l.s4 1966171168
        %v2836 = vunpack.c.0.s8 %v2835
        %v2837 = vlaneseq
        %v2838 = vshrl.u32 %v2837, 7
        %v2839 = vsub.s32 %v2836, %v2838
        %v2840 = vrot.slane %v2818, %v2839
        %v2842 = vunpack.c.l.s4 1966171168
        %v2843 = vunpack.c.0.s8 %v2842
        %v2844 = vlaneseq
        %v2845 = vshrl.u32 %v2844, 7
        %v2846 = vsub.s32 %v2843, %v2845
        %v2847 = vrot.slane %v2819, %v2846
        %v2848 = vcombine.high %v2826, %v2826
        %v2849 = vcombine.high %v2833, %v2833
        %v2850 = vcombine.high %v2716, %v2716
        %v2852 = vunpack.c.l.s4 1966171168
        %v2853 = vunpack.c.0.s8 %v2852
        %v2854 = vlaneseq
        %v2855 = vshrl.u32 %v2854, 7
        %v2856 = vsub.s32 %v2853, %v2855
        %v2857 = vrot.slane %v2716, %v2856
        %v2859 = vunpack.c.l.s4 1966171168
        %v2860 = vunpack.c.0.s8 %v2859
        %v2861 = vlaneseq
        %v2862 = vshrl.u32 %v2861, 7
        %v2863 = vsub.s32 %v2860, %v2862
        %v2864 = vrot.slane %v2850, %v2863
        %v2865 = vcombine.high %v2857, %v2857
        %v2866 = vcombine.high %v2864, %v2864
        %v2868 = vunpack.c.l.s4 1966171168
        %v2869 = vunpack.c.0.s8 %v2868
        %v2870 = vlaneseq
        %v2871 = vshrl.u32 %v2870, 7
        %v2872 = vsub.s32 %v2869, %v2871
        %v2873 = vrot.slane %v2857, %v2872
        %v2875 = vunpack.c.l.s4 1966171168
        %v2876 = vunpack.c.0.s8 %v2875
        %v2877 = vlaneseq
        %v2878 = vshrl.u32 %v2877, 7
        %v2879 = vsub.s32 %v2876, %v2878
        %v2880 = vrot.slane %v2864, %v2879
        %v2882 = vunpack.c.l.s4 1966171168
        %v2883 = vunpack.c.0.s8 %v2882
        %v2884 = vlaneseq
        %v2885 = vshrl.u32 %v2884, 7
        %v2886 = vsub.s32 %v2883, %v2885
        %v2887 = vrot.slane %v2865, %v2886
        %v2889 = vunpack.c.l.s4 1966171168
        %v2890 = vunpack.c.0.s8 %v2889
        %v2891 = vlaneseq
        %v2892 = vshrl.u32 %v2891, 7
        %v2893 = vsub.s32 %v2890, %v2892
        %v2894 = vrot.slane %v2866, %v2893
        %v2895 = vcombine.high %v2873, %v2873
        %v2896 = vcombine.high %v2880, %v2880
        %v2897 = vcombine.high %v2717, %v2717
        %v2899 = vunpack.c.l.s4 1966171168
        %v2900 = vunpack.c.0.s8 %v2899
        %v2901 = vlaneseq
        %v2902 = vshrl.u32 %v2901, 7
        %v2903 = vsub.s32 %v2900, %v2902
        %v2904 = vrot.slane %v2717, %v2903
        %v2906 = vunpack.c.l.s4 1966171168
        %v2907 = vunpack.c.0.s8 %v2906
        %v2908 = vlaneseq
        %v2909 = vshrl.u32 %v2908, 7
        %v2910 = vsub.s32 %v2907, %v2909
        %v2911 = vrot.slane %v2897, %v2910
        %v2912 = vcombine.high %v2904, %v2904
        %v2913 = vcombine.high %v2911, %v2911
        %v2915 = vunpack.c.l.s4 1966171168
        %v2916 = vunpack.c.0.s8 %v2915
        %v2917 = vlaneseq
        %v2918 = vshrl.u32 %v2917, 7
        %v2919 = vsub.s32 %v2916, %v2918
        %v2920 = vrot.slane %v2904, %v2919
        %v2922 = vunpack.c.l.s4 1966171168
        %v2923 = vunpack.c.0.s8 %v2922
        %v2924 = vlaneseq
        %v2925 = vshrl.u32 %v2924, 7
        %v2926 = vsub.s32 %v2923, %v2925
        %v2927 = vrot.slane %v2911, %v2926
        %v2929 = vunpack.c.l.s4 1966171168
        %v2930 = vunpack.c.0.s8 %v2929
        %v2931 = vlaneseq
        %v2932 = vshrl.u32 %v2931, 7
        %v2933 = vsub.s32 %v2930, %v2932
        %v2934 = vrot.slane %v2912, %v2933
        %v2936 = vunpack.c.l.s4 1966171168
        %v2937 = vunpack.c.0.s8 %v2936
        %v2938 = vlaneseq
        %v2939 = vshrl.u32 %v2938, 7
        %v2940 = vsub.s32 %v2937, %v2939
        %v2941 = vrot.slane %v2913, %v2940
        %v2942 = vcombine.high %v2920, %v2920
        %v2943 = vcombine.high %v2927, %v2927
        %v2944 = vcombine.high %v2718, %v2718
        %v2946 = vunpack.c.l.s4 1966171168
        %v2947 = vunpack.c.0.s8 %v2946
        %v2948 = vlaneseq
        %v2949 = vshrl.u32 %v2948, 7
        %v2950 = vsub.s32 %v2947, %v2949
        %v2951 = vrot.slane %v2718, %v2950
        %v2953 = vunpack.c.l.s4 1966171168
        %v2954 = vunpack.c.0.s8 %v2953
        %v2955 = vlaneseq
        %v2956 = vshrl.u32 %v2955, 7
        %v2957 = vsub.s32 %v2954, %v2956
        %v2958 = vrot.slane %v2944, %v2957
        %v2959 = vcombine.high %v2951, %v2951
        %v2960 = vcombine.high %v2958, %v2958
        %v2962 = vunpack.c.l.s4 1966171168
        %v2963 = vunpack.c.0.s8 %v2962
        %v2964 = vlaneseq
        %v2965 = vshrl.u32 %v2964, 7
        %v2966 = vsub.s32 %v2963, %v2965
        %v2967 = vrot.slane %v2951, %v2966
        %v2969 = vunpack.c.l.s4 1966171168
        %v2970 = vunpack.c.0.s8 %v2969
        %v2971 = vlaneseq
        %v2972 = vshrl.u32 %v2971, 7
        %v2973 = vsub.s32 %v2970, %v2972
        %v2974 = vrot.slane %v2958, %v2973
        %v2976 = vunpack.c.l.s4 1966171168
        %v2977 = vunpack.c.0.s8 %v2976
        %v2978 = vlaneseq
        %v2979 = vshrl.u32 %v2978, 7
        %v2980 = vsub.s32 %v2977, %v2979
        %v2981 = vrot.slane %v2959, %v2980
        %v2983 = vunpack.c.l.s4 1966171168
        %v2984 = vunpack.c.0.s8 %v2983
        %v2985 = vlaneseq
        %v2986 = vshrl.u32 %v2985, 7
        %v2987 = vsub.s32 %v2984, %v2986
        %v2988 = vrot.slane %v2960, %v2987
        %v2989 = vcombine.high %v2967, %v2967
        %v2990 = vcombine.high %v2974, %v2974
        %v2991 = vcombine.high %v2719, %v2719
        %v2993 = vunpack.c.l.s4 1966171168
        %v2994 = vunpack.c.0.s8 %v2993
        %v2995 = vlaneseq
        %v2996 = vshrl.u32 %v2995, 7
        %v2997 = vsub.s32 %v2994, %v2996
        %v2998 = vrot.slane %v2719, %v2997
        %v3000 = vunpack.c.l.s4 1966171168
        %v3001 = vunpack.c.0.s8 %v3000
        %v3002 = vlaneseq
        %v3003 = vshrl.u32 %v3002, 7
        %v3004 = vsub.s32 %v3001, %v3003
        %v3005 = vrot.slane %v2991, %v3004
        %v3006 = vcombine.high %v2998, %v2998
        %v3007 = vcombine.high %v3005, %v3005
        %v3009 = vunpack.c.l.s4 1966171168
        %v3010 = vunpack.c.0.s8 %v3009
        %v3011 = vlaneseq
        %v3012 = vshrl.u32 %v3011, 7
        %v3013 = vsub.s32 %v3010, %v3012
        %v3014 = vrot.slane %v2998, %v3013
        %v3016 = vunpack.c.l.s4 1966171168
        %v3017 = vunpack.c.0.s8 %v3016
        %v3018 = vlaneseq
        %v3019 = vshrl.u32 %v3018, 7
        %v3020 = vsub.s32 %v3017, %v3019
        %v3021 = vrot.slane %v3005, %v3020
        %v3023 = vunpack.c.l.s4 1966171168
        %v3024 = vunpack.c.0.s8 %v3023
        %v3025 = vlaneseq
        %v3026 = vshrl.u32 %v3025, 7
        %v3027 = vsub.s32 %v3024, %v3026
        %v3028 = vrot.slane %v3006, %v3027
        %v3030 = vunpack.c.l.s4 1966171168
        %v3031 = vunpack.c.0.s8 %v3030
        %v3032 = vlaneseq
        %v3033 = vshrl.u32 %v3032, 7
        %v3034 = vsub.s32 %v3031, %v3033
        %v3035 = vrot.slane %v3007, %v3034
        %v3036 = vcombine.high %v3014, %v3014
        %v3037 = vcombine.high %v3021, %v3021
        %v3038 = vcombine.high %v2720, %v2720
        %v3040 = vunpack.c.l.s4 1966171168
        %v3041 = vunpack.c.0.s8 %v3040
        %v3042 = vlaneseq
        %v3043 = vshrl.u32 %v3042, 7
        %v3044 = vsub.s32 %v3041, %v3043
        %v3045 = vrot.slane %v2720, %v3044
        %v3047 = vunpack.c.l.s4 1966171168
        %v3048 = vunpack.c.0.s8 %v3047
        %v3049 = vlaneseq
        %v3050 = vshrl.u32 %v3049, 7
        %v3051 = vsub.s32 %v3048, %v3050
        %v3052 = vrot.slane %v3038, %v3051
        %v3053 = vcombine.high %v3045, %v3045
        %v3054 = vcombine.high %v3052, %v3052
        %v3056 = vunpack.c.l.s4 1966171168
        %v3057 = vunpack.c.0.s8 %v3056
        %v3058 = vlaneseq
        %v3059 = vshrl.u32 %v3058, 7
        %v3060 = vsub.s32 %v3057, %v3059
        %v3061 = vrot.slane %v3045, %v3060
        %v3063 = vunpack.c.l.s4 1966171168
        %v3064 = vunpack.c.0.s8 %v3063
        %v3065 = vlaneseq
        %v3066 = vshrl.u32 %v3065, 7
        %v3067 = vsub.s32 %v3064, %v3066
        %v3068 = vrot.slane %v3052, %v3067
        %v3070 = vunpack.c.l.s4 1966171168
        %v3071 = vunpack.c.0.s8 %v3070
        %v3072 = vlaneseq
        %v3073 = vshrl.u32 %v3072, 7
        %v3074 = vsub.s32 %v3071, %v3073
        %v3075 = vrot.slane %v3053, %v3074
        %v3077 = vunpack.c.l.s4 1966171168
        %v3078 = vunpack.c.0.s8 %v3077
        %v3079 = vlaneseq
        %v3080 = vshrl.u32 %v3079, 7
        %v3081 = vsub.s32 %v3078, %v3080
        %v3082 = vrot.slane %v3054, %v3081
        %v3083 = vcombine.high %v3061, %v3061
        %v3084 = vcombine.high %v3068, %v3068
        %v3085 = vcombine.high %v2721, %v2721
        %v3087 = vunpack.c.l.s4 1966171168
        %v3088 = vunpack.c.0.s8 %v3087
        %v3089 = vlaneseq
        %v3090 = vshrl.u32 %v3089, 7
        %v3091 = vsub.s32 %v3088, %v3090
        %v3092 = vrot.slane %v2721, %v3091
        %v3094 = vunpack.c.l.s4 1966171168
        %v3095 = vunpack.c.0.s8 %v3094
        %v3096 = vlaneseq
        %v3097 = vshrl.u32 %v3096, 7
        %v3098 = vsub.s32 %v3095, %v3097
        %v3099 = vrot.slane %v3085, %v3098
        %v3100 = vcombine.high %v3092, %v3092
        %v3101 = vcombine.high %v3099, %v3099
        %v3103 = vunpack.c.l.s4 1966171168
        %v3104 = vunpack.c.0.s8 %v3103
        %v3105 = vlaneseq
        %v3106 = vshrl.u32 %v3105, 7
        %v3107 = vsub.s32 %v3104, %v3106
        %v3108 = vrot.slane %v3092, %v3107
        %v3110 = vunpack.c.l.s4 1966171168
        %v3111 = vunpack.c.0.s8 %v3110
        %v3112 = vlaneseq
        %v3113 = vshrl.u32 %v3112, 7
        %v3114 = vsub.s32 %v3111, %v3113
        %v3115 = vrot.slane %v3099, %v3114
        %v3117 = vunpack.c.l.s4 1966171168
        %v3118 = vunpack.c.0.s8 %v3117
        %v3119 = vlaneseq
        %v3120 = vshrl.u32 %v3119, 7
        %v3121 = vsub.s32 %v3118, %v3120
        %v3122 = vrot.slane %v3100, %v3121
        %v3124 = vunpack.c.l.s4 1966171168
        %v3125 = vunpack.c.0.s8 %v3124
        %v3126 = vlaneseq
        %v3127 = vshrl.u32 %v3126, 7
        %v3128 = vsub.s32 %v3125, %v3127
        %v3129 = vrot.slane %v3101, %v3128
        %v3130 = vcombine.high %v3108, %v3108
        %v3131 = vcombine.high %v3115, %v3115
        %v3132 = vcombine.high %v2722, %v2722
        %v3134 = vunpack.c.l.s4 1966171168
        %v3135 = vunpack.c.0.s8 %v3134
        %v3136 = vlaneseq
        %v3137 = vshrl.u32 %v3136, 7
        %v3138 = vsub.s32 %v3135, %v3137
        %v3139 = vrot.slane %v2722, %v3138
        %v3141 = vunpack.c.l.s4 1966171168
        %v3142 = vunpack.c.0.s8 %v3141
        %v3143 = vlaneseq
        %v3144 = vshrl.u32 %v3143, 7
        %v3145 = vsub.s32 %v3142, %v3144
        %v3146 = vrot.slane %v3132, %v3145
        %v3147 = vcombine.high %v3139, %v3139
        %v3148 = vcombine.high %v3146, %v3146
        %v3150 = vunpack.c.l.s4 1966171168
        %v3151 = vunpack.c.0.s8 %v3150
        %v3152 = vlaneseq
        %v3153 = vshrl.u32 %v3152, 7
        %v3154 = vsub.s32 %v3151, %v3153
        %v3155 = vrot.slane %v3139, %v3154
        %v3157 = vunpack.c.l.s4 1966171168
        %v3158 = vunpack.c.0.s8 %v3157
        %v3159 = vlaneseq
        %v3160 = vshrl.u32 %v3159, 7
        %v3161 = vsub.s32 %v3158, %v3160
        %v3162 = vrot.slane %v3146, %v3161
        %v3164 = vunpack.c.l.s4 1966171168
        %v3165 = vunpack.c.0.s8 %v3164
        %v3166 = vlaneseq
        %v3167 = vshrl.u32 %v3166, 7
        %v3168 = vsub.s32 %v3165, %v3167
        %v3169 = vrot.slane %v3147, %v3168
        %v3171 = vunpack.c.l.s4 1966171168
        %v3172 = vunpack.c.0.s8 %v3171
        %v3173 = vlaneseq
        %v3174 = vshrl.u32 %v3173, 7
        %v3175 = vsub.s32 %v3172, %v3174
        %v3176 = vrot.slane %v3148, %v3175
        %v3177 = vcombine.high %v3155, %v3155
        %v3178 = vcombine.high %v3162, %v3162
        %v3179 = vcombine.high %v2723, %v2723
        %v3181 = vunpack.c.l.s4 1966171168
        %v3182 = vunpack.c.0.s8 %v3181
        %v3183 = vlaneseq
        %v3184 = vshrl.u32 %v3183, 7
        %v3185 = vsub.s32 %v3182, %v3184
        %v3186 = vrot.slane %v2723, %v3185
        %v3188 = vunpack.c.l.s4 1966171168
        %v3189 = vunpack.c.0.s8 %v3188
        %v3190 = vlaneseq
        %v3191 = vshrl.u32 %v3190, 7
        %v3192 = vsub.s32 %v3189, %v3191
        %v3193 = vrot.slane %v3179, %v3192
        %v3194 = vcombine.high %v3186, %v3186
        %v3195 = vcombine.high %v3193, %v3193
        %v3197 = vunpack.c.l.s4 1966171168
        %v3198 = vunpack.c.0.s8 %v3197
        %v3199 = vlaneseq
        %v3200 = vshrl.u32 %v3199, 7
        %v3201 = vsub.s32 %v3198, %v3200
        %v3202 = vrot.slane %v3186, %v3201
        %v3204 = vunpack.c.l.s4 1966171168
        %v3205 = vunpack.c.0.s8 %v3204
        %v3206 = vlaneseq
        %v3207 = vshrl.u32 %v3206, 7
        %v3208 = vsub.s32 %v3205, %v3207
        %v3209 = vrot.slane %v3193, %v3208
        %v3211 = vunpack.c.l.s4 1966171168
        %v3212 = vunpack.c.0.s8 %v3211
        %v3213 = vlaneseq
        %v3214 = vshrl.u32 %v3213, 7
        %v3215 = vsub.s32 %v3212, %v3214
        %v3216 = vrot.slane %v3194, %v3215
        %v3218 = vunpack.c.l.s4 1966171168
        %v3219 = vunpack.c.0.s8 %v3218
        %v3220 = vlaneseq
        %v3221 = vshrl.u32 %v3220, 7
        %v3222 = vsub.s32 %v3219, %v3221
        %v3223 = vrot.slane %v3195, %v3222
        %v3224 = vcombine.high %v3202, %v3202
        %v3225 = vcombine.high %v3209, %v3209
        %v3226 = vcombine.high %v2724, %v2724
        %v3228 = vunpack.c.l.s4 1966171168
        %v3229 = vunpack.c.0.s8 %v3228
        %v3230 = vlaneseq
        %v3231 = vshrl.u32 %v3230, 7
        %v3232 = vsub.s32 %v3229, %v3231
        %v3233 = vrot.slane %v2724, %v3232
        %v3235 = vunpack.c.l.s4 1966171168
        %v3236 = vunpack.c.0.s8 %v3235
        %v3237 = vlaneseq
        %v3238 = vshrl.u32 %v3237, 7
        %v3239 = vsub.s32 %v3236, %v3238
        %v3240 = vrot.slane %v3226, %v3239
        %v3241 = vcombine.high %v3233, %v3233
        %v3242 = vcombine.high %v3240, %v3240
        %v3244 = vunpack.c.l.s4 1966171168
        %v3245 = vunpack.c.0.s8 %v3244
        %v3246 = vlaneseq
        %v3247 = vshrl.u32 %v3246, 7
        %v3248 = vsub.s32 %v3245, %v3247
        %v3249 = vrot.slane %v3233, %v3248
        %v3251 = vunpack.c.l.s4 1966171168
        %v3252 = vunpack.c.0.s8 %v3251
        %v3253 = vlaneseq
        %v3254 = vshrl.u32 %v3253, 7
        %v3255 = vsub.s32 %v3252, %v3254
        %v3256 = vrot.slane %v3240, %v3255
        %v3258 = vunpack.c.l.s4 1966171168
        %v3259 = vunpack.c.0.s8 %v3258
        %v3260 = vlaneseq
        %v3261 = vshrl.u32 %v3260, 7
        %v3262 = vsub.s32 %v3259, %v3261
        %v3263 = vrot.slane %v3241, %v3262
        %v3265 = vunpack.c.l.s4 1966171168
        %v3266 = vunpack.c.0.s8 %v3265
        %v3267 = vlaneseq
        %v3268 = vshrl.u32 %v3267, 7
        %v3269 = vsub.s32 %v3266, %v3268
        %v3270 = vrot.slane %v3242, %v3269
        %v3271 = vcombine.high %v3249, %v3249
        %v3272 = vcombine.high %v3256, %v3256
        %v3273 = vcombine.high %v3270, %v3270
        %v3274 = vcombine.high %v2725, %v2725
        %v3276 = vunpack.c.l.s4 1966171168
        %v3277 = vunpack.c.0.s8 %v3276
        %v3278 = vlaneseq
        %v3279 = vshrl.u32 %v3278, 7
        %v3280 = vsub.s32 %v3277, %v3279
        %v3281 = vrot.slane %v2725, %v3280
        %v3283 = vunpack.c.l.s4 1966171168
        %v3284 = vunpack.c.0.s8 %v3283
        %v3285 = vlaneseq
        %v3286 = vshrl.u32 %v3285, 7
        %v3287 = vsub.s32 %v3284, %v3286
        %v3288 = vrot.slane %v3274, %v3287
        %v3289 = vcombine.high %v3281, %v3281
        %v3290 = vcombine.high %v3288, %v3288
        %v3292 = vunpack.c.l.s4 1966171168
        %v3293 = vunpack.c.0.s8 %v3292
        %v3294 = vlaneseq
        %v3295 = vshrl.u32 %v3294, 7
        %v3296 = vsub.s32 %v3293, %v3295
        %v3297 = vrot.slane %v3281, %v3296
        %v3299 = vunpack.c.l.s4 1966171168
        %v3300 = vunpack.c.0.s8 %v3299
        %v3301 = vlaneseq
        %v3302 = vshrl.u32 %v3301, 7
        %v3303 = vsub.s32 %v3300, %v3302
        %v3304 = vrot.slane %v3288, %v3303
        %v3306 = vunpack.c.l.s4 1966171168
        %v3307 = vunpack.c.0.s8 %v3306
        %v3308 = vlaneseq
        %v3309 = vshrl.u32 %v3308, 7
        %v3310 = vsub.s32 %v3307, %v3309
        %v3311 = vrot.slane %v3289, %v3310
        %v3313 = vunpack.c.l.s4 1966171168
        %v3314 = vunpack.c.0.s8 %v3313
        %v3315 = vlaneseq
        %v3316 = vshrl.u32 %v3315, 7
        %v3317 = vsub.s32 %v3314, %v3316
        %v3318 = vrot.slane %v3290, %v3317
        %v3319 = vcombine.high %v3297, %v3297
        %v3320 = vcombine.high %v3304, %v3304
        %v3321 = vcombine.high %v3311, %v3311
        %v3322 = vcombine.high %v3318, %v3318
        %v3323 = vcombine.high %v2726, %v2726
        %v3325 = vunpack.c.l.s4 1966171168
        %v3326 = vunpack.c.0.s8 %v3325
        %v3327 = vlaneseq
        %v3328 = vshrl.u32 %v3327, 7
        %v3329 = vsub.s32 %v3326, %v3328
        %v3330 = vrot.slane %v2726, %v3329
        %v3332 = vunpack.c.l.s4 1966171168
        %v3333 = vunpack.c.0.s8 %v3332
        %v3334 = vlaneseq
        %v3335 = vshrl.u32 %v3334, 7
        %v3336 = vsub.s32 %v3333, %v3335
        %v3337 = vrot.slane %v3323, %v3336
        %v3338 = vcombine.high %v3330, %v3330
        %v3339 = vcombine.high %v3337, %v3337
        %v3341 = vunpack.c.l.s4 1966171168
        %v3342 = vunpack.c.0.s8 %v3341
        %v3343 = vlaneseq
        %v3344 = vshrl.u32 %v3343, 7
        %v3345 = vsub.s32 %v3342, %v3344
        %v3346 = vrot.slane %v3330, %v3345
        %v3348 = vunpack.c.l.s4 1966171168
        %v3349 = vunpack.c.0.s8 %v3348
        %v3350 = vlaneseq
        %v3351 = vshrl.u32 %v3350, 7
        %v3352 = vsub.s32 %v3349, %v3351
        %v3353 = vrot.slane %v3337, %v3352
        %v3355 = vunpack.c.l.s4 1966171168
        %v3356 = vunpack.c.0.s8 %v3355
        %v3357 = vlaneseq
        %v3358 = vshrl.u32 %v3357, 7
        %v3359 = vsub.s32 %v3356, %v3358
        %v3360 = vrot.slane %v3338, %v3359
        %v3362 = vunpack.c.l.s4 1966171168
        %v3363 = vunpack.c.0.s8 %v3362
        %v3364 = vlaneseq
        %v3365 = vshrl.u32 %v3364, 7
        %v3366 = vsub.s32 %v3363, %v3365
        %v3367 = vrot.slane %v3339, %v3366
        %v3368 = vcombine.high %v3346, %v3346
        %v3369 = vcombine.high %v3353, %v3353
        %v3370 = vcombine.high %v3360, %v3360
        %v3371 = vcombine.high %v3367, %v3367
        %v3372 = vcombine.high %v2727, %v2727
        %v3374 = vunpack.c.l.s4 1966171168
        %v3375 = vunpack.c.0.s8 %v3374
        %v3376 = vlaneseq
        %v3377 = vshrl.u32 %v3376, 7
        %v3378 = vsub.s32 %v3375, %v3377
        %v3379 = vrot.slane %v2727, %v3378
        %v3381 = vunpack.c.l.s4 1966171168
        %v3382 = vunpack.c.0.s8 %v3381
        %v3383 = vlaneseq
        %v3384 = vshrl.u32 %v3383, 7
        %v3385 = vsub.s32 %v3382, %v3384
        %v3386 = vrot.slane %v3372, %v3385
        %v3387 = vcombine.high %v3379, %v3379
        %v3388 = vcombine.high %v3386, %v3386
        %v3390 = vunpack.c.l.s4 1966171168
        %v3391 = vunpack.c.0.s8 %v3390
        %v3392 = vlaneseq
        %v3393 = vshrl.u32 %v3392, 7
        %v3394 = vsub.s32 %v3391, %v3393
        %v3395 = vrot.slane %v3379, %v3394
        %v3397 = vunpack.c.l.s4 1966171168
        %v3398 = vunpack.c.0.s8 %v3397
        %v3399 = vlaneseq
        %v3400 = vshrl.u32 %v3399, 7
        %v3401 = vsub.s32 %v3398, %v3400
        %v3402 = vrot.slane %v3386, %v3401
        %v3404 = vunpack.c.l.s4 1966171168
        %v3405 = vunpack.c.0.s8 %v3404
        %v3406 = vlaneseq
        %v3407 = vshrl.u32 %v3406, 7
        %v3408 = vsub.s32 %v3405, %v3407
        %v3409 = vrot.slane %v3387, %v3408
        %v3411 = vunpack.c.l.s4 1966171168
        %v3412 = vunpack.c.0.s8 %v3411
        %v3413 = vlaneseq
        %v3414 = vshrl.u32 %v3413, 7
        %v3415 = vsub.s32 %v3412, %v3414
        %v3416 = vrot.slane %v3388, %v3415
        %v3417 = vcombine.high %v3395, %v3395
        %v3418 = vcombine.high %v3402, %v3402
        %v3419 = vcombine.high %v3409, %v3409
        %v3420 = vcombine.high %v3416, %v3416
        %v3421 = vcombine.high %v2728, %v2728
        %v3423 = vunpack.c.l.s4 1966171168
        %v3424 = vunpack.c.0.s8 %v3423
        %v3425 = vlaneseq
        %v3426 = vshrl.u32 %v3425, 7
        %v3427 = vsub.s32 %v3424, %v3426
        %v3428 = vrot.slane %v2728, %v3427
        %v3430 = vunpack.c.l.s4 1966171168
        %v3431 = vunpack.c.0.s8 %v3430
        %v3432 = vlaneseq
        %v3433 = vshrl.u32 %v3432, 7
        %v3434 = vsub.s32 %v3431, %v3433
        %v3435 = vrot.slane %v3421, %v3434
        %v3436 = vcombine.high %v3428, %v3428
        %v3437 = vcombine.high %v3435, %v3435
        %v3439 = vunpack.c.l.s4 1966171168
        %v3440 = vunpack.c.0.s8 %v3439
        %v3441 = vlaneseq
        %v3442 = vshrl.u32 %v3441, 7
        %v3443 = vsub.s32 %v3440, %v3442
        %v3444 = vrot.slane %v3428, %v3443
        %v3446 = vunpack.c.l.s4 1966171168
        %v3447 = vunpack.c.0.s8 %v3446
        %v3448 = vlaneseq
        %v3449 = vshrl.u32 %v3448, 7
        %v3450 = vsub.s32 %v3447, %v3449
        %v3451 = vrot.slane %v3435, %v3450
        %v3453 = vunpack.c.l.s4 1966171168
        %v3454 = vunpack.c.0.s8 %v3453
        %v3455 = vlaneseq
        %v3456 = vshrl.u32 %v3455, 7
        %v3457 = vsub.s32 %v3454, %v3456
        %v3458 = vrot.slane %v3436, %v3457
        %v3460 = vunpack.c.l.s4 1966171168
        %v3461 = vunpack.c.0.s8 %v3460
        %v3462 = vlaneseq
        %v3463 = vshrl.u32 %v3462, 7
        %v3464 = vsub.s32 %v3461, %v3463
        %v3465 = vrot.slane %v3437, %v3464
        %v3466 = vcombine.high %v3444, %v3444
        %v3467 = vcombine.high %v3451, %v3451
        %v3468 = vcombine.high %v3458, %v3458
        %v3469 = vcombine.high %v3465, %v3465
        %v3470 = vcombine.high %v2729, %v2729
        %v3472 = vunpack.c.l.s4 1966171168
        %v3473 = vunpack.c.0.s8 %v3472
        %v3474 = vlaneseq
        %v3475 = vshrl.u32 %v3474, 7
        %v3476 = vsub.s32 %v3473, %v3475
        %v3477 = vrot.slane %v2729, %v3476
        %v3479 = vunpack.c.l.s4 1966171168
        %v3480 = vunpack.c.0.s8 %v3479
        %v3481 = vlaneseq
        %v3482 = vshrl.u32 %v3481, 7
        %v3483 = vsub.s32 %v3480, %v3482
        %v3484 = vrot.slane %v3470, %v3483
        %v3485 = vcombine.high %v3477, %v3477
        %v3486 = vcombine.high %v3484, %v3484
        %v3488 = vunpack.c.l.s4 1966171168
        %v3489 = vunpack.c.0.s8 %v3488
        %v3490 = vlaneseq
        %v3491 = vshrl.u32 %v3490, 7
        %v3492 = vsub.s32 %v3489, %v3491
        %v3493 = vrot.slane %v3477, %v3492
        %v3495 = vunpack.c.l.s4 1966171168
        %v3496 = vunpack.c.0.s8 %v3495
        %v3497 = vlaneseq
        %v3498 = vshrl.u32 %v3497, 7
        %v3499 = vsub.s32 %v3496, %v3498
        %v3500 = vrot.slane %v3484, %v3499
        %v3502 = vunpack.c.l.s4 1966171168
        %v3503 = vunpack.c.0.s8 %v3502
        %v3504 = vlaneseq
        %v3505 = vshrl.u32 %v3504, 7
        %v3506 = vsub.s32 %v3503, %v3505
        %v3507 = vrot.slane %v3485, %v3506
        %v3509 = vunpack.c.l.s4 1966171168
        %v3510 = vunpack.c.0.s8 %v3509
        %v3511 = vlaneseq
        %v3512 = vshrl.u32 %v3511, 7
        %v3513 = vsub.s32 %v3510, %v3512
        %v3514 = vrot.slane %v3486, %v3513
        %v3515 = vcombine.high %v3493, %v3493
        %v3516 = vcombine.high %v3500, %v3500
        %v3517 = vcombine.high %v3507, %v3507
        %v3518 = vcombine.high %v3514, %v3514
        %v3519 = vcombine.high %v2730, %v2730
        %v3521 = vunpack.c.l.s4 1966171168
        %v3522 = vunpack.c.0.s8 %v3521
        %v3523 = vlaneseq
        %v3524 = vshrl.u32 %v3523, 7
        %v3525 = vsub.s32 %v3522, %v3524
        %v3526 = vrot.slane %v2730, %v3525
        %v3528 = vunpack.c.l.s4 1966171168
        %v3529 = vunpack.c.0.s8 %v3528
        %v3530 = vlaneseq
        %v3531 = vshrl.u32 %v3530, 7
        %v3532 = vsub.s32 %v3529, %v3531
        %v3533 = vrot.slane %v3519, %v3532
        %v3534 = vcombine.high %v3526, %v3526
        %v3535 = vcombine.high %v3533, %v3533
        %v3537 = vunpack.c.l.s4 1966171168
        %v3538 = vunpack.c.0.s8 %v3537
        %v3539 = vlaneseq
        %v3540 = vshrl.u32 %v3539, 7
        %v3541 = vsub.s32 %v3538, %v3540
        %v3542 = vrot.slane %v3526, %v3541
        %v3544 = vunpack.c.l.s4 1966171168
        %v3545 = vunpack.c.0.s8 %v3544
        %v3546 = vlaneseq
        %v3547 = vshrl.u32 %v3546, 7
        %v3548 = vsub.s32 %v3545, %v3547
        %v3549 = vrot.slane %v3533, %v3548
        %v3551 = vunpack.c.l.s4 1966171168
        %v3552 = vunpack.c.0.s8 %v3551
        %v3553 = vlaneseq
        %v3554 = vshrl.u32 %v3553, 7
        %v3555 = vsub.s32 %v3552, %v3554
        %v3556 = vrot.slane %v3534, %v3555
        %v3558 = vunpack.c.l.s4 1966171168
        %v3559 = vunpack.c.0.s8 %v3558
        %v3560 = vlaneseq
        %v3561 = vshrl.u32 %v3560, 7
        %v3562 = vsub.s32 %v3559, %v3561
        %v3563 = vrot.slane %v3535, %v3562
        %v3564 = vcombine.high %v3542, %v3542
        %v3565 = vcombine.high %v3549, %v3549
        %v3566 = vcombine.high %v3556, %v3556
        %v3567 = vcombine.high %v3563, %v3563
        %v3568 = vcombine.high %v2731, %v2731
        %v3570 = vunpack.c.l.s4 1966171168
        %v3571 = vunpack.c.0.s8 %v3570
        %v3572 = vlaneseq
        %v3573 = vshrl.u32 %v3572, 7
        %v3574 = vsub.s32 %v3571, %v3573
        %v3575 = vrot.slane %v2731, %v3574
        %v3577 = vunpack.c.l.s4 1966171168
        %v3578 = vunpack.c.0.s8 %v3577
        %v3579 = vlaneseq
        %v3580 = vshrl.u32 %v3579, 7
        %v3581 = vsub.s32 %v3578, %v3580
        %v3582 = vrot.slane %v3568, %v3581
        %v3583 = vcombine.high %v3575, %v3575
        %v3584 = vcombine.high %v3582, %v3582
        %v3586 = vunpack.c.l.s4 1966171168
        %v3587 = vunpack.c.0.s8 %v3586
        %v3588 = vlaneseq
        %v3589 = vshrl.u32 %v3588, 7
        %v3590 = vsub.s32 %v3587, %v3589
        %v3591 = vrot.slane %v3575, %v3590
        %v3593 = vunpack.c.l.s4 1966171168
        %v3594 = vunpack.c.0.s8 %v3593
        %v3595 = vlaneseq
        %v3596 = vshrl.u32 %v3595, 7
        %v3597 = vsub.s32 %v3594, %v3596
        %v3598 = vrot.slane %v3582, %v3597
        %v3600 = vunpack.c.l.s4 1966171168
        %v3601 = vunpack.c.0.s8 %v3600
        %v3602 = vlaneseq
        %v3603 = vshrl.u32 %v3602, 7
        %v3604 = vsub.s32 %v3601, %v3603
        %v3605 = vrot.slane %v3583, %v3604
        %v3607 = vunpack.c.l.s4 1966171168
        %v3608 = vunpack.c.0.s8 %v3607
        %v3609 = vlaneseq
        %v3610 = vshrl.u32 %v3609, 7
        %v3611 = vsub.s32 %v3608, %v3610
        %v3612 = vrot.slane %v3584, %v3611
        %v3613 = vcombine.high %v3591, %v3591
        %v3614 = vcombine.high %v3598, %v3598
        %v3615 = vcombine.high %v3605, %v3605
        %v3616 = vcombine.high %v3612, %v3612
        %v3617 = vcombine.high %v2732, %v2732
        %v3619 = vunpack.c.l.s4 1966171168
        %v3620 = vunpack.c.0.s8 %v3619
        %v3621 = vlaneseq
        %v3622 = vshrl.u32 %v3621, 7
        %v3623 = vsub.s32 %v3620, %v3622
        %v3624 = vrot.slane %v2732, %v3623
        %v3626 = vunpack.c.l.s4 1966171168
        %v3627 = vunpack.c.0.s8 %v3626
        %v3628 = vlaneseq
        %v3629 = vshrl.u32 %v3628, 7
        %v3630 = vsub.s32 %v3627, %v3629
        %v3631 = vrot.slane %v3617, %v3630
        %v3632 = vcombine.high %v3624, %v3624
        %v3633 = vcombine.high %v3631, %v3631
        %v3635 = vunpack.c.l.s4 1966171168
        %v3636 = vunpack.c.0.s8 %v3635
        %v3637 = vlaneseq
        %v3638 = vshrl.u32 %v3637, 7
        %v3639 = vsub.s32 %v3636, %v3638
        %v3640 = vrot.slane %v3624, %v3639
        %v3642 = vunpack.c.l.s4 1966171168
        %v3643 = vunpack.c.0.s8 %v3642
        %v3644 = vlaneseq
        %v3645 = vshrl.u32 %v3644, 7
        %v3646 = vsub.s32 %v3643, %v3645
        %v3647 = vrot.slane %v3631, %v3646
        %v3649 = vunpack.c.l.s4 1966171168
        %v3650 = vunpack.c.0.s8 %v3649
        %v3651 = vlaneseq
        %v3652 = vshrl.u32 %v3651, 7
        %v3653 = vsub.s32 %v3650, %v3652
        %v3654 = vrot.slane %v3632, %v3653
        %v3656 = vunpack.c.l.s4 1966171168
        %v3657 = vunpack.c.0.s8 %v3656
        %v3658 = vlaneseq
        %v3659 = vshrl.u32 %v3658, 7
        %v3660 = vsub.s32 %v3657, %v3659
        %v3661 = vrot.slane %v3633, %v3660
        %v3662 = vcombine.high %v3640, %v3640
        %v3663 = vcombine.high %v3647, %v3647
        %v3664 = vcombine.high %v3654, %v3654
        %v3665 = vcombine.high %v3661, %v3661
        %v3666 = vcombine.high %v2733, %v2733
        %v3668 = vunpack.c.l.s4 1966171168
        %v3669 = vunpack.c.0.s8 %v3668
        %v3670 = vlaneseq
        %v3671 = vshrl.u32 %v3670, 7
        %v3672 = vsub.s32 %v3669, %v3671
        %v3673 = vrot.slane %v2733, %v3672
        %v3675 = vunpack.c.l.s4 1966171168
        %v3676 = vunpack.c.0.s8 %v3675
        %v3677 = vlaneseq
        %v3678 = vshrl.u32 %v3677, 7
        %v3679 = vsub.s32 %v3676, %v3678
        %v3680 = vrot.slane %v3666, %v3679
        %v3681 = vcombine.high %v3673, %v3673
        %v3682 = vcombine.high %v3680, %v3680
        %v3684 = vunpack.c.l.s4 1966171168
        %v3685 = vunpack.c.0.s8 %v3684
        %v3686 = vlaneseq
        %v3687 = vshrl.u32 %v3686, 7
        %v3688 = vsub.s32 %v3685, %v3687
        %v3689 = vrot.slane %v3673, %v3688
        %v3691 = vunpack.c.l.s4 1966171168
        %v3692 = vunpack.c.0.s8 %v3691
        %v3693 = vlaneseq
        %v3694 = vshrl.u32 %v3693, 7
        %v3695 = vsub.s32 %v3692, %v3694
        %v3696 = vrot.slane %v3680, %v3695
        %v3698 = vunpack.c.l.s4 1966171168
        %v3699 = vunpack.c.0.s8 %v3698
        %v3700 = vlaneseq
        %v3701 = vshrl.u32 %v3700, 7
        %v3702 = vsub.s32 %v3699, %v3701
        %v3703 = vrot.slane %v3681, %v3702
        %v3705 = vunpack.c.l.s4 1966171168
        %v3706 = vunpack.c.0.s8 %v3705
        %v3707 = vlaneseq
        %v3708 = vshrl.u32 %v3707, 7
        %v3709 = vsub.s32 %v3706, %v3708
        %v3710 = vrot.slane %v3682, %v3709
        %v3711 = vcombine.high %v3689, %v3689
        %v3712 = vcombine.high %v3696, %v3696
        %v3713 = vcombine.high %v3703, %v3703
        %v3714 = vcombine.high %v3710, %v3710
        %v3715 = vcombine.high %v2734, %v2734
        %v3717 = vunpack.c.l.s4 1966171168
        %v3718 = vunpack.c.0.s8 %v3717
        %v3719 = vlaneseq
        %v3720 = vshrl.u32 %v3719, 7
        %v3721 = vsub.s32 %v3718, %v3720
        %v3722 = vrot.slane %v2734, %v3721
        %v3724 = vunpack.c.l.s4 1966171168
        %v3725 = vunpack.c.0.s8 %v3724
        %v3726 = vlaneseq
        %v3727 = vshrl.u32 %v3726, 7
        %v3728 = vsub.s32 %v3725, %v3727
        %v3729 = vrot.slane %v3715, %v3728
        %v3730 = vcombine.high %v3722, %v3722
        %v3731 = vcombine.high %v3729, %v3729
        %v3733 = vunpack.c.l.s4 1966171168
        %v3734 = vunpack.c.0.s8 %v3733
        %v3735 = vlaneseq
        %v3736 = vshrl.u32 %v3735, 7
        %v3737 = vsub.s32 %v3734, %v3736
        %v3738 = vrot.slane %v3722, %v3737
        %v3740 = vunpack.c.l.s4 1966171168
        %v3741 = vunpack.c.0.s8 %v3740
        %v3742 = vlaneseq
        %v3743 = vshrl.u32 %v3742, 7
        %v3744 = vsub.s32 %v3741, %v3743
        %v3745 = vrot.slane %v3729, %v3744
        %v3747 = vunpack.c.l.s4 1966171168
        %v3748 = vunpack.c.0.s8 %v3747
        %v3749 = vlaneseq
        %v3750 = vshrl.u32 %v3749, 7
        %v3751 = vsub.s32 %v3748, %v3750
        %v3752 = vrot.slane %v3730, %v3751
        %v3754 = vunpack.c.l.s4 1966171168
        %v3755 = vunpack.c.0.s8 %v3754
        %v3756 = vlaneseq
        %v3757 = vshrl.u32 %v3756, 7
        %v3758 = vsub.s32 %v3755, %v3757
        %v3759 = vrot.slane %v3731, %v3758
        %v3760 = vcombine.high %v3738, %v3738
        %v3761 = vcombine.high %v3745, %v3745
        %v3762 = vcombine.high %v3752, %v3752
        %v3763 = vcombine.high %v3759, %v3759
        %v3764 = vcombine.low %v2779, %v2786
        %v3765 = vcombine.low %v2826, %v2833
        %v3766 = vcombine.low %v2873, %v2880
        %v3767 = vcombine.low %v2920, %v2927
        %v3769 = vunpack.c.l.s4 1966171168
        %v3770 = vunpack.c.0.s8 %v3769
        %v3771 = vlaneseq
        %v3772 = vshrl.u32 %v3771, 7
        %v3773 = vsub.s32 %v3770, %v3772
        %v3774 = vrot.slane %v3764, %v3773
        %v3776 = vunpack.c.l.s4 1966171168
        %v3777 = vunpack.c.0.s8 %v3776
        %v3778 = vlaneseq
        %v3779 = vshrl.u32 %v3778, 7
        %v3780 = vsub.s32 %v3777, %v3779
        %v3781 = vrot.slane %v3765, %v3780
        %v3783 = vunpack.c.l.s4 1966171168
        %v3784 = vunpack.c.0.s8 %v3783
        %v3785 = vlaneseq
        %v3786 = vshrl.u32 %v3785, 7
        %v3787 = vsub.s32 %v3784, %v3786
        %v3788 = vrot.slane %v3766, %v3787
        %v3790 = vunpack.c.l.s4 1966171168
        %v3791 = vunpack.c.0.s8 %v3790
        %v3792 = vlaneseq
        %v3793 = vshrl.u32 %v3792, 7
        %v3794 = vsub.s32 %v3791, %v3793
        %v3795 = vrot.slane %v3767, %v3794
        %v3796 = vcombine.low %v3774, %v3781
        %v3797 = vcombine.low %v3788, %v3795
        %v3799 = vunpack.c.l.s4 1966171168
        %v3800 = vunpack.c.0.s8 %v3799
        %v3801 = vlaneseq
        %v3802 = vshrl.u32 %v3801, 7
        %v3803 = vsub.s32 %v3800, %v3802
        %v3804 = vrot.slane %v3796, %v3803
        %v3806 = vunpack.c.l.s4 1966171168
        %v3807 = vunpack.c.0.s8 %v3806
        %v3808 = vlaneseq
        %v3809 = vshrl.u32 %v3808, 7
        %v3810 = vsub.s32 %v3807, %v3809
        %v3811 = vrot.slane %v3797, %v3810
        %v3812 = vcombine.low %v3804, %v3811
        %v3813 = vcombine.low %v2967, %v2974
        %v3814 = vcombine.low %v3014, %v3021
        %v3815 = vcombine.low %v3061, %v3068
        %v3816 = vcombine.low %v3108, %v3115
        %v3818 = vunpack.c.l.s4 1966171168
        %v3819 = vunpack.c.0.s8 %v3818
        %v3820 = vlaneseq
        %v3821 = vshrl.u32 %v3820, 7
        %v3822 = vsub.s32 %v3819, %v3821
        %v3823 = vrot.slane %v3813, %v3822
        %v3825 = vunpack.c.l.s4 1966171168
        %v3826 = vunpack.c.0.s8 %v3825
        %v3827 = vlaneseq
        %v3828 = vshrl.u32 %v3827, 7
        %v3829 = vsub.s32 %v3826, %v3828
        %v3830 = vrot.slane %v3814, %v3829
        %v3832 = vunpack.c.l.s4 1966171168
        %v3833 = vunpack.c.0.s8 %v3832
        %v3834 = vlaneseq
        %v3835 = vshrl.u32 %v3834, 7
        %v3836 = vsub.s32 %v3833, %v3835
        %v3837 = vrot.slane %v3815, %v3836
        %v3839 = vunpack.c.l.s4 1966171168
        %v3840 = vunpack.c.0.s8 %v3839
        %v3841 = vlaneseq
        %v3842 = vshrl.u32 %v3841, 7
        %v3843 = vsub.s32 %v3840, %v3842
        %v3844 = vrot.slane %v3816, %v3843
        %v3845 = vcombine.low %v3823, %v3830
        %v3846 = vcombine.low %v3837, %v3844
        %v3848 = vunpack.c.l.s4 1966171168
        %v3849 = vunpack.c.0.s8 %v3848
        %v3850 = vlaneseq
        %v3851 = vshrl.u32 %v3850, 7
        %v3852 = vsub.s32 %v3849, %v3851
        %v3853 = vrot.slane %v3845, %v3852
        %v3855 = vunpack.c.l.s4 1966171168
        %v3856 = vunpack.c.0.s8 %v3855
        %v3857 = vlaneseq
        %v3858 = vshrl.u32 %v3857, 7
        %v3859 = vsub.s32 %v3856, %v3858
        %v3860 = vrot.slane %v3846, %v3859
        %v3861 = vcombine.low %v3853, %v3860
        %v3862 = vcombine.low %v3155, %v3162
        %v3863 = vcombine.low %v3202, %v3209
        %v3864 = vcombine.low %v3249, %v3270
        %v3865 = vcombine.low %v3311, %v3318
        %v3867 = vunpack.c.l.s4 1966171168
        %v3868 = vunpack.c.0.s8 %v3867
        %v3869 = vlaneseq
        %v3870 = vshrl.u32 %v3869, 7
        %v3871 = vsub.s32 %v3868, %v3870
        %v3872 = vrot.slane %v3862, %v3871
        %v3874 = vunpack.c.l.s4 1966171168
        %v3875 = vunpack.c.0.s8 %v3874
        %v3876 = vlaneseq
        %v3877 = vshrl.u32 %v3876, 7
        %v3878 = vsub.s32 %v3875, %v3877
        %v3879 = vrot.slane %v3863, %v3878
        %v3881 = vunpack.c.l.s4 1966171168
        %v3882 = vunpack.c.0.s8 %v3881
        %v3883 = vlaneseq
        %v3884 = vshrl.u32 %v3883, 7
        %v3885 = vsub.s32 %v3882, %v3884
        %v3886 = vrot.slane %v3864, %v3885
        %v3888 = vunpack.c.l.s4 1966171168
        %v3889 = vunpack.c.0.s8 %v3888
        %v3890 = vlaneseq
        %v3891 = vshrl.u32 %v3890, 7
        %v3892 = vsub.s32 %v3889, %v3891
        %v3893 = vrot.slane %v3865, %v3892
        %v3894 = vcombine.low %v3872, %v3879
        %v3895 = vcombine.low %v3886, %v3893
        %v3897 = vunpack.c.l.s4 1966171168
        %v3898 = vunpack.c.0.s8 %v3897
        %v3899 = vlaneseq
        %v3900 = vshrl.u32 %v3899, 7
        %v3901 = vsub.s32 %v3898, %v3900
        %v3902 = vrot.slane %v3894, %v3901
        %v3904 = vunpack.c.l.s4 1966171168
        %v3905 = vunpack.c.0.s8 %v3904
        %v3906 = vlaneseq
        %v3907 = vshrl.u32 %v3906, 7
        %v3908 = vsub.s32 %v3905, %v3907
        %v3909 = vrot.slane %v3895, %v3908
        %v3910 = vcombine.low %v3902, %v3909
        %v3911 = vcombine.low %v3360, %v3367
        %v3912 = vcombine.low %v3409, %v3416
        %v3913 = vcombine.low %v3458, %v3465
        %v3914 = vcombine.low %v3507, %v3514
        %v3916 = vunpack.c.l.s4 1966171168
        %v3917 = vunpack.c.0.s8 %v3916
        %v3918 = vlaneseq
        %v3919 = vshrl.u32 %v3918, 7
        %v3920 = vsub.s32 %v3917, %v3919
        %v3921 = vrot.slane %v3911, %v3920
        %v3923 = vunpack.c.l.s4 1966171168
        %v3924 = vunpack.c.0.s8 %v3923
        %v3925 = vlaneseq
        %v3926 = vshrl.u32 %v3925, 7
        %v3927 = vsub.s32 %v3924, %v3926
        %v3928 = vrot.slane %v3912, %v3927
        %v3930 = vunpack.c.l.s4 1966171168
        %v3931 = vunpack.c.0.s8 %v3930
        %v3932 = vlaneseq
        %v3933 = vshrl.u32 %v3932, 7
        %v3934 = vsub.s32 %v3931, %v3933
        %v3935 = vrot.slane %v3913, %v3934
        %v3937 = vunpack.c.l.s4 1966171168
        %v3938 = vunpack.c.0.s8 %v3937
        %v3939 = vlaneseq
        %v3940 = vshrl.u32 %v3939, 7
        %v3941 = vsub.s32 %v3938, %v3940
        %v3942 = vrot.slane %v3914, %v3941
        %v3943 = vcombine.low %v3921, %v3928
        %v3944 = vcombine.low %v3935, %v3942
        %v3946 = vunpack.c.l.s4 1966171168
        %v3947 = vunpack.c.0.s8 %v3946
        %v3948 = vlaneseq
        %v3949 = vshrl.u32 %v3948, 7
        %v3950 = vsub.s32 %v3947, %v3949
        %v3951 = vrot.slane %v3943, %v3950
        %v3953 = vunpack.c.l.s4 1966171168
        %v3954 = vunpack.c.0.s8 %v3953
        %v3955 = vlaneseq
        %v3956 = vshrl.u32 %v3955, 7
        %v3957 = vsub.s32 %v3954, %v3956
        %v3958 = vrot.slane %v3944, %v3957
        %v3959 = vcombine.low %v3951, %v3958
        %v3960 = vcombine.low %v3556, %v3563
        %v3961 = vcombine.low %v3605, %v3612
        %v3962 = vcombine.low %v3654, %v3661
        %v3963 = vcombine.low %v3703, %v3710
        %v3965 = vunpack.c.l.s4 1966171168
        %v3966 = vunpack.c.0.s8 %v3965
        %v3967 = vlaneseq
        %v3968 = vshrl.u32 %v3967, 7
        %v3969 = vsub.s32 %v3966, %v3968
        %v3970 = vrot.slane %v3960, %v3969
        %v3972 = vunpack.c.l.s4 1966171168
        %v3973 = vunpack.c.0.s8 %v3972
        %v3974 = vlaneseq
        %v3975 = vshrl.u32 %v3974, 7
        %v3976 = vsub.s32 %v3973, %v3975
        %v3977 = vrot.slane %v3961, %v3976
        %v3979 = vunpack.c.l.s4 1966171168
        %v3980 = vunpack.c.0.s8 %v3979
        %v3981 = vlaneseq
        %v3982 = vshrl.u32 %v3981, 7
        %v3983 = vsub.s32 %v3980, %v3982
        %v3984 = vrot.slane %v3962, %v3983
        %v3986 = vunpack.c.l.s4 1966171168
        %v3987 = vunpack.c.0.s8 %v3986
        %v3988 = vlaneseq
        %v3989 = vshrl.u32 %v3988, 7
        %v3990 = vsub.s32 %v3987, %v3989
        %v3991 = vrot.slane %v3963, %v3990
        %v3992 = vcombine.low %v3970, %v3977
        %v3993 = vcombine.low %v3984, %v3991
        %v3995 = vunpack.c.l.s4 1966171168
        %v3996 = vunpack.c.0.s8 %v3995
        %v3997 = vlaneseq
        %v3998 = vshrl.u32 %v3997, 7
        %v3999 = vsub.s32 %v3996, %v3998
        %v4000 = vrot.slane %v3992, %v3999
        %v4002 = vunpack.c.l.s4 1966171168
        %v4003 = vunpack.c.0.s8 %v4002
        %v4004 = vlaneseq
        %v4005 = vshrl.u32 %v4004, 7
        %v4006 = vsub.s32 %v4003, %v4005
        %v4007 = vrot.slane %v3993, %v4006
        %v4008 = vcombine.low %v4000, %v4007
        %v4009 = vcombine.low %v3752, %v3759
        %v4011 = vunpack.c.l.s4 1966171168
        %v4012 = vunpack.c.0.s8 %v4011
        %v4013 = vlaneseq
        %v4014 = vshrl.u32 %v4013, 7
        %v4015 = vsub.s32 %v4012, %v4014
        %v4016 = vrot.slane %v4009, %v4015
        %v4018 = vunpack.c.l.s4 1966171168
        %v4019 = vunpack.c.0.s8 %v4018
        %v4020 = vlaneseq
        %v4021 = vshrl.u32 %v4020, 7
        %v4022 = vsub.s32 %v4019, %v4021
        %v4023 = vrot.slane %v4016, %v4022
        %v4030 = vcombine.low %v2793, %v2800
        %v4031 = vcombine.low %v2840, %v2847
        %v4032 = vcombine.low %v2887, %v2894
        %v4033 = vcombine.low %v2934, %v2941
        %v4035 = vunpack.c.l.s4 1966171168
        %v4036 = vunpack.c.0.s8 %v4035
        %v4037 = vlaneseq
        %v4038 = vshrl.u32 %v4037, 7
        %v4039 = vsub.s32 %v4036, %v4038
        %v4040 = vrot.slane %v4030, %v4039
        %v4042 = vunpack.c.l.s4 1966171168
        %v4043 = vunpack.c.0.s8 %v4042
        %v4044 = vlaneseq
        %v4045 = vshrl.u32 %v4044, 7
        %v4046 = vsub.s32 %v4043, %v4045
        %v4047 = vrot.slane %v4031, %v4046
        %v4049 = vunpack.c.l.s4 1966171168
        %v4050 = vunpack.c.0.s8 %v4049
        %v4051 = vlaneseq
        %v4052 = vshrl.u32 %v4051, 7
        %v4053 = vsub.s32 %v4050, %v4052
        %v4054 = vrot.slane %v4032, %v4053
        %v4056 = vunpack.c.l.s4 1966171168
        %v4057 = vunpack.c.0.s8 %v4056
        %v4058 = vlaneseq
        %v4059 = vshrl.u32 %v4058, 7
        %v4060 = vsub.s32 %v4057, %v4059
        %v4061 = vrot.slane %v4033, %v4060
        %v4062 = vcombine.low %v4040, %v4047
        %v4063 = vcombine.low %v4054, %v4061
        %v4065 = vunpack.c.l.s4 1966171168
        %v4066 = vunpack.c.0.s8 %v4065
        %v4067 = vlaneseq
        %v4068 = vshrl.u32 %v4067, 7
        %v4069 = vsub.s32 %v4066, %v4068
        %v4070 = vrot.slane %v4062, %v4069
        %v4072 = vunpack.c.l.s4 1966171168
        %v4073 = vunpack.c.0.s8 %v4072
        %v4074 = vlaneseq
        %v4075 = vshrl.u32 %v4074, 7
        %v4076 = vsub.s32 %v4073, %v4075
        %v4077 = vrot.slane %v4063, %v4076
        %v4078 = vcombine.low %v4070, %v4077
        %v4079 = vcombine.low %v2981, %v2988
        %v4080 = vcombine.low %v3028, %v3035
        %v4081 = vcombine.low %v3075, %v3082
        %v4082 = vcombine.low %v3122, %v3129
        %v4084 = vunpack.c.l.s4 1966171168
        %v4085 = vunpack.c.0.s8 %v4084
        %v4086 = vlaneseq
        %v4087 = vshrl.u32 %v4086, 7
        %v4088 = vsub.s32 %v4085, %v4087
        %v4089 = vrot.slane %v4079, %v4088
        %v4091 = vunpack.c.l.s4 1966171168
        %v4092 = vunpack.c.0.s8 %v4091
        %v4093 = vlaneseq
        %v4094 = vshrl.u32 %v4093, 7
        %v4095 = vsub.s32 %v4092, %v4094
        %v4096 = vrot.slane %v4080, %v4095
        %v4098 = vunpack.c.l.s4 1966171168
        %v4099 = vunpack.c.0.s8 %v4098
        %v4100 = vlaneseq
        %v4101 = vshrl.u32 %v4100, 7
        %v4102 = vsub.s32 %v4099, %v4101
        %v4103 = vrot.slane %v4081, %v4102
        %v4105 = vunpack.c.l.s4 1966171168
        %v4106 = vunpack.c.0.s8 %v4105
        %v4107 = vlaneseq
        %v4108 = vshrl.u32 %v4107, 7
        %v4109 = vsub.s32 %v4106, %v4108
        %v4110 = vrot.slane %v4082, %v4109
        %v4111 = vcombine.low %v4089, %v4096
        %v4112 = vcombine.low %v4103, %v4110
        %v4114 = vunpack.c.l.s4 1966171168
        %v4115 = vunpack.c.0.s8 %v4114
        %v4116 = vlaneseq
        %v4117 = vshrl.u32 %v4116, 7
        %v4118 = vsub.s32 %v4115, %v4117
        %v4119 = vrot.slane %v4111, %v4118
        %v4121 = vunpack.c.l.s4 1966171168
        %v4122 = vunpack.c.0.s8 %v4121
        %v4123 = vlaneseq
        %v4124 = vshrl.u32 %v4123, 7
        %v4125 = vsub.s32 %v4122, %v4124
        %v4126 = vrot.slane %v4112, %v4125
        %v4127 = vcombine.low %v4119, %v4126
        %v4128 = vcombine.low %v3169, %v3176
        %v4129 = vcombine.low %v3216, %v3223
        %v4130 = vcombine.low %v3263, %v3272
        %v4131 = vcombine.low %v3319, %v3320
        %v4133 = vunpack.c.l.s4 1966171168
        %v4134 = vunpack.c.0.s8 %v4133
        %v4135 = vlaneseq
        %v4136 = vshrl.u32 %v4135, 7
        %v4137 = vsub.s32 %v4134, %v4136
        %v4138 = vrot.slane %v4128, %v4137
        %v4140 = vunpack.c.l.s4 1966171168
        %v4141 = vunpack.c.0.s8 %v4140
        %v4142 = vlaneseq
        %v4143 = vshrl.u32 %v4142, 7
        %v4144 = vsub.s32 %v4141, %v4143
        %v4145 = vrot.slane %v4129, %v4144
        %v4147 = vunpack.c.l.s4 1966171168
        %v4148 = vunpack.c.0.s8 %v4147
        %v4149 = vlaneseq
        %v4150 = vshrl.u32 %v4149, 7
        %v4151 = vsub.s32 %v4148, %v4150
        %v4152 = vrot.slane %v4130, %v4151
        %v4154 = vunpack.c.l.s4 1966171168
        %v4155 = vunpack.c.0.s8 %v4154
        %v4156 = vlaneseq
        %v4157 = vshrl.u32 %v4156, 7
        %v4158 = vsub.s32 %v4155, %v4157
        %v4159 = vrot.slane %v4131, %v4158
        %v4160 = vcombine.low %v4138, %v4145
        %v4161 = vcombine.low %v4152, %v4159
        %v4163 = vunpack.c.l.s4 1966171168
        %v4164 = vunpack.c.0.s8 %v4163
        %v4165 = vlaneseq
        %v4166 = vshrl.u32 %v4165, 7
        %v4167 = vsub.s32 %v4164, %v4166
        %v4168 = vrot.slane %v4160, %v4167
        %v4170 = vunpack.c.l.s4 1966171168
        %v4171 = vunpack.c.0.s8 %v4170
        %v4172 = vlaneseq
        %v4173 = vshrl.u32 %v4172, 7
        %v4174 = vsub.s32 %v4171, %v4173
        %v4175 = vrot.slane %v4161, %v4174
        %v4176 = vcombine.low %v4168, %v4175
        %v4177 = vcombine.low %v3368, %v3369
        %v4178 = vcombine.low %v3417, %v3418
        %v4179 = vcombine.low %v3466, %v3467
        %v4180 = vcombine.low %v3515, %v3516
        %v4182 = vunpack.c.l.s4 1966171168
        %v4183 = vunpack.c.0.s8 %v4182
        %v4184 = vlaneseq
        %v4185 = vshrl.u32 %v4184, 7
        %v4186 = vsub.s32 %v4183, %v4185
        %v4187 = vrot.slane %v4177, %v4186
        %v4189 = vunpack.c.l.s4 1966171168
        %v4190 = vunpack.c.0.s8 %v4189
        %v4191 = vlaneseq
        %v4192 = vshrl.u32 %v4191, 7
        %v4193 = vsub.s32 %v4190, %v4192
        %v4194 = vrot.slane %v4178, %v4193
        %v4196 = vunpack.c.l.s4 1966171168
        %v4197 = vunpack.c.0.s8 %v4196
        %v4198 = vlaneseq
        %v4199 = vshrl.u32 %v4198, 7
        %v4200 = vsub.s32 %v4197, %v4199
        %v4201 = vrot.slane %v4179, %v4200
        %v4203 = vunpack.c.l.s4 1966171168
        %v4204 = vunpack.c.0.s8 %v4203
        %v4205 = vlaneseq
        %v4206 = vshrl.u32 %v4205, 7
        %v4207 = vsub.s32 %v4204, %v4206
        %v4208 = vrot.slane %v4180, %v4207
        %v4209 = vcombine.low %v4187, %v4194
        %v4210 = vcombine.low %v4201, %v4208
        %v4212 = vunpack.c.l.s4 1966171168
        %v4213 = vunpack.c.0.s8 %v4212
        %v4214 = vlaneseq
        %v4215 = vshrl.u32 %v4214, 7
        %v4216 = vsub.s32 %v4213, %v4215
        %v4217 = vrot.slane %v4209, %v4216
        %v4219 = vunpack.c.l.s4 1966171168
        %v4220 = vunpack.c.0.s8 %v4219
        %v4221 = vlaneseq
        %v4222 = vshrl.u32 %v4221, 7
        %v4223 = vsub.s32 %v4220, %v4222
        %v4224 = vrot.slane %v4210, %v4223
        %v4225 = vcombine.low %v4217, %v4224
        %v4226 = vcombine.low %v3564, %v3565
        %v4227 = vcombine.low %v3613, %v3614
        %v4228 = vcombine.low %v3662, %v3663
        %v4229 = vcombine.low %v3711, %v3712
        %v4231 = vunpack.c.l.s4 1966171168
        %v4232 = vunpack.c.0.s8 %v4231
        %v4233 = vlaneseq
        %v4234 = vshrl.u32 %v4233, 7
        %v4235 = vsub.s32 %v4232, %v4234
        %v4236 = vrot.slane %v4226, %v4235
        %v4238 = vunpack.c.l.s4 1966171168
        %v4239 = vunpack.c.0.s8 %v4238
        %v4240 = vlaneseq
        %v4241 = vshrl.u32 %v4240, 7
        %v4242 = vsub.s32 %v4239, %v4241
        %v4243 = vrot.slane %v4227, %v4242
        %v4245 = vunpack.c.l.s4 1966171168
        %v4246 = vunpack.c.0.s8 %v4245
        %v4247 = vlaneseq
        %v4248 = vshrl.u32 %v4247, 7
        %v4249 = vsub.s32 %v4246, %v4248
        %v4250 = vrot.slane %v4228, %v4249
        %v4252 = vunpack.c.l.s4 1966171168
        %v4253 = vunpack.c.0.s8 %v4252
        %v4254 = vlaneseq
        %v4255 = vshrl.u32 %v4254, 7
        %v4256 = vsub.s32 %v4253, %v4255
        %v4257 = vrot.slane %v4229, %v4256
        %v4258 = vcombine.low %v4236, %v4243
        %v4259 = vcombine.low %v4250, %v4257
        %v4261 = vunpack.c.l.s4 1966171168
        %v4262 = vunpack.c.0.s8 %v4261
        %v4263 = vlaneseq
        %v4264 = vshrl.u32 %v4263, 7
        %v4265 = vsub.s32 %v4262, %v4264
        %v4266 = vrot.slane %v4258, %v4265
        %v4268 = vunpack.c.l.s4 1966171168
        %v4269 = vunpack.c.0.s8 %v4268
        %v4270 = vlaneseq
        %v4271 = vshrl.u32 %v4270, 7
        %v4272 = vsub.s32 %v4269, %v4271
        %v4273 = vrot.slane %v4259, %v4272
        %v4274 = vcombine.low %v4266, %v4273
        %v4275 = vcombine.low %v3760, %v3761
        %v4277 = vunpack.c.l.s4 1966171168
        %v4278 = vunpack.c.0.s8 %v4277
        %v4279 = vlaneseq
        %v4280 = vshrl.u32 %v4279, 7
        %v4281 = vsub.s32 %v4278, %v4280
        %v4282 = vrot.slane %v4275, %v4281
        %v4284 = vunpack.c.l.s4 1966171168
        %v4285 = vunpack.c.0.s8 %v4284
        %v4286 = vlaneseq
        %v4287 = vshrl.u32 %v4286, 7
        %v4288 = vsub.s32 %v4285, %v4287
        %v4289 = vrot.slane %v4282, %v4288
        %4290 = vrot.lane.b32.xlu0 %v4078, 16
        %v4291 = vpop.permute.xlu0 %4290
        %4292 = vrot.lane.b32.xlu0 %v4127, 16
        %v4293 = vpop.permute.xlu0 %4292
        %4294 = vrot.lane.b32.xlu0 %v4176, 16
        %v4295 = vpop.permute.xlu0 %4294
        %4296 = vrot.lane.b32.xlu0 %v4225, 16
        %v4297 = vpop.permute.xlu0 %4296
        %4298 = vrot.lane.b32.xlu0 %v4274, 16
        %v4299 = vpop.permute.xlu0 %4298
        %4300 = vrot.lane.b32.xlu0 %v4289, 16
        %v4301 = vpop.permute.xlu0 %4300
        %v4308 = vcombine.low %v2801, %v2802
        %v4309 = vcombine.low %v2848, %v2849
        %v4310 = vcombine.low %v2895, %v2896
        %v4311 = vcombine.low %v2942, %v2943
        %v4313 = vunpack.c.l.s4 1966171168
        %v4314 = vunpack.c.0.s8 %v4313
        %v4315 = vlaneseq
        %v4316 = vshrl.u32 %v4315, 7
        %v4317 = vsub.s32 %v4314, %v4316
        %v4318 = vrot.slane %v4308, %v4317
        %v4320 = vunpack.c.l.s4 1966171168
        %v4321 = vunpack.c.0.s8 %v4320
        %v4322 = vlaneseq
        %v4323 = vshrl.u32 %v4322, 7
        %v4324 = vsub.s32 %v4321, %v4323
        %v4325 = vrot.slane %v4309, %v4324
        %v4327 = vunpack.c.l.s4 1966171168
        %v4328 = vunpack.c.0.s8 %v4327
        %v4329 = vlaneseq
        %v4330 = vshrl.u32 %v4329, 7
        %v4331 = vsub.s32 %v4328, %v4330
        %v4332 = vrot.slane %v4310, %v4331
        %v4334 = vunpack.c.l.s4 1966171168
        %v4335 = vunpack.c.0.s8 %v4334
        %v4336 = vlaneseq
        %v4337 = vshrl.u32 %v4336, 7
        %v4338 = vsub.s32 %v4335, %v4337
        %v4339 = vrot.slane %v4311, %v4338
        %v4340 = vcombine.low %v4318, %v4325
        %v4341 = vcombine.low %v4332, %v4339
        %v4343 = vunpack.c.l.s4 1966171168
        %v4344 = vunpack.c.0.s8 %v4343
        %v4345 = vlaneseq
        %v4346 = vshrl.u32 %v4345, 7
        %v4347 = vsub.s32 %v4344, %v4346
        %v4348 = vrot.slane %v4340, %v4347
        %v4350 = vunpack.c.l.s4 1966171168
        %v4351 = vunpack.c.0.s8 %v4350
        %v4352 = vlaneseq
        %v4353 = vshrl.u32 %v4352, 7
        %v4354 = vsub.s32 %v4351, %v4353
        %v4355 = vrot.slane %v4341, %v4354
        %v4356 = vcombine.low %v4348, %v4355
        %v4357 = vcombine.low %v2989, %v2990
        %v4358 = vcombine.low %v3036, %v3037
        %v4359 = vcombine.low %v3083, %v3084
        %v4360 = vcombine.low %v3130, %v3131
        %v4362 = vunpack.c.l.s4 1966171168
        %v4363 = vunpack.c.0.s8 %v4362
        %v4364 = vlaneseq
        %v4365 = vshrl.u32 %v4364, 7
        %v4366 = vsub.s32 %v4363, %v4365
        %v4367 = vrot.slane %v4357, %v4366
        %v4369 = vunpack.c.l.s4 1966171168
        %v4370 = vunpack.c.0.s8 %v4369
        %v4371 = vlaneseq
        %v4372 = vshrl.u32 %v4371, 7
        %v4373 = vsub.s32 %v4370, %v4372
        %v4374 = vrot.slane %v4358, %v4373
        %v4376 = vunpack.c.l.s4 1966171168
        %v4377 = vunpack.c.0.s8 %v4376
        %v4378 = vlaneseq
        %v4379 = vshrl.u32 %v4378, 7
        %v4380 = vsub.s32 %v4377, %v4379
        %v4381 = vrot.slane %v4359, %v4380
        %v4383 = vunpack.c.l.s4 1966171168
        %v4384 = vunpack.c.0.s8 %v4383
        %v4385 = vlaneseq
        %v4386 = vshrl.u32 %v4385, 7
        %v4387 = vsub.s32 %v4384, %v4386
        %v4388 = vrot.slane %v4360, %v4387
        %v4389 = vcombine.low %v4367, %v4374
        %v4390 = vcombine.low %v4381, %v4388
        %v4392 = vunpack.c.l.s4 1966171168
        %v4393 = vunpack.c.0.s8 %v4392
        %v4394 = vlaneseq
        %v4395 = vshrl.u32 %v4394, 7
        %v4396 = vsub.s32 %v4393, %v4395
        %v4397 = vrot.slane %v4389, %v4396
        %v4399 = vunpack.c.l.s4 1966171168
        %v4400 = vunpack.c.0.s8 %v4399
        %v4401 = vlaneseq
        %v4402 = vshrl.u32 %v4401, 7
        %v4403 = vsub.s32 %v4400, %v4402
        %v4404 = vrot.slane %v4390, %v4403
        %v4405 = vcombine.low %v4397, %v4404
        %v4406 = vcombine.low %v3177, %v3178
        %v4407 = vcombine.low %v3224, %v3225
        %v4408 = vcombine.low %v3271, %v3273
        %v4409 = vcombine.low %v3321, %v3322
        %v4411 = vunpack.c.l.s4 1966171168
        %v4412 = vunpack.c.0.s8 %v4411
        %v4413 = vlaneseq
        %v4414 = vshrl.u32 %v4413, 7
        %v4415 = vsub.s32 %v4412, %v4414
        %v4416 = vrot.slane %v4406, %v4415
        %v4418 = vunpack.c.l.s4 1966171168
        %v4419 = vunpack.c.0.s8 %v4418
        %v4420 = vlaneseq
        %v4421 = vshrl.u32 %v4420, 7
        %v4422 = vsub.s32 %v4419, %v4421
        %v4423 = vrot.slane %v4407, %v4422
        %v4425 = vunpack.c.l.s4 1966171168
        %v4426 = vunpack.c.0.s8 %v4425
        %v4427 = vlaneseq
        %v4428 = vshrl.u32 %v4427, 7
        %v4429 = vsub.s32 %v4426, %v4428
        %v4430 = vrot.slane %v4408, %v4429
        %v4432 = vunpack.c.l.s4 1966171168
        %v4433 = vunpack.c.0.s8 %v4432
        %v4434 = vlaneseq
        %v4435 = vshrl.u32 %v4434, 7
        %v4436 = vsub.s32 %v4433, %v4435
        %v4437 = vrot.slane %v4409, %v4436
        %v4438 = vcombine.low %v4416, %v4423
        %v4439 = vcombine.low %v4430, %v4437
        %v4441 = vunpack.c.l.s4 1966171168
        %v4442 = vunpack.c.0.s8 %v4441
        %v4443 = vlaneseq
        %v4444 = vshrl.u32 %v4443, 7
        %v4445 = vsub.s32 %v4442, %v4444
        %v4446 = vrot.slane %v4438, %v4445
        %v4448 = vunpack.c.l.s4 1966171168
        %v4449 = vunpack.c.0.s8 %v4448
        %v4450 = vlaneseq
        %v4451 = vshrl.u32 %v4450, 7
        %v4452 = vsub.s32 %v4449, %v4451
        %v4453 = vrot.slane %v4439, %v4452
        %v4454 = vcombine.low %v4446, %v4453
        %v4455 = vcombine.low %v3370, %v3371
        %v4456 = vcombine.low %v3419, %v3420
        %v4457 = vcombine.low %v3468, %v3469
        %v4458 = vcombine.low %v3517, %v3518
        %v4460 = vunpack.c.l.s4 1966171168
        %v4461 = vunpack.c.0.s8 %v4460
        %v4462 = vlaneseq
        %v4463 = vshrl.u32 %v4462, 7
        %v4464 = vsub.s32 %v4461, %v4463
        %v4465 = vrot.slane %v4455, %v4464
        %v4467 = vunpack.c.l.s4 1966171168
        %v4468 = vunpack.c.0.s8 %v4467
        %v4469 = vlaneseq
        %v4470 = vshrl.u32 %v4469, 7
        %v4471 = vsub.s32 %v4468, %v4470
        %v4472 = vrot.slane %v4456, %v4471
        %v4474 = vunpack.c.l.s4 1966171168
        %v4475 = vunpack.c.0.s8 %v4474
        %v4476 = vlaneseq
        %v4477 = vshrl.u32 %v4476, 7
        %v4478 = vsub.s32 %v4475, %v4477
        %v4479 = vrot.slane %v4457, %v4478
        %v4481 = vunpack.c.l.s4 1966171168
        %v4482 = vunpack.c.0.s8 %v4481
        %v4483 = vlaneseq
        %v4484 = vshrl.u32 %v4483, 7
        %v4485 = vsub.s32 %v4482, %v4484
        %v4486 = vrot.slane %v4458, %v4485
        %v4487 = vcombine.low %v4465, %v4472
        %v4488 = vcombine.low %v4479, %v4486
        %v4490 = vunpack.c.l.s4 1966171168
        %v4491 = vunpack.c.0.s8 %v4490
        %v4492 = vlaneseq
        %v4493 = vshrl.u32 %v4492, 7
        %v4494 = vsub.s32 %v4491, %v4493
        %v4495 = vrot.slane %v4487, %v4494
        %v4497 = vunpack.c.l.s4 1966171168
        %v4498 = vunpack.c.0.s8 %v4497
        %v4499 = vlaneseq
        %v4500 = vshrl.u32 %v4499, 7
        %v4501 = vsub.s32 %v4498, %v4500
        %v4502 = vrot.slane %v4488, %v4501
        %v4503 = vcombine.low %v4495, %v4502
        %v4504 = vcombine.low %v3566, %v3567
        %v4505 = vcombine.low %v3615, %v3616
        %v4506 = vcombine.low %v3664, %v3665
        %v4507 = vcombine.low %v3713, %v3714
        %v4509 = vunpack.c.l.s4 1966171168
        %v4510 = vunpack.c.0.s8 %v4509
        %v4511 = vlaneseq
        %v4512 = vshrl.u32 %v4511, 7
        %v4513 = vsub.s32 %v4510, %v4512
        %v4514 = vrot.slane %v4504, %v4513
        %v4516 = vunpack.c.l.s4 1966171168
        %v4517 = vunpack.c.0.s8 %v4516
        %v4518 = vlaneseq
        %v4519 = vshrl.u32 %v4518, 7
        %v4520 = vsub.s32 %v4517, %v4519
        %v4521 = vrot.slane %v4505, %v4520
        %v4523 = vunpack.c.l.s4 1966171168
        %v4524 = vunpack.c.0.s8 %v4523
        %v4525 = vlaneseq
        %v4526 = vshrl.u32 %v4525, 7
        %v4527 = vsub.s32 %v4524, %v4526
        %v4528 = vrot.slane %v4506, %v4527
        %v4530 = vunpack.c.l.s4 1966171168
        %v4531 = vunpack.c.0.s8 %v4530
        %v4532 = vlaneseq
        %v4533 = vshrl.u32 %v4532, 7
        %v4534 = vsub.s32 %v4531, %v4533
        %v4535 = vrot.slane %v4507, %v4534
        %v4536 = vcombine.low %v4514, %v4521
        %v4537 = vcombine.low %v4528, %v4535
        %v4539 = vunpack.c.l.s4 1966171168
        %v4540 = vunpack.c.0.s8 %v4539
        %v4541 = vlaneseq
        %v4542 = vshrl.u32 %v4541, 7
        %v4543 = vsub.s32 %v4540, %v4542
        %v4544 = vrot.slane %v4536, %v4543
        %v4546 = vunpack.c.l.s4 1966171168
        %v4547 = vunpack.c.0.s8 %v4546
        %v4548 = vlaneseq
        %v4549 = vshrl.u32 %v4548, 7
        %v4550 = vsub.s32 %v4547, %v4549
        %v4551 = vrot.slane %v4537, %v4550
        %v4552 = vcombine.low %v4544, %v4551
        %v4553 = vcombine.low %v3762, %v3763
        %v4555 = vunpack.c.l.s4 1966171168
        %v4556 = vunpack.c.0.s8 %v4555
        %v4557 = vlaneseq
        %v4558 = vshrl.u32 %v4557, 7
        %v4559 = vsub.s32 %v4556, %v4558
        %v4560 = vrot.slane %v4553, %v4559
        %v4562 = vunpack.c.l.s4 1966171168
        %v4563 = vunpack.c.0.s8 %v4562
        %v4564 = vlaneseq
        %v4565 = vshrl.u32 %v4564, 7
        %v4566 = vsub.s32 %v4563, %v4565
        %v4567 = vrot.slane %v4560, %v4566
        %4568 = vrot.lane.b32.xlu0 %v4356, 32
        %v4569 = vpop.permute.xlu0 %4568
        %4570 = vrot.lane.b32.xlu0 %v4405, 32
        %v4571 = vpop.permute.xlu0 %4570
        %4572 = vrot.lane.b32.xlu0 %v4454, 32
        %v4573 = vpop.permute.xlu0 %4572
        %4574 = vrot.lane.b32.xlu0 %v4503, 32
        %v4575 = vpop.permute.xlu0 %4574
        %4576 = vrot.lane.b32.xlu0 %v4552, 32
        %v4577 = vpop.permute.xlu0 %4576
        %4578 = vrot.lane.b32.xlu0 %v4567, 32
        %v4579 = vpop.permute.xlu0 %4578
        %vm4586 = vcmask 130048
        %v4587 = vsel %vm4586, %v3812, %v4291
        %v4588 = vsel %vm4586, %v3861, %v4293
        %v4589 = vsel %vm4586, %v3910, %v4295
        %v4590 = vsel %vm4586, %v3959, %v4297
        %v4591 = vsel %vm4586, %v4008, %v4299
        %v4592 = vsel %vm4586, %v4023, %v4301
        %vm4593 = vcmask 261120
        %v4594 = vsel %vm4593, %v4587, %v4569
        %v4595 = vsel %vm4593, %v4588, %v4571
        %v4596 = vsel %vm4593, %v4589, %v4573
        %v4597 = vsel %vm4593, %v4590, %v4575
        %v4598 = vsel %vm4593, %v4591, %v4577
        %v4599 = vsel %vm4593, %v4592, %v4579
        %v4600 = vld [vmem:[%s3] sm:$0xff]
        %v4601 = vld [vmem:[%s3 + $0x8] sm:$0xff]
        %v4602 = vld [vmem:[%s3 + $0x10] sm:$0xff]
        %v4603 = vld [vmem:[%s3 + $0x18] sm:$0xff]
        %v4604 = vld [vmem:[%s3 + $0x20] sm:$0xff]
        %v4605 = vld [vmem:[%s3 + $0x28] sm:$0xff]
        %v4606 = vld [vmem:[%s4] sm:$0x1]
        %v4608 = vlaneseq
        %v4609 = vshrl.u32 %v4608, 7
        %v4610 = vsub.s32 0, %v4609
        %v4611 = vrot.slane %v4606, %v4610
        %vm4613 = vcmask 392192
        %v4615 = vsel %vm4613, %v4594, 0
        %v4618 = vsel %vm4613, %v4595, 0
        %v4621 = vsel %vm4613, %v4596, 0
        %v4624 = vsel %vm4613, %v4597, 0
        %v4627 = vsel %vm4613, %v4598, 0
        %v4630 = vsel %vm4613, %v4599, 0
        %4632 = vmatprep.subr.mxu0 0.0
        %4633 = vmatpush1.msra.mxu0 %v4600
        %4634 = vmatprep.subr.mxu0 0.0
        %4635 = vmatpush1.msra.mxu0 %v4601
        %4636 = vmatprep.subr.mxu0 0.0
        %4637 = vmatpush1.msra.mxu0 %v4602
        %4638 = vmatprep.subr.mxu0 0.0
        %4639 = vmatpush1.msra.mxu0 %v4603
        %4640 = vmatprep.subr.mxu0 0.0
        %4641 = vmatpush1.msra.mxu0 %v4604
        %4642 = vmatprep.subr.mxu0 0.0
        %4643 = vmatpush1.msra.mxu0 %v4605
        %4644 = vmatprep.subr.mxu0 0.0
        %4645 = vmatpush1.msra.mxu0 0.0
        %4646 = vmatprep.subr.mxu0 0.0
        %4647 = vmatpush1.msra.mxu0 0.0
        %4648 = vmatprep.subr.mxu0 0.0
        %4649 = vmatpush1.msra.mxu0 0.0
        %4650 = vmatprep.subr.mxu0 0.0
        %4651 = vmatpush1.msra.mxu0 0.0
        %4652 = vmatprep.subr.mxu0 0.0
        %4653 = vmatpush1.msra.mxu0 0.0
        %4654 = vmatprep.subr.mxu0 0.0
        %4655 = vmatpush1.msra.mxu0 0.0
        %4656 = vmatprep.subr.mxu0 0.0
        %4657 = vmatpush1.msra.mxu0 0.0
        %4658 = vmatprep.subr.mxu0 0.0
        %4659 = vmatpush1.msra.mxu0 0.0
        %4660 = vmatprep.subr.mxu0 0.0
        %4661 = vmatpush1.msra.mxu0 0.0
        %4662 = vmatprep.subr.mxu0 0.0
        %4663 = vmatpush1.msra.mxu0 0.0
        %4664 = vmatprep.subr.mxu0 0.0
        %4665 = vmatpush1.msra.mxu0 0.0
        %4666 = vmatprep.subr.mxu0 0.0
        %4667 = vmatpush1.msra.mxu0 0.0
        %4668 = vmatprep.subr.mxu0 0.0
        %4669 = vmatpush1.msra.mxu0 0.0
        %4670 = vmatprep.subr.mxu0 0.0
        %4671 = vmatpush1.msra.mxu0 0.0
        %4672 = vmatprep.subr.mxu0 0.0
        %4673 = vmatpush1.msra.mxu0 0.0
        %4674 = vmatprep.subr.mxu0 0.0
        %4675 = vmatpush1.msra.mxu0 0.0
        %4676 = vmatprep.subr.mxu0 0.0
        %4677 = vmatpush1.msra.mxu0 0.0
        %4678 = vmatprep.subr.mxu0 0.0
        %4679 = vmatpush1.msra.mxu0 0.0
        %4680 = vmatprep.subr.mxu0 0.0
        %4681 = vmatpush1.msra.mxu0 0.0
        %4682 = vmatprep.subr.mxu0 0.0
        %4683 = vmatpush1.msra.mxu0 0.0
        %4684 = vmatprep.subr.mxu0 0.0
        %4685 = vmatpush1.msra.mxu0 0.0
        %4686 = vmatprep.subr.mxu0 0.0
        %4687 = vmatpush1.msra.mxu0 0.0
        %4688 = vmatprep.subr.mxu0 0.0
        %4689 = vmatpush1.msra.mxu0 0.0
        %4690 = vmatprep.subr.mxu0 0.0
        %4691 = vmatpush1.msra.mxu0 0.0
        %4692 = vmatprep.subr.mxu0 0.0
        %4693 = vmatpush1.msra.mxu0 0.0
        %4694 = vmatprep.subr.mxu0 0.0
        %4695 = vmatpush1.msra.mxu0 0.0
        %4696 = vmatprep.mubr.f32.mxu0 0.0
        %4697 = vmatmul.mubr.f32.gmra.mrb[0].mxu0 %v4615
        %v4698 = vpop.f32.mrb[0].mxu0
        %v4699 = vadd.f32 %v4611, %v4698
        %v4700 = vpop.f32.mrb[0].mxu0
        %4701 = vmatprep.mubr.f32.mxu0 0.0
        %4702 = vmatmul.mubr.f32.gmra.mrb[0].mxu0 %v4618
        %v4703 = vpop.f32.mrb[0].mxu0
        %v4704 = vadd.f32 %v4611, %v4703
        %v4705 = vpop.f32.mrb[0].mxu0
        %4706 = vmatprep.mubr.f32.mxu0 0.0
        %4707 = vmatmul.mubr.f32.gmra.mrb[0].mxu0 %v4621
        %v4708 = vpop.f32.mrb[0].mxu0
        %v4709 = vadd.f32 %v4611, %v4708
        %v4710 = vpop.f32.mrb[0].mxu0
        %4711 = vmatprep.mubr.f32.mxu0 0.0
        %4712 = vmatmul.mubr.f32.gmra.mrb[0].mxu0 %v4624
        %v4713 = vpop.f32.mrb[0].mxu0
        %v4714 = vadd.f32 %v4611, %v4713
        %v4715 = vpop.f32.mrb[0].mxu0
        %4716 = vmatprep.mubr.f32.mxu0 0.0
        %4717 = vmatmul.mubr.f32.gmra.mrb[0].mxu0 %v4627
        %v4718 = vpop.f32.mrb[0].mxu0
        %v4719 = vadd.f32 %v4611, %v4718
        %v4720 = vpop.f32.mrb[0].mxu0
        %4721 = vmatprep.mubr.f32.mxu0 0.0
        %4722 = vmatmul.mubr.f32.gmra.mrb[0].mxu0 %v4630
        %v4723 = vpop.f32.mrb[0].mxu0
        %v4724 = vpop.f32.mrb[0].mxu0
        %4725 = vdwg.mxu0
        %v4726 = vmax.f32 %v4699, 0.0
        %v4727 = vmax.f32 %v4704, 0.0
        %v4728 = vmax.f32 %v4709, 0.0
        %v4729 = vmax.f32 %v4714, 0.0
        %v4730 = vmax.f32 %v4719, 0.0
        %v4736 = vcombine.high %v4726, %v4726
        %v4738 = vunpack.c.l.s4 1966171168
        %v4739 = vunpack.c.0.s8 %v4738
        %v4740 = vlaneseq
        %v4741 = vshrl.u32 %v4740, 7
        %v4742 = vsub.s32 %v4739, %v4741
        %v4743 = vrot.slane %v4726, %v4742
        %v4745 = vunpack.c.l.s4 1966171168
        %v4746 = vunpack.c.0.s8 %v4745
        %v4747 = vlaneseq
        %v4748 = vshrl.u32 %v4747, 7
        %v4749 = vsub.s32 %v4746, %v4748
        %v4750 = vrot.slane %v4736, %v4749
        %v4751 = vcombine.high %v4743, %v4743
        %v4752 = vcombine.high %v4750, %v4750
        %v4754 = vunpack.c.l.s4 1966171168
        %v4755 = vunpack.c.0.s8 %v4754
        %v4756 = vlaneseq
        %v4757 = vshrl.u32 %v4756, 7
        %v4758 = vsub.s32 %v4755, %v4757
        %v4759 = vrot.slane %v4743, %v4758
        %v4761 = vunpack.c.l.s4 1966171168
        %v4762 = vunpack.c.0.s8 %v4761
        %v4763 = vlaneseq
        %v4764 = vshrl.u32 %v4763, 7
        %v4765 = vsub.s32 %v4762, %v4764
        %v4766 = vrot.slane %v4750, %v4765
        %v4768 = vunpack.c.l.s4 1966171168
        %v4769 = vunpack.c.0.s8 %v4768
        %v4770 = vlaneseq
        %v4771 = vshrl.u32 %v4770, 7
        %v4772 = vsub.s32 %v4769, %v4771
        %v4773 = vrot.slane %v4751, %v4772
        %v4775 = vunpack.c.l.s4 1966171168
        %v4776 = vunpack.c.0.s8 %v4775
        %v4777 = vlaneseq
        %v4778 = vshrl.u32 %v4777, 7
        %v4779 = vsub.s32 %v4776, %v4778
        %v4780 = vrot.slane %v4752, %v4779
        %v4781 = vcombine.high %v4759, %v4759
        %v4782 = vcombine.high %v4766, %v4766
        %v4783 = vcombine.high %v4727, %v4727
        %v4785 = vunpack.c.l.s4 1966171168
        %v4786 = vunpack.c.0.s8 %v4785
        %v4787 = vlaneseq
        %v4788 = vshrl.u32 %v4787, 7
        %v4789 = vsub.s32 %v4786, %v4788
        %v4790 = vrot.slane %v4727, %v4789
        %v4792 = vunpack.c.l.s4 1966171168
        %v4793 = vunpack.c.0.s8 %v4792
        %v4794 = vlaneseq
        %v4795 = vshrl.u32 %v4794, 7
        %v4796 = vsub.s32 %v4793, %v4795
        %v4797 = vrot.slane %v4783, %v4796
        %v4798 = vcombine.high %v4790, %v4790
        %v4799 = vcombine.high %v4797, %v4797
        %v4801 = vunpack.c.l.s4 1966171168
        %v4802 = vunpack.c.0.s8 %v4801
        %v4803 = vlaneseq
        %v4804 = vshrl.u32 %v4803, 7
        %v4805 = vsub.s32 %v4802, %v4804
        %v4806 = vrot.slane %v4790, %v4805
        %v4808 = vunpack.c.l.s4 1966171168
        %v4809 = vunpack.c.0.s8 %v4808
        %v4810 = vlaneseq
        %v4811 = vshrl.u32 %v4810, 7
        %v4812 = vsub.s32 %v4809, %v4811
        %v4813 = vrot.slane %v4797, %v4812
        %v4815 = vunpack.c.l.s4 1966171168
        %v4816 = vunpack.c.0.s8 %v4815
        %v4817 = vlaneseq
        %v4818 = vshrl.u32 %v4817, 7
        %v4819 = vsub.s32 %v4816, %v4818
        %v4820 = vrot.slane %v4798, %v4819
        %v4822 = vunpack.c.l.s4 1966171168
        %v4823 = vunpack.c.0.s8 %v4822
        %v4824 = vlaneseq
        %v4825 = vshrl.u32 %v4824, 7
        %v4826 = vsub.s32 %v4823, %v4825
        %v4827 = vrot.slane %v4799, %v4826
        %v4828 = vcombine.high %v4806, %v4806
        %v4829 = vcombine.high %v4813, %v4813
        %v4830 = vcombine.high %v4728, %v4728
        %v4832 = vunpack.c.l.s4 1966171168
        %v4833 = vunpack.c.0.s8 %v4832
        %v4834 = vlaneseq
        %v4835 = vshrl.u32 %v4834, 7
        %v4836 = vsub.s32 %v4833, %v4835
        %v4837 = vrot.slane %v4728, %v4836
        %v4839 = vunpack.c.l.s4 1966171168
        %v4840 = vunpack.c.0.s8 %v4839
        %v4841 = vlaneseq
        %v4842 = vshrl.u32 %v4841, 7
        %v4843 = vsub.s32 %v4840, %v4842
        %v4844 = vrot.slane %v4830, %v4843
        %v4845 = vcombine.high %v4837, %v4837
        %v4846 = vcombine.high %v4844, %v4844
        %v4848 = vunpack.c.l.s4 1966171168
        %v4849 = vunpack.c.0.s8 %v4848
        %v4850 = vlaneseq
        %v4851 = vshrl.u32 %v4850, 7
        %v4852 = vsub.s32 %v4849, %v4851
        %v4853 = vrot.slane %v4837, %v4852
        %v4855 = vunpack.c.l.s4 1966171168
        %v4856 = vunpack.c.0.s8 %v4855
        %v4857 = vlaneseq
        %v4858 = vshrl.u32 %v4857, 7
        %v4859 = vsub.s32 %v4856, %v4858
        %v4860 = vrot.slane %v4844, %v4859
        %v4862 = vunpack.c.l.s4 1966171168
        %v4863 = vunpack.c.0.s8 %v4862
        %v4864 = vlaneseq
        %v4865 = vshrl.u32 %v4864, 7
        %v4866 = vsub.s32 %v4863, %v4865
        %v4867 = vrot.slane %v4845, %v4866
        %v4869 = vunpack.c.l.s4 1966171168
        %v4870 = vunpack.c.0.s8 %v4869
        %v4871 = vlaneseq
        %v4872 = vshrl.u32 %v4871, 7
        %v4873 = vsub.s32 %v4870, %v4872
        %v4874 = vrot.slane %v4846, %v4873
        %v4875 = vcombine.high %v4853, %v4853
        %v4876 = vcombine.high %v4860, %v4860
        %v4877 = vcombine.high %v4874, %v4874
        %v4878 = vcombine.high %v4729, %v4729
        %v4880 = vunpack.c.l.s4 1966171168
        %v4881 = vunpack.c.0.s8 %v4880
        %v4882 = vlaneseq
        %v4883 = vshrl.u32 %v4882, 7
        %v4884 = vsub.s32 %v4881, %v4883
        %v4885 = vrot.slane %v4729, %v4884
        %v4887 = vunpack.c.l.s4 1966171168
        %v4888 = vunpack.c.0.s8 %v4887
        %v4889 = vlaneseq
        %v4890 = vshrl.u32 %v4889, 7
        %v4891 = vsub.s32 %v4888, %v4890
        %v4892 = vrot.slane %v4878, %v4891
        %v4893 = vcombine.high %v4885, %v4885
        %v4894 = vcombine.high %v4892, %v4892
        %v4896 = vunpack.c.l.s4 1966171168
        %v4897 = vunpack.c.0.s8 %v4896
        %v4898 = vlaneseq
        %v4899 = vshrl.u32 %v4898, 7
        %v4900 = vsub.s32 %v4897, %v4899
        %v4901 = vrot.slane %v4885, %v4900
        %v4903 = vunpack.c.l.s4 1966171168
        %v4904 = vunpack.c.0.s8 %v4903
        %v4905 = vlaneseq
        %v4906 = vshrl.u32 %v4905, 7
        %v4907 = vsub.s32 %v4904, %v4906
        %v4908 = vrot.slane %v4892, %v4907
        %v4910 = vunpack.c.l.s4 1966171168
        %v4911 = vunpack.c.0.s8 %v4910
        %v4912 = vlaneseq
        %v4913 = vshrl.u32 %v4912, 7
        %v4914 = vsub.s32 %v4911, %v4913
        %v4915 = vrot.slane %v4893, %v4914
        %v4917 = vunpack.c.l.s4 1966171168
        %v4918 = vunpack.c.0.s8 %v4917
        %v4919 = vlaneseq
        %v4920 = vshrl.u32 %v4919, 7
        %v4921 = vsub.s32 %v4918, %v4920
        %v4922 = vrot.slane %v4894, %v4921
        %v4923 = vcombine.high %v4901, %v4901
        %v4924 = vcombine.high %v4908, %v4908
        %v4925 = vcombine.high %v4915, %v4915
        %v4926 = vcombine.high %v4922, %v4922
        %v4927 = vcombine.high %v4730, %v4730
        %v4929 = vunpack.c.l.s4 1966171168
        %v4930 = vunpack.c.0.s8 %v4929
        %v4931 = vlaneseq
        %v4932 = vshrl.u32 %v4931, 7
        %v4933 = vsub.s32 %v4930, %v4932
        %v4934 = vrot.slane %v4730, %v4933
        %v4936 = vunpack.c.l.s4 1966171168
        %v4937 = vunpack.c.0.s8 %v4936
        %v4938 = vlaneseq
        %v4939 = vshrl.u32 %v4938, 7
        %v4940 = vsub.s32 %v4937, %v4939
        %v4941 = vrot.slane %v4927, %v4940
        %v4942 = vcombine.high %v4934, %v4934
        %v4943 = vcombine.high %v4941, %v4941
        %v4945 = vunpack.c.l.s4 1966171168
        %v4946 = vunpack.c.0.s8 %v4945
        %v4947 = vlaneseq
        %v4948 = vshrl.u32 %v4947, 7
        %v4949 = vsub.s32 %v4946, %v4948
        %v4950 = vrot.slane %v4934, %v4949
        %v4952 = vunpack.c.l.s4 1966171168
        %v4953 = vunpack.c.0.s8 %v4952
        %v4954 = vlaneseq
        %v4955 = vshrl.u32 %v4954, 7
        %v4956 = vsub.s32 %v4953, %v4955
        %v4957 = vrot.slane %v4941, %v4956
        %v4959 = vunpack.c.l.s4 1966171168
        %v4960 = vunpack.c.0.s8 %v4959
        %v4961 = vlaneseq
        %v4962 = vshrl.u32 %v4961, 7
        %v4963 = vsub.s32 %v4960, %v4962
        %v4964 = vrot.slane %v4942, %v4963
        %v4966 = vunpack.c.l.s4 1966171168
        %v4967 = vunpack.c.0.s8 %v4966
        %v4968 = vlaneseq
        %v4969 = vshrl.u32 %v4968, 7
        %v4970 = vsub.s32 %v4967, %v4969
        %v4971 = vrot.slane %v4943, %v4970
        %v4972 = vcombine.high %v4950, %v4950
        %v4973 = vcombine.high %v4957, %v4957
        %v4974 = vcombine.high %v4964, %v4964
        %v4975 = vcombine.high %v4971, %v4971
        %v4976 = vcombine.low %v4759, %v4766
        %v4977 = vcombine.low %v4806, %v4813
        %v4978 = vcombine.low %v4853, %v4874
        %v4979 = vcombine.low %v4915, %v4922
        %v4981 = vunpack.c.l.s4 1966171168
        %v4982 = vunpack.c.0.s8 %v4981
        %v4983 = vlaneseq
        %v4984 = vshrl.u32 %v4983, 7
        %v4985 = vsub.s32 %v4982, %v4984
        %v4986 = vrot.slane %v4976, %v4985
        %v4988 = vunpack.c.l.s4 1966171168
        %v4989 = vunpack.c.0.s8 %v4988
        %v4990 = vlaneseq
        %v4991 = vshrl.u32 %v4990, 7
        %v4992 = vsub.s32 %v4989, %v4991
        %v4993 = vrot.slane %v4977, %v4992
        %v4995 = vunpack.c.l.s4 1966171168
        %v4996 = vunpack.c.0.s8 %v4995
        %v4997 = vlaneseq
        %v4998 = vshrl.u32 %v4997, 7
        %v4999 = vsub.s32 %v4996, %v4998
        %v5000 = vrot.slane %v4978, %v4999
        %v5002 = vunpack.c.l.s4 1966171168
        %v5003 = vunpack.c.0.s8 %v5002
        %v5004 = vlaneseq
        %v5005 = vshrl.u32 %v5004, 7
        %v5006 = vsub.s32 %v5003, %v5005
        %v5007 = vrot.slane %v4979, %v5006
        %v5008 = vcombine.low %v4986, %v4993
        %v5009 = vcombine.low %v5000, %v5007
        %v5011 = vunpack.c.l.s4 1966171168
        %v5012 = vunpack.c.0.s8 %v5011
        %v5013 = vlaneseq
        %v5014 = vshrl.u32 %v5013, 7
        %v5015 = vsub.s32 %v5012, %v5014
        %v5016 = vrot.slane %v5008, %v5015
        %v5018 = vunpack.c.l.s4 1966171168
        %v5019 = vunpack.c.0.s8 %v5018
        %v5020 = vlaneseq
        %v5021 = vshrl.u32 %v5020, 7
        %v5022 = vsub.s32 %v5019, %v5021
        %v5023 = vrot.slane %v5009, %v5022
        %v5024 = vcombine.low %v5016, %v5023
        %v5025 = vcombine.low %v4964, %v4971
        %v5027 = vunpack.c.l.s4 1966171168
        %v5028 = vunpack.c.0.s8 %v5027
        %v5029 = vlaneseq
        %v5030 = vshrl.u32 %v5029, 7
        %v5031 = vsub.s32 %v5028, %v5030
        %v5032 = vrot.slane %v5025, %v5031
        %v5034 = vunpack.c.l.s4 1966171168
        %v5035 = vunpack.c.0.s8 %v5034
        %v5036 = vlaneseq
        %v5037 = vshrl.u32 %v5036, 7
        %v5038 = vsub.s32 %v5035, %v5037
        %v5039 = vrot.slane %v5032, %v5038
        %v5042 = vcombine.low %v4773, %v4780
        %v5043 = vcombine.low %v4820, %v4827
        %v5044 = vcombine.low %v4867, %v4876
        %v5045 = vcombine.low %v4923, %v4924
        %v5047 = vunpack.c.l.s4 1966171168
        %v5048 = vunpack.c.0.s8 %v5047
        %v5049 = vlaneseq
        %v5050 = vshrl.u32 %v5049, 7
        %v5051 = vsub.s32 %v5048, %v5050
        %v5052 = vrot.slane %v5042, %v5051
        %v5054 = vunpack.c.l.s4 1966171168
        %v5055 = vunpack.c.0.s8 %v5054
        %v5056 = vlaneseq
        %v5057 = vshrl.u32 %v5056, 7
        %v5058 = vsub.s32 %v5055, %v5057
        %v5059 = vrot.slane %v5043, %v5058
        %v5061 = vunpack.c.l.s4 1966171168
        %v5062 = vunpack.c.0.s8 %v5061
        %v5063 = vlaneseq
        %v5064 = vshrl.u32 %v5063, 7
        %v5065 = vsub.s32 %v5062, %v5064
        %v5066 = vrot.slane %v5044, %v5065
        %v5068 = vunpack.c.l.s4 1966171168
        %v5069 = vunpack.c.0.s8 %v5068
        %v5070 = vlaneseq
        %v5071 = vshrl.u32 %v5070, 7
        %v5072 = vsub.s32 %v5069, %v5071
        %v5073 = vrot.slane %v5045, %v5072
        %v5074 = vcombine.low %v5052, %v5059
        %v5075 = vcombine.low %v5066, %v5073
        %v5077 = vunpack.c.l.s4 1966171168
        %v5078 = vunpack.c.0.s8 %v5077
        %v5079 = vlaneseq
        %v5080 = vshrl.u32 %v5079, 7
        %v5081 = vsub.s32 %v5078, %v5080
        %v5082 = vrot.slane %v5074, %v5081
        %v5084 = vunpack.c.l.s4 1966171168
        %v5085 = vunpack.c.0.s8 %v5084
        %v5086 = vlaneseq
        %v5087 = vshrl.u32 %v5086, 7
        %v5088 = vsub.s32 %v5085, %v5087
        %v5089 = vrot.slane %v5075, %v5088
        %v5090 = vcombine.low %v5082, %v5089
        %v5091 = vcombine.low %v4972, %v4973
        %v5093 = vunpack.c.l.s4 1966171168
        %v5094 = vunpack.c.0.s8 %v5093
        %v5095 = vlaneseq
        %v5096 = vshrl.u32 %v5095, 7
        %v5097 = vsub.s32 %v5094, %v5096
        %v5098 = vrot.slane %v5091, %v5097
        %v5100 = vunpack.c.l.s4 1966171168
        %v5101 = vunpack.c.0.s8 %v5100
        %v5102 = vlaneseq
        %v5103 = vshrl.u32 %v5102, 7
        %v5104 = vsub.s32 %v5101, %v5103
        %v5105 = vrot.slane %v5098, %v5104
        %5106 = vrot.lane.b32.xlu0 %v5090, 32
        %v5107 = vpop.permute.xlu0 %5106
        %5108 = vrot.lane.b32.xlu0 %v5105, 32
        %v5109 = vpop.permute.xlu0 %5108
        %v5112 = vcombine.low %v4781, %v4782
        %v5113 = vcombine.low %v4828, %v4829
        %v5114 = vcombine.low %v4875, %v4877
        %v5115 = vcombine.low %v4925, %v4926
        %v5117 = vunpack.c.l.s4 1966171168
        %v5118 = vunpack.c.0.s8 %v5117
        %v5119 = vlaneseq
        %v5120 = vshrl.u32 %v5119, 7
        %v5121 = vsub.s32 %v5118, %v5120
        %v5122 = vrot.slane %v5112, %v5121
        %v5124 = vunpack.c.l.s4 1966171168
        %v5125 = vunpack.c.0.s8 %v5124
        %v5126 = vlaneseq
        %v5127 = vshrl.u32 %v5126, 7
        %v5128 = vsub.s32 %v5125, %v5127
        %v5129 = vrot.slane %v5113, %v5128
        %v5131 = vunpack.c.l.s4 1966171168
        %v5132 = vunpack.c.0.s8 %v5131
        %v5133 = vlaneseq
        %v5134 = vshrl.u32 %v5133, 7
        %v5135 = vsub.s32 %v5132, %v5134
        %v5136 = vrot.slane %v5114, %v5135
        %v5138 = vunpack.c.l.s4 1966171168
        %v5139 = vunpack.c.0.s8 %v5138
        %v5140 = vlaneseq
        %v5141 = vshrl.u32 %v5140, 7
        %v5142 = vsub.s32 %v5139, %v5141
        %v5143 = vrot.slane %v5115, %v5142
        %v5144 = vcombine.low %v5122, %v5129
        %v5145 = vcombine.low %v5136, %v5143
        %v5147 = vunpack.c.l.s4 1966171168
        %v5148 = vunpack.c.0.s8 %v5147
        %v5149 = vlaneseq
        %v5150 = vshrl.u32 %v5149, 7
        %v5151 = vsub.s32 %v5148, %v5150
        %v5152 = vrot.slane %v5144, %v5151
        %v5154 = vunpack.c.l.s4 1966171168
        %v5155 = vunpack.c.0.s8 %v5154
        %v5156 = vlaneseq
        %v5157 = vshrl.u32 %v5156, 7
        %v5158 = vsub.s32 %v5155, %v5157
        %v5159 = vrot.slane %v5145, %v5158
        %v5160 = vcombine.low %v5152, %v5159
        %v5161 = vcombine.low %v4974, %v4975
        %v5163 = vunpack.c.l.s4 1966171168
        %v5164 = vunpack.c.0.s8 %v5163
        %v5165 = vlaneseq
        %v5166 = vshrl.u32 %v5165, 7
        %v5167 = vsub.s32 %v5164, %v5166
        %v5168 = vrot.slane %v5161, %v5167
        %v5170 = vunpack.c.l.s4 1966171168
        %v5171 = vunpack.c.0.s8 %v5170
        %v5172 = vlaneseq
        %v5173 = vshrl.u32 %v5172, 7
        %v5174 = vsub.s32 %v5171, %v5173
        %v5175 = vrot.slane %v5168, %v5174
        %5176 = vrot.lane.b32.xlu0 %v5160, 64
        %v5177 = vpop.permute.xlu0 %5176
        %5178 = vrot.lane.b32.xlu0 %v5175, 64
        %v5179 = vpop.permute.xlu0 %5178
        %v5182 = vsel %vm4593, %v5024, %v5107
        %v5183 = vsel %vm4593, %v5039, %v5109
        %vm5184 = vcmask 523264
        %v5185 = vsel %vm5184, %v5182, %v5177
        %v5186 = vsel %vm5184, %v5183, %v5179
        %v5187 = vld [vmem:[%s5] sm:$0xff]
        %v5188 = vld [vmem:[%s5 + $0x8] sm:$0xff]
        %v5189 = vld [vmem:[%s5 + $0x10] sm:$0xff]
        %v5190 = vld [vmem:[%s5 + $0x18] sm:$0xff]
        %v5191 = vld [vmem:[%s5 + $0x20] sm:$0xff]
        %v5192 = vld [vmem:[%s5 + $0x28] sm:$0xff]
        %v5193 = vld [vmem:[%s5 + $0x30] sm:$0xff]
        %v5194 = vld [vmem:[%s5 + $0x38] sm:$0xff]
        %v5195 = vld [vmem:[%s5 + $0x40] sm:$0xff]
        %v5196 = vld [vmem:[%s5 + $0x48] sm:$0xff]
        %v5197 = vld [vmem:[%s5 + $0x50] sm:$0xff]
        %v5198 = vld [vmem:[%s5 + $0x58] sm:$0xff]
        %v5199 = vld [vmem:[%s6] sm:$0x1]
        %v5201 = vlaneseq
        %v5202 = vshrl.u32 %v5201, 7
        %v5203 = vsub.s32 0, %v5202
        %v5204 = vrot.slane %v5199, %v5203
        %vm5206 = vcmask 785408
        %v5208 = vsel %vm5206, %v5185, 0
        %v5211 = vsel %vm5206, %v5186, 0
        %5213 = vmatprep.subr.mxu0 0.0
        %5214 = vmatpush1.msra.mxu0 %v5187
        %5215 = vmatprep.subr.mxu0 0.0
        %5216 = vmatpush1.msra.mxu0 %v5188
        %5217 = vmatprep.subr.mxu0 0.0
        %5218 = vmatpush1.msra.mxu0 %v5189
        %5219 = vmatprep.subr.mxu0 0.0
        %5220 = vmatpush1.msra.mxu0 %v5190
        %5221 = vmatprep.subr.mxu0 0.0
        %5222 = vmatpush1.msra.mxu0 %v5191
        %5223 = vmatprep.subr.mxu0 0.0
        %5224 = vmatpush1.msra.mxu0 %v5192
        %5225 = vmatprep.subr.mxu0 0.0
        %5226 = vmatpush1.msra.mxu0 %v5193
        %5227 = vmatprep.subr.mxu0 0.0
        %5228 = vmatpush1.msra.mxu0 %v5194
        %5229 = vmatprep.subr.mxu0 0.0
        %5230 = vmatpush1.msra.mxu0 %v5195
        %5231 = vmatprep.subr.mxu0 0.0
        %5232 = vmatpush1.msra.mxu0 %v5196
        %5233 = vmatprep.subr.mxu0 0.0
        %5234 = vmatpush1.msra.mxu0 %v5197
        %5235 = vmatprep.subr.mxu0 0.0
        %5236 = vmatpush1.msra.mxu0 %v5198
        %5237 = vmatprep.subr.mxu0 0.0
        %5238 = vmatpush1.msra.mxu0 0.0
        %5239 = vmatprep.subr.mxu0 0.0
        %5240 = vmatpush1.msra.mxu0 0.0
        %5241 = vmatprep.subr.mxu0 0.0
        %5242 = vmatpush1.msra.mxu0 0.0
        %5243 = vmatprep.subr.mxu0 0.0
        %5244 = vmatpush1.msra.mxu0 0.0
        %5245 = vmatprep.subr.mxu0 0.0
        %5246 = vmatpush1.msra.mxu0 0.0
        %5247 = vmatprep.subr.mxu0 0.0
        %5248 = vmatpush1.msra.mxu0 0.0
        %5249 = vmatprep.subr.mxu0 0.0
        %5250 = vmatpush1.msra.mxu0 0.0
        %5251 = vmatprep.subr.mxu0 0.0
        %5252 = vmatpush1.msra.mxu0 0.0
        %5253 = vmatprep.subr.mxu0 0.0
        %5254 = vmatpush1.msra.mxu0 0.0
        %5255 = vmatprep.subr.mxu0 0.0
        %5256 = vmatpush1.msra.mxu0 0.0
        %5257 = vmatprep.subr.mxu0 0.0
        %5258 = vmatpush1.msra.mxu0 0.0
        %5259 = vmatprep.subr.mxu0 0.0
        %5260 = vmatpush1.msra.mxu0 0.0
        %5261 = vmatprep.subr.mxu0 0.0
        %5262 = vmatpush1.msra.mxu0 0.0
        %5263 = vmatprep.subr.mxu0 0.0
        %5264 = vmatpush1.msra.mxu0 0.0
        %5265 = vmatprep.subr.mxu0 0.0
        %5266 = vmatpush1.msra.mxu0 0.0
        %5267 = vmatprep.subr.mxu0 0.0
        %5268 = vmatpush1.msra.mxu0 0.0
        %5269 = vmatprep.subr.mxu0 0.0
        %5270 = vmatpush1.msra.mxu0 0.0
        %5271 = vmatprep.subr.mxu0 0.0
        %5272 = vmatpush1.msra.mxu0 0.0
        %5273 = vmatprep.subr.mxu0 0.0
        %5274 = vmatpush1.msra.mxu0 0.0
        %5275 = vmatprep.subr.mxu0 0.0
        %5276 = vmatpush1.msra.mxu0 0.0
        %5277 = vmatprep.mubr.f32.mxu0 0.0
        %5278 = vmatmul.mubr.f32.gmra.mrb[0].mxu0 %v5208
        %v5279 = vpop.f32.mrb[0].mxu0
        %v5280 = vadd.f32 %v5204, %v5279
        %v5281 = vpop.f32.mrb[0].mxu0
        %5282 = vmatprep.mubr.f32.mxu0 0.0
        %5283 = vmatmul.mubr.f32.gmra.mrb[0].mxu0 %v5211
        %v5284 = vpop.f32.mrb[0].mxu0
        %v5285 = vadd.f32 %v5204, %v5284
        %v5286 = vpop.f32.mrb[0].mxu0
        %5287 = vdwg.mxu0
        %v5288 = vmax.f32 %v5280, 0.0
        %v5289 = vmax.f32 %v5285, 0.0
        %v5292 = vcombine.high %v5288, %v5288
        %v5294 = vunpack.c.l.s4 1966171168
        %v5295 = vunpack.c.0.s8 %v5294
        %v5296 = vlaneseq
        %v5297 = vshrl.u32 %v5296, 7
        %v5298 = vsub.s32 %v5295, %v5297
        %v5299 = vrot.slane %v5288, %v5298
        %v5301 = vunpack.c.l.s4 1966171168
        %v5302 = vunpack.c.0.s8 %v5301
        %v5303 = vlaneseq
        %v5304 = vshrl.u32 %v5303, 7
        %v5305 = vsub.s32 %v5302, %v5304
        %v5306 = vrot.slane %v5292, %v5305
        %v5307 = vcombine.high %v5299, %v5299
        %v5308 = vcombine.high %v5306, %v5306
        %v5310 = vunpack.c.l.s4 1966171168
        %v5311 = vunpack.c.0.s8 %v5310
        %v5312 = vlaneseq
        %v5313 = vshrl.u32 %v5312, 7
        %v5314 = vsub.s32 %v5311, %v5313
        %v5315 = vrot.slane %v5299, %v5314
        %v5317 = vunpack.c.l.s4 1966171168
        %v5318 = vunpack.c.0.s8 %v5317
        %v5319 = vlaneseq
        %v5320 = vshrl.u32 %v5319, 7
        %v5321 = vsub.s32 %v5318, %v5320
        %v5322 = vrot.slane %v5306, %v5321
        %v5324 = vunpack.c.l.s4 1966171168
        %v5325 = vunpack.c.0.s8 %v5324
        %v5326 = vlaneseq
        %v5327 = vshrl.u32 %v5326, 7
        %v5328 = vsub.s32 %v5325, %v5327
        %v5329 = vrot.slane %v5307, %v5328
        %v5331 = vunpack.c.l.s4 1966171168
        %v5332 = vunpack.c.0.s8 %v5331
        %v5333 = vlaneseq
        %v5334 = vshrl.u32 %v5333, 7
        %v5335 = vsub.s32 %v5332, %v5334
        %v5336 = vrot.slane %v5308, %v5335
        %v5337 = vcombine.high %v5315, %v5315
        %v5338 = vcombine.high %v5322, %v5322
        %v5339 = vcombine.high %v5329, %v5329
        %v5340 = vcombine.high %v5336, %v5336
        %v5342 = vunpack.c.l.s4 1966171168
        %v5343 = vunpack.c.0.s8 %v5342
        %v5344 = vlaneseq
        %v5345 = vshrl.u32 %v5344, 7
        %v5346 = vsub.s32 %v5343, %v5345
        %v5347 = vrot.slane %v5289, %v5346
        %v5348 = vcombine.high %v5347, %v5347
        %v5350 = vunpack.c.l.s4 1966171168
        %v5351 = vunpack.c.0.s8 %v5350
        %v5352 = vlaneseq
        %v5353 = vshrl.u32 %v5352, 7
        %v5354 = vsub.s32 %v5351, %v5353
        %v5355 = vrot.slane %v5347, %v5354
        %v5357 = vunpack.c.l.s4 1966171168
        %v5358 = vunpack.c.0.s8 %v5357
        %v5359 = vlaneseq
        %v5360 = vshrl.u32 %v5359, 7
        %v5361 = vsub.s32 %v5358, %v5360
        %v5362 = vrot.slane %v5348, %v5361
        %v5363 = vcombine.low %v5315, %v5329
        %v5364 = vcombine.low %v5337, %v5339
        %v5366 = vunpack.c.l.s4 1966171168
        %v5367 = vunpack.c.0.s8 %v5366
        %v5368 = vlaneseq
        %v5369 = vshrl.u32 %v5368, 7
        %v5370 = vsub.s32 %v5367, %v5369
        %v5371 = vrot.slane %v5363, %v5370
        %v5373 = vunpack.c.l.s4 1966171168
        %v5374 = vunpack.c.0.s8 %v5373
        %v5375 = vlaneseq
        %v5376 = vshrl.u32 %v5375, 7
        %v5377 = vsub.s32 %v5374, %v5376
        %v5378 = vrot.slane %v5364, %v5377
        %v5380 = vunpack.c.l.s4 1966171168
        %v5381 = vunpack.c.0.s8 %v5380
        %v5382 = vlaneseq
        %v5383 = vshrl.u32 %v5382, 7
        %v5384 = vsub.s32 %v5381, %v5383
        %v5385 = vrot.slane %v5322, %v5384
        %v5386 = vcombine.low %v5371, %v5378
        %v5388 = vunpack.c.l.s4 1966171168
        %v5389 = vunpack.c.0.s8 %v5388
        %v5390 = vlaneseq
        %v5391 = vshrl.u32 %v5390, 7
        %v5392 = vsub.s32 %v5389, %v5391
        %v5393 = vrot.slane %v5386, %v5392
        %v5395 = vunpack.c.l.s4 1966171168
        %v5396 = vunpack.c.0.s8 %v5395
        %v5397 = vlaneseq
        %v5398 = vshrl.u32 %v5397, 7
        %v5399 = vsub.s32 %v5396, %v5398
        %v5400 = vrot.slane %v5385, %v5399
        %v5401 = vcombine.low %v5393, %v5400
        %v5402 = vcombine.low %v5336, %v5338
        %v5403 = vcombine.low %v5340, %v5355
        %v5405 = vunpack.c.l.s4 1966171168
        %v5406 = vunpack.c.0.s8 %v5405
        %v5407 = vlaneseq
        %v5408 = vshrl.u32 %v5407, 7
        %v5409 = vsub.s32 %v5406, %v5408
        %v5410 = vrot.slane %v5402, %v5409
        %v5412 = vunpack.c.l.s4 1966171168
        %v5413 = vunpack.c.0.s8 %v5412
        %v5414 = vlaneseq
        %v5415 = vshrl.u32 %v5414, 7
        %v5416 = vsub.s32 %v5413, %v5415
        %v5417 = vrot.slane %v5403, %v5416
        %v5419 = vunpack.c.l.s4 1966171168
        %v5420 = vunpack.c.0.s8 %v5419
        %v5421 = vlaneseq
        %v5422 = vshrl.u32 %v5421, 7
        %v5423 = vsub.s32 %v5420, %v5422
        %v5424 = vrot.slane %v5362, %v5423
        %v5425 = vcombine.low %v5410, %v5417
        %v5427 = vunpack.c.l.s4 1966171168
        %v5428 = vunpack.c.0.s8 %v5427
        %v5429 = vlaneseq
        %v5430 = vshrl.u32 %v5429, 7
        %v5431 = vsub.s32 %v5428, %v5430
        %v5432 = vrot.slane %v5425, %v5431
        %v5434 = vunpack.c.l.s4 1966171168
        %v5435 = vunpack.c.0.s8 %v5434
        %v5436 = vlaneseq
        %v5437 = vshrl.u32 %v5436, 7
        %v5438 = vsub.s32 %v5435, %v5437
        %v5439 = vrot.slane %v5424, %v5438
        %v5440 = vcombine.low %v5432, %v5439
        %vm5443 = vcmask 258048
        %v5444 = vsel %vm5443, %v5401, 0.0
        %v5445 = vrot.slane %v5444, 4
        %v5446 = vadd.f32 %v5444, %v5445
        %v5447 = vrot.slane %v5446, 2
        %v5448 = vadd.f32 %v5446, %v5447
        %v5449 = vrot.slane %v5448, 1
        %v5450 = vadd.f32 %v5448, %v5449
        %v5451 = vsel %vm5443, %v5440, 0.0
        %v5452 = vrot.slane %v5451, 4
        %v5453 = vadd.f32 %v5451, %v5452
        %v5454 = vrot.slane %v5453, 2
        %v5455 = vadd.f32 %v5453, %v5454
        %v5456 = vrot.slane %v5455, 1
        %v5457 = vadd.f32 %v5455, %v5456
        %v5458 = vrcp.pop 5.0
        %v5459 = vmul.f32 %v5450, %v5458
        %v5460 = vmul.f32 %v5457, %v5458
        %v5461 = vld [vmem:[%s7] sm:$0xff]
        %v5462 = vld [vmem:[%s7 + $0x8] sm:$0xff]
        %v5463 = vld [vmem:[%s7 + $0x10] sm:$0xff]
        %v5464 = vld [vmem:[%s7 + $0x18] sm:$0xff]
        %v5465 = vld [vmem:[%s8] sm:$0x1]
        %v5467 = vlaneseq
        %v5468 = vshrl.u32 %v5467, 7
        %v5469 = vsub.s32 0, %v5468
        %v5470 = vrot.slane %v5465, %v5469
        %vm5474 = vcmask 1041409
        %v5475 = vsel %vm5474, %v5460, %v5459
        %v5476 = vsel %vm4593, %v5475, 0
        %5478 = vmatprep.subr.mxu0 0.0
        %5479 = vmatpush1.msra.mxu0 %v5461
        %5480 = vmatprep.subr.mxu0 0.0
        %5481 = vmatpush1.msra.mxu0 %v5462
        %5482 = vmatprep.subr.mxu0 0.0
        %5483 = vmatpush1.msra.mxu0 %v5463
        %5484 = vmatprep.subr.mxu0 0.0
        %5485 = vmatpush1.msra.mxu0 %v5464
        %5486 = vmatprep.subr.mxu0 0.0
        %5487 = vmatpush1.msra.mxu0 0.0
        %5488 = vmatprep.subr.mxu0 0.0
        %5489 = vmatpush1.msra.mxu0 0.0
        %5490 = vmatprep.subr.mxu0 0.0
        %5491 = vmatpush1.msra.mxu0 0.0
        %5492 = vmatprep.subr.mxu0 0.0
        %5493 = vmatpush1.msra.mxu0 0.0
        %5494 = vmatprep.subr.mxu0 0.0
        %5495 = vmatpush1.msra.mxu0 0.0
        %5496 = vmatprep.subr.mxu0 0.0
        %5497 = vmatpush1.msra.mxu0 0.0
        %5498 = vmatprep.subr.mxu0 0.0
        %5499 = vmatpush1.msra.mxu0 0.0
        %5500 = vmatprep.subr.mxu0 0.0
        %5501 = vmatpush1.msra.mxu0 0.0
        %5502 = vmatprep.subr.mxu0 0.0
        %5503 = vmatpush1.msra.mxu0 0.0
        %5504 = vmatprep.subr.mxu0 0.0
        %5505 = vmatpush1.msra.mxu0 0.0
        %5506 = vmatprep.subr.mxu0 0.0
        %5507 = vmatpush1.msra.mxu0 0.0
        %5508 = vmatprep.subr.mxu0 0.0
        %5509 = vmatpush1.msra.mxu0 0.0
        %5510 = vmatprep.subr.mxu0 0.0
        %5511 = vmatpush1.msra.mxu0 0.0
        %5512 = vmatprep.subr.mxu0 0.0
        %5513 = vmatpush1.msra.mxu0 0.0
        %5514 = vmatprep.subr.mxu0 0.0
        %5515 = vmatpush1.msra.mxu0 0.0
        %5516 = vmatprep.subr.mxu0 0.0
        %5517 = vmatpush1.msra.mxu0 0.0
        %5518 = vmatprep.subr.mxu0 0.0
        %5519 = vmatpush1.msra.mxu0 0.0
        %5520 = vmatprep.subr.mxu0 0.0
        %5521 = vmatpush1.msra.mxu0 0.0
        %5522 = vmatprep.subr.mxu0 0.0
        %5523 = vmatpush1.msra.mxu0 0.0
        %5524 = vmatprep.subr.mxu0 0.0
        %5525 = vmatpush1.msra.mxu0 0.0
        %5526 = vmatprep.subr.mxu0 0.0
        %5527 = vmatpush1.msra.mxu0 0.0
        %5528 = vmatprep.subr.mxu0 0.0
        %5529 = vmatpush1.msra.mxu0 0.0
        %5530 = vmatprep.subr.mxu0 0.0
        %5531 = vmatpush1.msra.mxu0 0.0
        %5532 = vmatprep.subr.mxu0 0.0
        %5533 = vmatpush1.msra.mxu0 0.0
        %5534 = vmatprep.subr.mxu0 0.0
        %5535 = vmatpush1.msra.mxu0 0.0
        %5536 = vmatprep.subr.mxu0 0.0
        %5537 = vmatpush1.msra.mxu0 0.0
        %5538 = vmatprep.subr.mxu0 0.0
        %5539 = vmatpush1.msra.mxu0 0.0
        %5540 = vmatprep.subr.mxu0 0.0
        %5541 = vmatpush1.msra.mxu0 0.0
        %5542 = vmatprep.mubr.f32.mxu0 0.0
        %5543 = vmatmul.mubr.f32.gmra.mrb[0].mxu0 %v5476
        %v5544 = vpop.f32.mrb[0].mxu0
        %v5545 = vadd.f32 %v5470, %v5544
        %v5546 = vpop.f32.mrb[0].mxu0
        %5547 = vdwg.mxu0
        %vm5548 = vcmask 33792
        %v5549 = vsel %vm5548, %v5545, -inf
        %5550 = vmax.xlane.f32.xlu0 %v5549
        %v5551 = vpop.xlane.xlu0 %5550
        %v5552 = vsub.f32 %v5545, %v5551
        %v5553 = vmul.f32 %v5552, 1.442695
        %v5554 = vpow.pop %v5553
        %v5555 = vsel %vm5548, %v5554, 0.0
        %5556 = vadd.xlane.f32.xlu0 %v5555
        %v5557 = vpop.xlane.xlu0 %5556
        %v5558 = vrcp.pop %v5557
        %v5559 = vmul.f32 %v5554, %v5558
        %5560 = vst.msk [vmem:[%s328] sm:$0x3] %vm5548, %v5559
        %s5561 = sand.u32 %s225, 1
        %s5562 = scalar_lea.sflag [#allocation3], %s5561
        %s5563 = sand.u32 %s225, 1
        %s5564 = smul.addr %s5563, 2
        %s5565 = scalar_lea.vmem [#allocation2], %s5564
        // Predicated region
        $region57: #{cnn_rnn_classifier_forward.1} parent=55 // pred_check
          %p5566 = pneg %p235
        $region58: #{cnn_rnn_classifier_forward.1} parent=55 // pred_check_branch
          %5568 = sbr.rel (%p5566) target = $region60
        $region59: #{cnn_rnn_classifier_forward.1} parent=55 // pred_region
          %s5570 = ssub.s32 32, 32
          %5571 = vsyncadd %s5562, %s5570
          %s5572 = smul.addr %s23, 32
          %s5573 = scalar_lea.hbm %s9, %s5572
          %s5575 = sshll.u32 %s5565, 4
          %s5576 = int_to_ptr.vmem [resolvable:$true] %s5575
          %5578 = dma.vmem_to_hbm [thread:$0]  %s5576, 32, %s5573, %s5562
        $region60: #{cnn_rnn_classifier_forward.1} parent=55 // pred_fallthru
          _
      $region56: #{cnn_rnn_classifier_forward.1} parent=5 // pred_fallthru
        _
      %p5579 = scmp.le.s32.totalorder 2, %s18
      // Predicated region
      $region61: #{cnn_rnn_classifier_forward.1} parent=5 // pred_check
        %p5580 = pneg %p5579
      $region62: #{cnn_rnn_classifier_forward.1} parent=5 // pred_check_branch
        %5582 = sbr.rel (%p5580) target = $region64
      $region63: #{cnn_rnn_classifier_forward.1} parent=5 // pred_region
        %s5583 = ssub.s32 %s18, 2
        // Predicated region
        $region65: #{cnn_rnn_classifier_forward.1} parent=63 // pred_check
          %p5584 = pneg %p241
        $region66: #{cnn_rnn_classifier_forward.1} parent=63 // pred_check_branch
          %5586 = sbr.rel (%p5584) target = $region68
        $region67: #{cnn_rnn_classifier_forward.1} parent=63 // pred_region
          %s5587 = sand.u32 %s226, 1
          %s5588 = scalar_lea.sflag [#allocation3], %s5587
          %s5589 = sand.u32 %s226, 1
          %s5590 = smul.addr %s5589, 2
          %s5591 = scalar_lea.vmem [#allocation2], %s5590
          %5592 = dma.done %s5588, 32
        $region68: #{cnn_rnn_classifier_forward.1} parent=63 // pred_fallthru
          _
      $region64: #{cnn_rnn_classifier_forward.1} parent=5 // pred_fallthru
        _
    $region6: #{cnn_rnn_classifier_forward.1} parent=1 // loop_footer
      %s22 = sadd.s32 1, %s18
    $region7: #{cnn_rnn_classifier_forward.1} parent=1 // loop_footer_branch
      %17 = sbr.rel target = $region3
    $region8: #{cnn_rnn_classifier_forward.1} parent=1 // loop_exit
      _
    %5593 = vsyncpa [#allocation3], 1
    %s5594 = scalar_lea.sflag [#allocation3], 1
    %5595 = vsyncpa %s5594, 1

</llo_original>
